<compile_context>
chip_gen: v7x
topology: tpu7x:2x2x1
jax: 0.10.0
libtpu: 0.0.40
codegen_flags: <defaults>
</compile_context>

<pallas_src>
import functools

import jax
import jax.numpy as jnp
from jax import lax
from jax.experimental import pallas as pl
from jax.experimental.pallas import tpu as pltpu


def _softmax_lastdim(x):
    """f32 softmax over the last axis; divide via the EUP approx reciprocal."""
    m = jnp.max(x, axis=-1, keepdims=True)
    e = jnp.exp(x - m)
    s = jnp.sum(e, axis=-1, keepdims=True)
    return e * pl.reciprocal(s, approx=True)


def _hhyper_kernel(ht_ref, ha_ref, hv_ref, hh_ref,
                   wq_ref, wkva_ref, wkvv_ref, wo_ref, bo_ref,
                   out_ref, *, heads, dim_head):
    bt, n, dim = ht_ref.shape
    inner_dim = heads * dim_head

    wq = wq_ref[...]
    mm_dtype = wq.dtype            # MXU operand dtype (bf16 by default)

    # ---- fused projections: 3 matmuls, bf16 operands, f32 accumulation ------
    # TODO(synk): if production n is not a multiple of the sublane tile
    # (8 f32 / 16 bf16), this (bt, n)->(bt*n) merge materializes a relayout
    # copy; keep n sublane-aligned at the model level.
    ht = ht_ref[...].reshape(bt * n, dim).astype(mm_dtype)
    ha = ha_ref[...].reshape(bt * n, dim).astype(mm_dtype)
    hv = hv_ref[...].reshape(bt * n, dim).astype(mm_dtype)

    # softmax scale already folded into wq at prepare time.
    q = jnp.dot(ht, wq, preferred_element_type=jnp.float32)               # (bt*n, inner)
    kv_a = jnp.dot(ha, wkva_ref[...], preferred_element_type=jnp.float32) # (bt*n, 2*inner)
    kv_v = jnp.dot(hv, wkvv_ref[...], preferred_element_type=jnp.float32) # (bt*n, 2*inner)

    q = q.reshape(bt, n, inner_dim)
    kv_a = kv_a.reshape(bt, n, 2 * inner_dim)
    kv_v = kv_v.reshape(bt, n, 2 * inner_dim)

    # ---- head-major relayout: (bt, n, heads*d) -> (heads*bt, n, d) ----------
    # Static lane slices feeding a single concatenate (one relayout per tensor)
    # instead of a per-head matmul loop; every matmul below is then one fully
    # batched MXU dispatch over all heads and batches.
    # TODO(synk): replace with jnp.transpose/pltpu.einshape (b n h d -> b h n d)
    # once the 4-D relayout is guaranteed on every target generation; pad
    # dim_head/dim to multiples of 128 at the model level for lane-dense tiles.
    def split_heads(x, col0):
        return jnp.concatenate(
            [x[:, :, col0 + h * dim_head: col0 + (h + 1) * dim_head]
             for h in range(heads)], axis=0)

    q_h = split_heads(q, 0).astype(mm_dtype)                     # (heads*bt, n, d)
    # K / V of both branches concatenated along the key axis (2n keys total).
    k_cat = jnp.concatenate([split_heads(kv_a, 0),
                             split_heads(kv_v, 0)], axis=1).astype(mm_dtype)
    v_cat = jnp.concatenate([split_heads(kv_a, inner_dim),
                             split_heads(kv_v, inner_dim)], axis=1).astype(mm_dtype)

    # ---- fused attention: one QK and one AV dispatch for both branches ------
    dn_qk = (((2,), (2,)), ((0,), (0,)))   # (B,i,d) x (B,j,d) -> (B,i,j)
    dn_av = (((2,), (1,)), ((0,), (0,)))   # (B,i,j) x (B,j,d) -> (B,i,d)

    dots = lax.dot_general(q_h, k_cat, dn_qk,
                           preferred_element_type=jnp.float32)   # (B, n, 2n)
    # Two independent softmaxes (each branch normalizes over its own n keys),
    # computed in f32 (no bf16 VPU/EUP on v5e); probabilities fed to MXU in bf16.
    probs = jnp.concatenate([_softmax_lastdim(dots[:, :, :n]),
                             _softmax_lastdim(dots[:, :, n:])], axis=-1)
    out_h = lax.dot_general(probs.astype(mm_dtype), v_cat, dn_av,
                            preferred_element_type=jnp.float32)  # (B, n, d)
    # TODO(synk): for large production n, replace the materialized (B, n, 2n)
    # score/prob tensors with a flash-style KV-tile loop (running max/sum) so
    # the kernel stays inside v7x's 64 MiB VMEM.

    # ---- merge heads in-register + single output projection -----------------
    o_cat = jnp.concatenate(
        [out_h[h * bt:(h + 1) * bt] for h in range(heads)], axis=-1
    ).reshape(bt * n, inner_dim)                                  # (bt*n, inner)

    # TODO(synk): project_out=False (heads==1 and dim_head==dim -> Identity) and
    # Dropout (inference identity) are not modeled; this is the Linear+bias path.
    shift = jnp.dot(o_cat.astype(mm_dtype), wo_ref[...],
                    preferred_element_type=jnp.float32)           # (bt*n, dim)
    shift = shift + bo_ref[...].astype(jnp.float32)
    hh = hh_ref[...].reshape(bt * n, dim).astype(jnp.float32)
    out_ref[...] = (hh + shift).reshape(bt, n, dim).astype(out_ref.dtype)


def prepare_hhyper_params(params, *, dim_head, dtype=jnp.bfloat16):
    """One-time weight prep (run at init, NOT per call).

    * torch-style (out, in) weights transposed to (in, out),
    * softmax scale folded into wq,
    * K and V weights of each modality packed into one (dim, 2*inner) matrix
      (5 projections -> 3),
    * weights stored in the MXU operand dtype (bf16 by default; pass
      dtype=jnp.float32 for exact numerics).  Bias stays f32.
    """
    scale = dim_head ** -0.5
    t = lambda w: jnp.asarray(w, jnp.float32).T
    wq = t(params["wq"]) * scale                                   # (dim, inner)
    wkva = jnp.concatenate([t(params["wkta"]), t(params["wvta"])], axis=1)
    wkvv = jnp.concatenate([t(params["wktv"]), t(params["wvtv"])], axis=1)
    wo = t(params["wo"])                                           # (inner, dim)
    bo = jnp.asarray(params["bo"], jnp.float32).reshape(1, -1)     # (1, dim)
    return {"wq": wq.astype(dtype), "wkva": wkva.astype(dtype),
            "wkvv": wkvv.astype(dtype), "wo": wo.astype(dtype), "bo": bo}


def _vmem_capacity_bytes():
    try:
        return int(pltpu.get_tpu_info().vmem_capacity_bytes)
    except Exception:
        return 64 * 1024 * 1024          # conservative: fits every generation


def _cores_per_chip():
    """TensorCores per chip (v4/v5p/v7x have 2; v5e/v6e have 1)."""
    try:
        dev = jax.devices()[0]
        for attr in ("num_cores", "num_cores_per_chip"):
            v = getattr(dev, attr, None)
            if isinstance(v, int) and 1 <= v <= 8:
                return v
        kind = str(getattr(dev, "device_kind", "")).lower()
        if any(tag in kind for tag in ("v4", "v5p", "v7", "7x")):
            return 2
    except Exception:
        pass
    return 1


def _per_batch_vmem_bytes(n, dim, inner_dim, heads, act_itemsize, mm_itemsize):
    return (5 * n * dim * act_itemsize                 # ht/ha/hv/hh in + out slab
            + 5 * n * inner_dim * 4                    # q, kv_a, kv_v (f32 accum)
            + 6 * n * inner_dim * mm_itemsize          # head-major q / k_cat / v_cat
            + 2 * heads * n * n * (4 + mm_itemsize)    # scores f32 + probs, 2 branches
            + 2 * n * inner_dim * 4)                   # out_h + o_cat (f32)


def _pick_block_batch(b, n, per_batch_bytes, budget_bytes, cores):
    """Largest divisor of b fitting the VMEM budget, preferring MXU-friendly
    row counts (bt*n multiple of 256, else of the sublane tile), and keeping
    >= `cores` grid steps only on multi-TensorCore chips."""
    max_bt = max(1, min(b, budget_bytes // max(per_batch_bytes, 1)))
    divisors = [d for d in range(1, b + 1) if b % d == 0 and d <= max_bt] or [1]
    bt = max(divisors, key=lambda d: ((d * n) % 256 == 0, (d * n) % 8 == 0, d))
    if cores >= 2 and b // bt < cores:
        for cand in sorted(divisors, reverse=True):
            if b // cand >= cores:
                bt = cand
                break
    return bt


def hhyper_learning_layer(h_t, h_a, h_v, h_hyper, prepared, *,
                          heads, dim_head, block_batch=None):
    b, n, dim = h_t.shape
    inner_dim = heads * dim_head

    wq, wkva, wkvv = prepared["wq"], prepared["wkva"], prepared["wkvv"]
    wo, bo = prepared["wo"], prepared["bo"]

    act_itemsize = jnp.dtype(h_t.dtype).itemsize
    mm_itemsize = jnp.dtype(wq.dtype).itemsize

    vmem_cap = _vmem_capacity_bytes()
    cores = _cores_per_chip()

    per_batch = _per_batch_vmem_bytes(n, dim, inner_dim, heads,
                                      act_itemsize, mm_itemsize)
    # Activation-tile budget: ~1/4 of physical VMEM (~32 MiB on 128 MiB parts,
    # ~16 MiB on v7x's 64 MiB); the rest covers weights / double buffers / spill.
    budget = max(vmem_cap // 4, 4 * 1024 * 1024)
    bt = block_batch or _pick_block_batch(b, n, per_batch, budget, cores)
    assert b % bt == 0, "block_batch must divide batch"

    weight_bytes = 6 * dim * inner_dim * mm_itemsize + dim * 4
    est = 2 * bt * per_batch + weight_bytes
    # Generation-aware ceiling: ~75% of physical VMEM (96 MiB on v5e/v6e,
    # 48 MiB on v7x), never below 32 MiB.
    vmem_limit = int(min(max(2 * est, 32 * 1024 * 1024), (vmem_cap * 3) // 4))

    kern = functools.partial(_hhyper_kernel, heads=heads, dim_head=dim_head)

    seq_spec = pl.BlockSpec((bt, n, dim), lambda i: (i, 0, 0))

    def weight_spec(shape):
        # Constant block index across the grid -> single-buffer the weights to
        # halve their VMEM footprint (most valuable under v7x's 64 MiB).
        try:
            return pl.BlockSpec(shape, lambda i: (0, 0),
                                pipeline_mode=pl.Buffered(1))
        except (TypeError, AttributeError):
            return pl.BlockSpec(shape, lambda i: (0, 0))

    def default_weight_spec(shape):
        return pl.BlockSpec(shape, lambda i: (0, 0))

    def call(w_spec):
        in_specs = [
            seq_spec, seq_spec, seq_spec, seq_spec,    # h_t, h_a, h_v, h_hyper
            w_spec((dim, inner_dim)),                  # wq (scale folded)
            w_spec((dim, 2 * inner_dim)),              # [wkta | wvta]
            w_spec((dim, 2 * inner_dim)),              # [wktv | wvtv]
            w_spec((inner_dim, dim)),                  # wo
            w_spec((1, dim)),                          # bo
        ]
        return pl.pallas_call(
            kern,
            out_shape=jax.ShapeDtypeStruct((b, n, dim), h_hyper.dtype),
            grid_spec=pltpu.PrefetchScalarGridSpec(
                num_scalar_prefetch=0,
                grid=(b // bt,),
                in_specs=in_specs,
                out_specs=seq_spec),
            compiler_params=pltpu.CompilerParams(
                dimension_semantics=("parallel",),
                vmem_limit_bytes=vmem_limit),
        )(h_t, h_a, h_v, h_hyper, wq, wkva, wkvv, wo, bo)

    try:
        return call(weight_spec)
    except Exception:
        # Compatibility fallback: retry with default double-buffered weight
        # blocks if single-buffering (pl.Buffered(1)) is rejected by the
        # installed jax/Mosaic.  A genuine kernel error re-raises from here.
        return call(default_weight_spec)


def _reference(h_t, h_a, h_v, h_hyper, params, *, heads, dim_head):
    """Plain-JAX mirror of the PyTorch forward, for verification."""
    scale = dim_head ** -0.5

    def lin(x, w):  # w is (out, in) like torch
        return x @ w.T

    def split_heads(x):  # (b, n, h*d) -> (b, h, n, d)
        b, n, _ = x.shape
        return x.reshape(b, n, heads, dim_head).transpose(0, 2, 1, 3)

    q = split_heads(lin(h_t, params["wq"]))
    k_ta = split_heads(lin(h_a, params["wkta"]))
    k_tv = split_heads(lin(h_v, params["wktv"]))
    v_ta = split_heads(lin(h_a, params["wvta"]))
    v_tv = split_heads(lin(h_v, params["wvtv"]))

    def attend(q, k, v):
        dots = jnp.einsum("bhid,bhjd->bhij", q, k) * scale
        attn = jax.nn.softmax(dots, axis=-1)
        out = jnp.einsum("bhij,bhjd->bhid", attn, v)
        b, h, n, d = out.shape
        return out.transpose(0, 2, 1, 3).reshape(b, n, h * d)

    out = attend(q, k_ta, v_ta) + attend(q, k_tv, v_tv)
    shift = out @ params["wo"].T + params["bo"]
    return h_hyper + shift


if __name__ == "__main__":
    # Small, module-consistent shapes.
    batch, seq_n, dim = 2, 8, 32
    heads, dim_head = 4, 8
    inner_dim = heads * dim_head

    key = jax.random.PRNGKey(0)
    ks = jax.random.split(key, 12)

    def init_w(k, out_f, in_f):
        bound = 1.0 / (in_f ** 0.5)
        return jax.random.uniform(k, (out_f, in_f), jnp.float32, -bound, bound)

    params = {
        "wq":   init_w(ks[0], inner_dim, dim),
        "wkta": init_w(ks[1], inner_dim, dim),
        "wktv": init_w(ks[2], inner_dim, dim),
        "wvta": init_w(ks[3], inner_dim, dim),
        "wvtv": init_w(ks[4], inner_dim, dim),
        "wo":   init_w(ks[5], dim, inner_dim),
        "bo":   jax.random.uniform(ks[6], (dim,), jnp.float32,
                                   -1.0 / (inner_dim ** 0.5),
                                   1.0 / (inner_dim ** 0.5)),
    }

    h_t = jax.random.normal(ks[7], (batch, seq_n, dim), jnp.float32)
    h_a = jax.random.normal(ks[8], (batch, seq_n, dim), jnp.float32)
    h_v = jax.random.normal(ks[9], (batch, seq_n, dim), jnp.float32)
    h_hyper = jax.random.normal(ks[10], (batch, seq_n, dim), jnp.float32)

    # Weights packed / transposed / scaled / cast to bf16 ONCE (not per call).
    prepared = prepare_hhyper_params(params, dim_head=dim_head)

    out = hhyper_learning_layer(h_t, h_a, h_v, h_hyper, prepared,
                                heads=heads, dim_head=dim_head)
    out = jax.block_until_ready(out)

    ref = _reference(h_t, h_a, h_v, h_hyper, params,
                     heads=heads, dim_head=dim_head)
    # bf16 MXU operands (weights / activations / probabilities) plus the EUP
    # approx reciprocal in the softmax -> bf16-appropriate tolerance vs the
    # exact f32 reference.
    max_err = float(jnp.max(jnp.abs(out - ref)))
    assert jnp.allclose(out, ref, atol=6e-2, rtol=6e-2), (
        f"mismatch vs reference: max abs err = {max_err}")

    print("KERNEL_OK")
</pallas_src>

<mosaic_0001>
module attributes {stable_mosaic.version = 11 : i64} {
  func.func @_hhyper_kernel(%arg0: i32, %arg1: memref<2x8x32xf32, #tpu.memory_space<vmem>>, %arg2: memref<2x8x32xf32, #tpu.memory_space<vmem>>, %arg3: memref<2x8x32xf32, #tpu.memory_space<vmem>>, %arg4: memref<2x8x32xf32, #tpu.memory_space<vmem>>, %arg5: memref<32x32xbf16, #tpu.memory_space<vmem>>, %arg6: memref<32x64xbf16, #tpu.memory_space<vmem>>, %arg7: memref<32x64xbf16, #tpu.memory_space<vmem>>, %arg8: memref<32x32xbf16, #tpu.memory_space<vmem>>, %arg9: memref<1x32xf32, #tpu.memory_space<vmem>>, %arg10: memref<2x8x32xf32, #tpu.memory_space<vmem>>) attributes {dimension_semantics = [#tpu.dimension_semantics<parallel>], iteration_bounds = array<i64: 1>, scalar_prefetch = 0 : i64, scratch_operands = 0 : i64, tpu.core_type = #tpu.core_type<tc>, window_params = [{transform_indices = @transform_0, window_bounds = array<i64: 2, 8, 32>}, {transform_indices = @transform_1, window_bounds = array<i64: 2, 8, 32>}, {transform_indices = @transform_2, window_bounds = array<i64: 2, 8, 32>}, {transform_indices = @transform_3, window_bounds = array<i64: 2, 8, 32>}, {pipeline_mode = #tpu.pipeline_mode<synchronous>, transform_indices = @transform_4, window_bounds = array<i64: 32, 32>}, {pipeline_mode = #tpu.pipeline_mode<synchronous>, transform_indices = @transform_5, window_bounds = array<i64: 32, 64>}, {pipeline_mode = #tpu.pipeline_mode<synchronous>, transform_indices = @transform_6, window_bounds = array<i64: 32, 64>}, {pipeline_mode = #tpu.pipeline_mode<synchronous>, transform_indices = @transform_7, window_bounds = array<i64: 32, 32>}, {pipeline_mode = #tpu.pipeline_mode<synchronous>, transform_indices = @transform_8, window_bounds = array<i64: 1, 32>}, {transform_indices = @transform_9, window_bounds = array<i64: 2, 8, 32>}]} {
    %c0 = arith.constant 0 : index
    %c0_0 = arith.constant 0 : index
    %0 = vector.load %arg5[%c0, %c0_0] : memref<32x32xbf16, #tpu.memory_space<vmem>>, vector<32x32xbf16>
    %c0_1 = arith.constant 0 : index
    %c0_2 = arith.constant 0 : index
    %c0_3 = arith.constant 0 : index
    %1 = vector.load %arg1[%c0_1, %c0_2, %c0_3] : memref<2x8x32xf32, #tpu.memory_space<vmem>>, vector<2x8x32xf32>
    %2 = vector.shape_cast %1 : vector<2x8x32xf32> to vector<16x32xf32>
    %3 = arith.truncf %2 : vector<16x32xf32> to vector<16x32xbf16>
    %c0_4 = arith.constant 0 : index
    %c0_5 = arith.constant 0 : index
    %c0_6 = arith.constant 0 : index
    %4 = vector.load %arg2[%c0_4, %c0_5, %c0_6] : memref<2x8x32xf32, #tpu.memory_space<vmem>>, vector<2x8x32xf32>
    %5 = vector.shape_cast %4 : vector<2x8x32xf32> to vector<16x32xf32>
    %6 = arith.truncf %5 : vector<16x32xf32> to vector<16x32xbf16>
    %c0_7 = arith.constant 0 : index
    %c0_8 = arith.constant 0 : index
    %c0_9 = arith.constant 0 : index
    %7 = vector.load %arg3[%c0_7, %c0_8, %c0_9] : memref<2x8x32xf32, #tpu.memory_space<vmem>>, vector<2x8x32xf32>
    %8 = vector.shape_cast %7 : vector<2x8x32xf32> to vector<16x32xf32>
    %9 = arith.truncf %8 : vector<16x32xf32> to vector<16x32xbf16>
    %cst = arith.constant dense<0.000000e+00> : vector<16x32xf32>
    %10 = tpu.matmul %3, %0, %cst {dimension_numbers = #tpu.dot_dimension_numbers<[1], [0], [0], [1], [0, 0, 1, 1], [], []>} : vector<16x32xbf16>, vector<32x32xbf16>, vector<16x32xf32> -> vector<16x32xf32>
    %c0_10 = arith.constant 0 : index
    %c0_11 = arith.constant 0 : index
    %11 = vector.load %arg6[%c0_10, %c0_11] : memref<32x64xbf16, #tpu.memory_space<vmem>>, vector<32x64xbf16>
    %cst_12 = arith.constant dense<0.000000e+00> : vector<16x64xf32>
    %12 = tpu.matmul %6, %11, %cst_12 {dimension_numbers = #tpu.dot_dimension_numbers<[1], [0], [0], [1], [0, 0, 1, 1], [], []>} : vector<16x32xbf16>, vector<32x64xbf16>, vector<16x64xf32> -> vector<16x64xf32>
    %c0_13 = arith.constant 0 : index
    %c0_14 = arith.constant 0 : index
    %13 = vector.load %arg7[%c0_13, %c0_14] : memref<32x64xbf16, #tpu.memory_space<vmem>>, vector<32x64xbf16>
    %cst_15 = arith.constant dense<0.000000e+00> : vector<16x64xf32>
    %14 = tpu.matmul %9, %13, %cst_15 {dimension_numbers = #tpu.dot_dimension_numbers<[1], [0], [0], [1], [0, 0, 1, 1], [], []>} : vector<16x32xbf16>, vector<32x64xbf16>, vector<16x64xf32> -> vector<16x64xf32>
    %15 = vector.shape_cast %10 : vector<16x32xf32> to vector<2x8x32xf32>
    %16 = vector.shape_cast %12 : vector<16x64xf32> to vector<2x8x64xf32>
    %17 = vector.shape_cast %14 : vector<16x64xf32> to vector<2x8x64xf32>
    %18 = vector.extract_strided_slice %15 {offsets = [0, 0, 0], sizes = [2, 8, 8], strides = [1, 1, 1]} : vector<2x8x32xf32> to vector<2x8x8xf32>
    %19 = vector.extract_strided_slice %15 {offsets = [0, 0, 8], sizes = [2, 8, 8], strides = [1, 1, 1]} : vector<2x8x32xf32> to vector<2x8x8xf32>
    %20 = vector.extract_strided_slice %15 {offsets = [0, 0, 16], sizes = [2, 8, 8], strides = [1, 1, 1]} : vector<2x8x32xf32> to vector<2x8x8xf32>
    %21 = vector.extract_strided_slice %15 {offsets = [0, 0, 24], sizes = [2, 8, 8], strides = [1, 1, 1]} : vector<2x8x32xf32> to vector<2x8x8xf32>
    %22 = tpu.concatenate %18, %19, %20, %21 in 0 : vector<2x8x8xf32>, vector<2x8x8xf32>, vector<2x8x8xf32>, vector<2x8x8xf32> -> vector<8x8x8xf32>
    %23 = arith.truncf %22 : vector<8x8x8xf32> to vector<8x8x8xbf16>
    %24 = vector.extract_strided_slice %16 {offsets = [0, 0, 0], sizes = [2, 8, 8], strides = [1, 1, 1]} : vector<2x8x64xf32> to vector<2x8x8xf32>
    %25 = vector.extract_strided_slice %16 {offsets = [0, 0, 8], sizes = [2, 8, 8], strides = [1, 1, 1]} : vector<2x8x64xf32> to vector<2x8x8xf32>
    %26 = vector.extract_strided_slice %16 {offsets = [0, 0, 16], sizes = [2, 8, 8], strides = [1, 1, 1]} : vector<2x8x64xf32> to vector<2x8x8xf32>
    %27 = vector.extract_strided_slice %16 {offsets = [0, 0, 24], sizes = [2, 8, 8], strides = [1, 1, 1]} : vector<2x8x64xf32> to vector<2x8x8xf32>
    %28 = tpu.concatenate %24, %25, %26, %27 in 0 : vector<2x8x8xf32>, vector<2x8x8xf32>, vector<2x8x8xf32>, vector<2x8x8xf32> -> vector<8x8x8xf32>
    %29 = vector.extract_strided_slice %17 {offsets = [0, 0, 0], sizes = [2, 8, 8], strides = [1, 1, 1]} : vector<2x8x64xf32> to vector<2x8x8xf32>
    %30 = vector.extract_strided_slice %17 {offsets = [0, 0, 8], sizes = [2, 8, 8], strides = [1, 1, 1]} : vector<2x8x64xf32> to vector<2x8x8xf32>
    %31 = vector.extract_strided_slice %17 {offsets = [0, 0, 16], sizes = [2, 8, 8], strides = [1, 1, 1]} : vector<2x8x64xf32> to vector<2x8x8xf32>
    %32 = vector.extract_strided_slice %17 {offsets = [0, 0, 24], sizes = [2, 8, 8], strides = [1, 1, 1]} : vector<2x8x64xf32> to vector<2x8x8xf32>
    %33 = tpu.concatenate %29, %30, %31, %32 in 0 : vector<2x8x8xf32>, vector<2x8x8xf32>, vector<2x8x8xf32>, vector<2x8x8xf32> -> vector<8x8x8xf32>
    %34 = tpu.concatenate %28, %33 in 1 : vector<8x8x8xf32>, vector<8x8x8xf32> -> vector<8x16x8xf32>
    %35 = arith.truncf %34 : vector<8x16x8xf32> to vector<8x16x8xbf16>
    %36 = vector.extract_strided_slice %16 {offsets = [0, 0, 32], sizes = [2, 8, 8], strides = [1, 1, 1]} : vector<2x8x64xf32> to vector<2x8x8xf32>
    %37 = vector.extract_strided_slice %16 {offsets = [0, 0, 40], sizes = [2, 8, 8], strides = [1, 1, 1]} : vector<2x8x64xf32> to vector<2x8x8xf32>
    %38 = vector.extract_strided_slice %16 {offsets = [0, 0, 48], sizes = [2, 8, 8], strides = [1, 1, 1]} : vector<2x8x64xf32> to vector<2x8x8xf32>
    %39 = vector.extract_strided_slice %16 {offsets = [0, 0, 56], sizes = [2, 8, 8], strides = [1, 1, 1]} : vector<2x8x64xf32> to vector<2x8x8xf32>
    %40 = tpu.concatenate %36, %37, %38, %39 in 0 : vector<2x8x8xf32>, vector<2x8x8xf32>, vector<2x8x8xf32>, vector<2x8x8xf32> -> vector<8x8x8xf32>
    %41 = vector.extract_strided_slice %17 {offsets = [0, 0, 32], sizes = [2, 8, 8], strides = [1, 1, 1]} : vector<2x8x64xf32> to vector<2x8x8xf32>
    %42 = vector.extract_strided_slice %17 {offsets = [0, 0, 40], sizes = [2, 8, 8], strides = [1, 1, 1]} : vector<2x8x64xf32> to vector<2x8x8xf32>
    %43 = vector.extract_strided_slice %17 {offsets = [0, 0, 48], sizes = [2, 8, 8], strides = [1, 1, 1]} : vector<2x8x64xf32> to vector<2x8x8xf32>
    %44 = vector.extract_strided_slice %17 {offsets = [0, 0, 56], sizes = [2, 8, 8], strides = [1, 1, 1]} : vector<2x8x64xf32> to vector<2x8x8xf32>
    %45 = tpu.concatenate %41, %42, %43, %44 in 0 : vector<2x8x8xf32>, vector<2x8x8xf32>, vector<2x8x8xf32>, vector<2x8x8xf32> -> vector<8x8x8xf32>
    %46 = tpu.concatenate %40, %45 in 1 : vector<8x8x8xf32>, vector<8x8x8xf32> -> vector<8x16x8xf32>
    %47 = arith.truncf %46 : vector<8x16x8xf32> to vector<8x16x8xbf16>
    %cst_16 = arith.constant dense<0.000000e+00> : vector<8x8x16xf32>
    %48 = tpu.matmul %23, %35, %cst_16 {dimension_numbers = #tpu.dot_dimension_numbers<[2], [2], [1], [1], [0, 0, 0, 1, 1, 1], [0], [0]>} : vector<8x8x8xbf16>, vector<8x16x8xbf16>, vector<8x8x16xf32> -> vector<8x8x16xf32>
    %49 = vector.extract_strided_slice %48 {offsets = [0, 0, 0], sizes = [8, 8, 8], strides = [1, 1, 1]} : vector<8x8x16xf32> to vector<8x8x8xf32>
    %cst_17 = arith.constant dense<0xFF800000> : vector<8x8xf32>
    %50 = vector.multi_reduction <maximumf>, %49, %cst_17 [2] : vector<8x8x8xf32> to vector<8x8xf32>
    %51 = vector.shape_cast %50 : vector<8x8xf32> to vector<8x8x1xf32>
    %52 = vector.broadcast %51 : vector<8x8x1xf32> to vector<8x8x8xf32>
    %53 = arith.subf %49, %52 : vector<8x8x8xf32>
    %54 = math.exp %53 : vector<8x8x8xf32>
    %cst_18 = arith.constant dense<0.000000e+00> : vector<8x8xf32>
    %55 = vector.multi_reduction <add>, %54, %cst_18 [2] : vector<8x8x8xf32> to vector<8x8xf32>
    %56 = vector.shape_cast %55 : vector<8x8xf32> to vector<8x8x1xf32>
    %57 = tpu.reciprocal %56 {approx = true} : vector<8x8x1xf32> -> vector<8x8x1xf32>
    %58 = vector.broadcast %57 : vector<8x8x1xf32> to vector<8x8x8xf32>
    %59 = arith.mulf %54, %58 : vector<8x8x8xf32>
    %60 = vector.extract_strided_slice %48 {offsets = [0, 0, 8], sizes = [8, 8, 8], strides = [1, 1, 1]} : vector<8x8x16xf32> to vector<8x8x8xf32>
    %cst_19 = arith.constant dense<0xFF800000> : vector<8x8xf32>
    %61 = vector.multi_reduction <maximumf>, %60, %cst_19 [2] : vector<8x8x8xf32> to vector<8x8xf32>
    %62 = vector.shape_cast %61 : vector<8x8xf32> to vector<8x8x1xf32>
    %63 = vector.broadcast %62 : vector<8x8x1xf32> to vector<8x8x8xf32>
    %64 = arith.subf %60, %63 : vector<8x8x8xf32>
    %65 = math.exp %64 : vector<8x8x8xf32>
    %cst_20 = arith.constant dense<0.000000e+00> : vector<8x8xf32>
    %66 = vector.multi_reduction <add>, %65, %cst_20 [2] : vector<8x8x8xf32> to vector<8x8xf32>
    %67 = vector.shape_cast %66 : vector<8x8xf32> to vector<8x8x1xf32>
    %68 = tpu.reciprocal %67 {approx = true} : vector<8x8x1xf32> -> vector<8x8x1xf32>
    %69 = vector.broadcast %68 : vector<8x8x1xf32> to vector<8x8x8xf32>
    %70 = arith.mulf %65, %69 : vector<8x8x8xf32>
    %71 = tpu.concatenate %59, %70 in 2 : vector<8x8x8xf32>, vector<8x8x8xf32> -> vector<8x8x16xf32>
    %72 = arith.truncf %71 : vector<8x8x16xf32> to vector<8x8x16xbf16>
    %cst_21 = arith.constant dense<0.000000e+00> : vector<8x8x8xf32>
    %73 = tpu.matmul %72, %47, %cst_21 {dimension_numbers = #tpu.dot_dimension_numbers<[2], [1], [1], [2], [0, 0, 0, 1, 1, 2], [0], [0]>} : vector<8x8x16xbf16>, vector<8x16x8xbf16>, vector<8x8x8xf32> -> vector<8x8x8xf32>
    %74 = vector.extract_strided_slice %73 {offsets = [0, 0, 0], sizes = [2, 8, 8], strides = [1, 1, 1]} : vector<8x8x8xf32> to vector<2x8x8xf32>
    %75 = vector.extract_strided_slice %73 {offsets = [2, 0, 0], sizes = [2, 8, 8], strides = [1, 1, 1]} : vector<8x8x8xf32> to vector<2x8x8xf32>
    %76 = vector.extract_strided_slice %73 {offsets = [4, 0, 0], sizes = [2, 8, 8], strides = [1, 1, 1]} : vector<8x8x8xf32> to vector<2x8x8xf32>
    %77 = vector.extract_strided_slice %73 {offsets = [6, 0, 0], sizes = [2, 8, 8], strides = [1, 1, 1]} : vector<8x8x8xf32> to vector<2x8x8xf32>
    %78 = tpu.concatenate %74, %75, %76, %77 in 2 : vector<2x8x8xf32>, vector<2x8x8xf32>, vector<2x8x8xf32>, vector<2x8x8xf32> -> vector<2x8x32xf32>
    %79 = vector.shape_cast %78 : vector<2x8x32xf32> to vector<16x32xf32>
    %80 = arith.truncf %79 : vector<16x32xf32> to vector<16x32xbf16>
    %c0_22 = arith.constant 0 : index
    %c0_23 = arith.constant 0 : index
    %81 = vector.load %arg8[%c0_22, %c0_23] : memref<32x32xbf16, #tpu.memory_space<vmem>>, vector<32x32xbf16>
    %cst_24 = arith.constant dense<0.000000e+00> : vector<16x32xf32>
    %82 = tpu.matmul %80, %81, %cst_24 {dimension_numbers = #tpu.dot_dimension_numbers<[1], [0], [0], [1], [0, 0, 1, 1], [], []>} : vector<16x32xbf16>, vector<32x32xbf16>, vector<16x32xf32> -> vector<16x32xf32>
    %c0_25 = arith.constant 0 : index
    %c0_26 = arith.constant 0 : index
    %83 = vector.load %arg9[%c0_25, %c0_26] : memref<1x32xf32, #tpu.memory_space<vmem>>, vector<1x32xf32>
    %84 = vector.broadcast %83 : vector<1x32xf32> to vector<16x32xf32>
    %85 = arith.addf %82, %84 : vector<16x32xf32>
    %c0_27 = arith.constant 0 : index
    %c0_28 = arith.constant 0 : index
    %c0_29 = arith.constant 0 : index
    %86 = vector.load %arg4[%c0_27, %c0_28, %c0_29] : memref<2x8x32xf32, #tpu.memory_space<vmem>>, vector<2x8x32xf32>
    %87 = vector.shape_cast %86 : vector<2x8x32xf32> to vector<16x32xf32>
    %88 = arith.addf %87, %85 : vector<16x32xf32>
    %89 = vector.shape_cast %88 : vector<16x32xf32> to vector<2x8x32xf32>
    %c0_30 = arith.constant 0 : index
    %c0_31 = arith.constant 0 : index
    %c0_32 = arith.constant 0 : index
    %90 = vector.load %arg10[%c0_30, %c0_31, %c0_32] : memref<2x8x32xf32, #tpu.memory_space<vmem>>, vector<2x8x32xf32>
    tpu.vector_store %arg10[%c0_30, %c0_31, %c0_32], %89 {strides = array<i32>} : memref<2x8x32xf32, #tpu.memory_space<vmem>>, vector<2x8x32xf32>,
    return
  }
  func.func @transform_0(%arg0: i32) -> (i32, i32, i32) {
    %c0_i32 = arith.constant 0 : i32
    %c0_i32_0 = arith.constant 0 : i32
    %c0_i32_1 = arith.constant 0 : i32
    return %arg0, %c0_i32, %c0_i32_0 : i32, i32, i32
  }
  func.func @transform_1(%arg0: i32) -> (i32, i32, i32) {
    %c0_i32 = arith.constant 0 : i32
    %c0_i32_0 = arith.constant 0 : i32
    %c0_i32_1 = arith.constant 0 : i32
    return %arg0, %c0_i32, %c0_i32_0 : i32, i32, i32
  }
  func.func @transform_2(%arg0: i32) -> (i32, i32, i32) {
    %c0_i32 = arith.constant 0 : i32
    %c0_i32_0 = arith.constant 0 : i32
    %c0_i32_1 = arith.constant 0 : i32
    return %arg0, %c0_i32, %c0_i32_0 : i32, i32, i32
  }
  func.func @transform_3(%arg0: i32) -> (i32, i32, i32) {
    %c0_i32 = arith.constant 0 : i32
    %c0_i32_0 = arith.constant 0 : i32
    %c0_i32_1 = arith.constant 0 : i32
    return %arg0, %c0_i32, %c0_i32_0 : i32, i32, i32
  }
  func.func @transform_4(%arg0: i32) -> (i32, i32) {
    %c0_i32 = arith.constant 0 : i32
    %c0_i32_0 = arith.constant 0 : i32
    %c0_i32_1 = arith.constant 0 : i32
    return %c0_i32, %c0_i32_0 : i32, i32
  }
  func.func @transform_5(%arg0: i32) -> (i32, i32) {
    %c0_i32 = arith.constant 0 : i32
    %c0_i32_0 = arith.constant 0 : i32
    %c0_i32_1 = arith.constant 0 : i32
    return %c0_i32, %c0_i32_0 : i32, i32
  }
  func.func @transform_6(%arg0: i32) -> (i32, i32) {
    %c0_i32 = arith.constant 0 : i32
    %c0_i32_0 = arith.constant 0 : i32
    %c0_i32_1 = arith.constant 0 : i32
    return %c0_i32, %c0_i32_0 : i32, i32
  }
  func.func @transform_7(%arg0: i32) -> (i32, i32) {
    %c0_i32 = arith.constant 0 : i32
    %c0_i32_0 = arith.constant 0 : i32
    %c0_i32_1 = arith.constant 0 : i32
    return %c0_i32, %c0_i32_0 : i32, i32
  }
  func.func @transform_8(%arg0: i32) -> (i32, i32) {
    %c0_i32 = arith.constant 0 : i32
    %c0_i32_0 = arith.constant 0 : i32
    %c0_i32_1 = arith.constant 0 : i32
    return %c0_i32, %c0_i32_0 : i32, i32
  }
  func.func @transform_9(%arg0: i32) -> (i32, i32, i32) {
    %c0_i32 = arith.constant 0 : i32
    %c0_i32_0 = arith.constant 0 : i32
    %c0_i32_1 = arith.constant 0 : i32
    return %arg0, %c0_i32, %c0_i32_0 : i32, i32, i32
  }
}

module attributes {stable_mosaic.version = 11 : i64} {
  func.func @_hhyper_kernel(%arg0: i32, %arg1: memref<2x8x32xf32, #tpu.memory_space<vmem>>, %arg2: memref<2x8x32xf32, #tpu.memory_space<vmem>>, %arg3: memref<2x8x32xf32, #tpu.memory_space<vmem>>, %arg4: memref<2x8x32xf32, #tpu.memory_space<vmem>>, %arg5: memref<32x32xbf16, #tpu.memory_space<vmem>>, %arg6: memref<32x64xbf16, #tpu.memory_space<vmem>>, %arg7: memref<32x64xbf16, #tpu.memory_space<vmem>>, %arg8: memref<32x32xbf16, #tpu.memory_space<vmem>>, %arg9: memref<1x32xf32, #tpu.memory_space<vmem>>, %arg10: memref<2x8x32xf32, #tpu.memory_space<vmem>>) attributes {dimension_semantics = [#tpu.dimension_semantics<parallel>], iteration_bounds = array<i64: 1>, scalar_prefetch = 0 : i64, scratch_operands = 0 : i64, tpu.core_type = #tpu.core_type<tc>, window_params = [{transform_indices = @transform_0, window_bounds = array<i64: 2, 8, 32>}, {transform_indices = @transform_1, window_bounds = array<i64: 2, 8, 32>}, {transform_indices = @transform_2, window_bounds = array<i64: 2, 8, 32>}, {transform_indices = @transform_3, window_bounds = array<i64: 2, 8, 32>}, {pipeline_mode = #tpu.pipeline_mode<synchronous>, transform_indices = @transform_4, window_bounds = array<i64: 32, 32>}, {pipeline_mode = #tpu.pipeline_mode<synchronous>, transform_indices = @transform_5, window_bounds = array<i64: 32, 64>}, {pipeline_mode = #tpu.pipeline_mode<synchronous>, transform_indices = @transform_6, window_bounds = array<i64: 32, 64>}, {pipeline_mode = #tpu.pipeline_mode<synchronous>, transform_indices = @transform_7, window_bounds = array<i64: 32, 32>}, {pipeline_mode = #tpu.pipeline_mode<synchronous>, transform_indices = @transform_8, window_bounds = array<i64: 1, 32>}, {transform_indices = @transform_9, window_bounds = array<i64: 2, 8, 32>}]} {
    %c0 = arith.constant 0 : index
    %c0_0 = arith.constant 0 : index
    %0 = vector.load %arg5[%c0, %c0_0] : memref<32x32xbf16, #tpu.memory_space<vmem>>, vector<32x32xbf16>
    %c0_1 = arith.constant 0 : index
    %c0_2 = arith.constant 0 : index
    %c0_3 = arith.constant 0 : index
    %1 = vector.load %arg1[%c0_1, %c0_2, %c0_3] : memref<2x8x32xf32, #tpu.memory_space<vmem>>, vector<2x8x32xf32>
    %2 = vector.shape_cast %1 : vector<2x8x32xf32> to vector<16x32xf32>
    %3 = arith.truncf %2 : vector<16x32xf32> to vector<16x32xbf16>
    %c0_4 = arith.constant 0 : index
    %c0_5 = arith.constant 0 : index
    %c0_6 = arith.constant 0 : index
    %4 = vector.load %arg2[%c0_4, %c0_5, %c0_6] : memref<2x8x32xf32, #tpu.memory_space<vmem>>, vector<2x8x32xf32>
    %5 = vector.shape_cast %4 : vector<2x8x32xf32> to vector<16x32xf32>
    %6 = arith.truncf %5 : vector<16x32xf32> to vector<16x32xbf16>
    %c0_7 = arith.constant 0 : index
    %c0_8 = arith.constant 0 : index
    %c0_9 = arith.constant 0 : index
    %7 = vector.load %arg3[%c0_7, %c0_8, %c0_9] : memref<2x8x32xf32, #tpu.memory_space<vmem>>, vector<2x8x32xf32>
    %8 = vector.shape_cast %7 : vector<2x8x32xf32> to vector<16x32xf32>
    %9 = arith.truncf %8 : vector<16x32xf32> to vector<16x32xbf16>
    %cst = arith.constant dense<0.000000e+00> : vector<16x32xf32>
    %10 = tpu.matmul %3, %0, %cst {dimension_numbers = #tpu.dot_dimension_numbers<[1], [0], [0], [1], [0, 0, 1, 1], [], []>} : vector<16x32xbf16>, vector<32x32xbf16>, vector<16x32xf32> -> vector<16x32xf32>
    %c0_10 = arith.constant 0 : index
    %c0_11 = arith.constant 0 : index
    %11 = vector.load %arg6[%c0_10, %c0_11] : memref<32x64xbf16, #tpu.memory_space<vmem>>, vector<32x64xbf16>
    %cst_12 = arith.constant dense<0.000000e+00> : vector<16x64xf32>
    %12 = tpu.matmul %6, %11, %cst_12 {dimension_numbers = #tpu.dot_dimension_numbers<[1], [0], [0], [1], [0, 0, 1, 1], [], []>} : vector<16x32xbf16>, vector<32x64xbf16>, vector<16x64xf32> -> vector<16x64xf32>
    %c0_13 = arith.constant 0 : index
    %c0_14 = arith.constant 0 : index
    %13 = vector.load %arg7[%c0_13, %c0_14] : memref<32x64xbf16, #tpu.memory_space<vmem>>, vector<32x64xbf16>
    %cst_15 = arith.constant dense<0.000000e+00> : vector<16x64xf32>
    %14 = tpu.matmul %9, %13, %cst_15 {dimension_numbers = #tpu.dot_dimension_numbers<[1], [0], [0], [1], [0, 0, 1, 1], [], []>} : vector<16x32xbf16>, vector<32x64xbf16>, vector<16x64xf32> -> vector<16x64xf32>
    %15 = vector.shape_cast %10 : vector<16x32xf32> to vector<2x8x32xf32>
    %16 = vector.shape_cast %12 : vector<16x64xf32> to vector<2x8x64xf32>
    %17 = vector.shape_cast %14 : vector<16x64xf32> to vector<2x8x64xf32>
    %18 = vector.extract_strided_slice %15 {offsets = [0, 0, 0], sizes = [2, 8, 8], strides = [1, 1, 1]} : vector<2x8x32xf32> to vector<2x8x8xf32>
    %19 = vector.extract_strided_slice %15 {offsets = [0, 0, 8], sizes = [2, 8, 8], strides = [1, 1, 1]} : vector<2x8x32xf32> to vector<2x8x8xf32>
    %20 = vector.extract_strided_slice %15 {offsets = [0, 0, 16], sizes = [2, 8, 8], strides = [1, 1, 1]} : vector<2x8x32xf32> to vector<2x8x8xf32>
    %21 = vector.extract_strided_slice %15 {offsets = [0, 0, 24], sizes = [2, 8, 8], strides = [1, 1, 1]} : vector<2x8x32xf32> to vector<2x8x8xf32>
    %22 = tpu.concatenate %18, %19, %20, %21 in 0 : vector<2x8x8xf32>, vector<2x8x8xf32>, vector<2x8x8xf32>, vector<2x8x8xf32> -> vector<8x8x8xf32>
    %23 = arith.truncf %22 : vector<8x8x8xf32> to vector<8x8x8xbf16>
    %24 = vector.extract_strided_slice %16 {offsets = [0, 0, 0], sizes = [2, 8, 8], strides = [1, 1, 1]} : vector<2x8x64xf32> to vector<2x8x8xf32>
    %25 = vector.extract_strided_slice %16 {offsets = [0, 0, 8], sizes = [2, 8, 8], strides = [1, 1, 1]} : vector<2x8x64xf32> to vector<2x8x8xf32>
    %26 = vector.extract_strided_slice %16 {offsets = [0, 0, 16], sizes = [2, 8, 8], strides = [1, 1, 1]} : vector<2x8x64xf32> to vector<2x8x8xf32>
    %27 = vector.extract_strided_slice %16 {offsets = [0, 0, 24], sizes = [2, 8, 8], strides = [1, 1, 1]} : vector<2x8x64xf32> to vector<2x8x8xf32>
    %28 = tpu.concatenate %24, %25, %26, %27 in 0 : vector<2x8x8xf32>, vector<2x8x8xf32>, vector<2x8x8xf32>, vector<2x8x8xf32> -> vector<8x8x8xf32>
    %29 = vector.extract_strided_slice %17 {offsets = [0, 0, 0], sizes = [2, 8, 8], strides = [1, 1, 1]} : vector<2x8x64xf32> to vector<2x8x8xf32>
    %30 = vector.extract_strided_slice %17 {offsets = [0, 0, 8], sizes = [2, 8, 8], strides = [1, 1, 1]} : vector<2x8x64xf32> to vector<2x8x8xf32>
    %31 = vector.extract_strided_slice %17 {offsets = [0, 0, 16], sizes = [2, 8, 8], strides = [1, 1, 1]} : vector<2x8x64xf32> to vector<2x8x8xf32>
    %32 = vector.extract_strided_slice %17 {offsets = [0, 0, 24], sizes = [2, 8, 8], strides = [1, 1, 1]} : vector<2x8x64xf32> to vector<2x8x8xf32>
    %33 = tpu.concatenate %29, %30, %31, %32 in 0 : vector<2x8x8xf32>, vector<2x8x8xf32>, vector<2x8x8xf32>, vector<2x8x8xf32> -> vector<8x8x8xf32>
    %34 = tpu.concatenate %28, %33 in 1 : vector<8x8x8xf32>, vector<8x8x8xf32> -> vector<8x16x8xf32>
    %35 = arith.truncf %34 : vector<8x16x8xf32> to vector<8x16x8xbf16>
    %36 = vector.extract_strided_slice %16 {offsets = [0, 0, 32], sizes = [2, 8, 8], strides = [1, 1, 1]} : vector<2x8x64xf32> to vector<2x8x8xf32>
    %37 = vector.extract_strided_slice %16 {offsets = [0, 0, 40], sizes = [2, 8, 8], strides = [1, 1, 1]} : vector<2x8x64xf32> to vector<2x8x8xf32>
    %38 = vector.extract_strided_slice %16 {offsets = [0, 0, 48], sizes = [2, 8, 8], strides = [1, 1, 1]} : vector<2x8x64xf32> to vector<2x8x8xf32>
    %39 = vector.extract_strided_slice %16 {offsets = [0, 0, 56], sizes = [2, 8, 8], strides = [1, 1, 1]} : vector<2x8x64xf32> to vector<2x8x8xf32>
    %40 = tpu.concatenate %36, %37, %38, %39 in 0 : vector<2x8x8xf32>, vector<2x8x8xf32>, vector<2x8x8xf32>, vector<2x8x8xf32> -> vector<8x8x8xf32>
    %41 = vector.extract_strided_slice %17 {offsets = [0, 0, 32], sizes = [2, 8, 8], strides = [1, 1, 1]} : vector<2x8x64xf32> to vector<2x8x8xf32>
    %42 = vector.extract_strided_slice %17 {offsets = [0, 0, 40], sizes = [2, 8, 8], strides = [1, 1, 1]} : vector<2x8x64xf32> to vector<2x8x8xf32>
    %43 = vector.extract_strided_slice %17 {offsets = [0, 0, 48], sizes = [2, 8, 8], strides = [1, 1, 1]} : vector<2x8x64xf32> to vector<2x8x8xf32>
    %44 = vector.extract_strided_slice %17 {offsets = [0, 0, 56], sizes = [2, 8, 8], strides = [1, 1, 1]} : vector<2x8x64xf32> to vector<2x8x8xf32>
    %45 = tpu.concatenate %41, %42, %43, %44 in 0 : vector<2x8x8xf32>, vector<2x8x8xf32>, vector<2x8x8xf32>, vector<2x8x8xf32> -> vector<8x8x8xf32>
    %46 = tpu.concatenate %40, %45 in 1 : vector<8x8x8xf32>, vector<8x8x8xf32> -> vector<8x16x8xf32>
    %47 = arith.truncf %46 : vector<8x16x8xf32> to vector<8x16x8xbf16>
    %cst_16 = arith.constant dense<0.000000e+00> : vector<8x8x16xf32>
    %48 = tpu.matmul %23, %35, %cst_16 {dimension_numbers = #tpu.dot_dimension_numbers<[2], [2], [1], [1], [0, 0, 0, 1, 1, 1], [0], [0]>} : vector<8x8x8xbf16>, vector<8x16x8xbf16>, vector<8x8x16xf32> -> vector<8x8x16xf32>
    %49 = vector.extract_strided_slice %48 {offsets = [0, 0, 0], sizes = [8, 8, 8], strides = [1, 1, 1]} : vector<8x8x16xf32> to vector<8x8x8xf32>
    %cst_17 = arith.constant dense<0xFF800000> : vector<8x8xf32>
    %50 = vector.multi_reduction <maximumf>, %49, %cst_17 [2] : vector<8x8x8xf32> to vector<8x8xf32>
    %51 = vector.shape_cast %50 : vector<8x8xf32> to vector<8x8x1xf32>
    %52 = vector.broadcast %51 : vector<8x8x1xf32> to vector<8x8x8xf32>
    %53 = arith.subf %49, %52 : vector<8x8x8xf32>
    %54 = math.exp %53 : vector<8x8x8xf32>
    %cst_18 = arith.constant dense<0.000000e+00> : vector<8x8xf32>
    %55 = vector.multi_reduction <add>, %54, %cst_18 [2] : vector<8x8x8xf32> to vector<8x8xf32>
    %56 = vector.shape_cast %55 : vector<8x8xf32> to vector<8x8x1xf32>
    %57 = tpu.reciprocal %56 {approx = true} : vector<8x8x1xf32> -> vector<8x8x1xf32>
    %58 = vector.broadcast %57 : vector<8x8x1xf32> to vector<8x8x8xf32>
    %59 = arith.mulf %54, %58 : vector<8x8x8xf32>
    %60 = vector.extract_strided_slice %48 {offsets = [0, 0, 8], sizes = [8, 8, 8], strides = [1, 1, 1]} : vector<8x8x16xf32> to vector<8x8x8xf32>
    %cst_19 = arith.constant dense<0xFF800000> : vector<8x8xf32>
    %61 = vector.multi_reduction <maximumf>, %60, %cst_19 [2] : vector<8x8x8xf32> to vector<8x8xf32>
    %62 = vector.shape_cast %61 : vector<8x8xf32> to vector<8x8x1xf32>
    %63 = vector.broadcast %62 : vector<8x8x1xf32> to vector<8x8x8xf32>
    %64 = arith.subf %60, %63 : vector<8x8x8xf32>
    %65 = math.exp %64 : vector<8x8x8xf32>
    %cst_20 = arith.constant dense<0.000000e+00> : vector<8x8xf32>
    %66 = vector.multi_reduction <add>, %65, %cst_20 [2] : vector<8x8x8xf32> to vector<8x8xf32>
    %67 = vector.shape_cast %66 : vector<8x8xf32> to vector<8x8x1xf32>
    %68 = tpu.reciprocal %67 {approx = true} : vector<8x8x1xf32> -> vector<8x8x1xf32>
    %69 = vector.broadcast %68 : vector<8x8x1xf32> to vector<8x8x8xf32>
    %70 = arith.mulf %65, %69 : vector<8x8x8xf32>
    %71 = tpu.concatenate %59, %70 in 2 : vector<8x8x8xf32>, vector<8x8x8xf32> -> vector<8x8x16xf32>
    %72 = arith.truncf %71 : vector<8x8x16xf32> to vector<8x8x16xbf16>
    %cst_21 = arith.constant dense<0.000000e+00> : vector<8x8x8xf32>
    %73 = tpu.matmul %72, %47, %cst_21 {dimension_numbers = #tpu.dot_dimension_numbers<[2], [1], [1], [2], [0, 0, 0, 1, 1, 2], [0], [0]>} : vector<8x8x16xbf16>, vector<8x16x8xbf16>, vector<8x8x8xf32> -> vector<8x8x8xf32>
    %74 = vector.extract_strided_slice %73 {offsets = [0, 0, 0], sizes = [2, 8, 8], strides = [1, 1, 1]} : vector<8x8x8xf32> to vector<2x8x8xf32>
    %75 = vector.extract_strided_slice %73 {offsets = [2, 0, 0], sizes = [2, 8, 8], strides = [1, 1, 1]} : vector<8x8x8xf32> to vector<2x8x8xf32>
    %76 = vector.extract_strided_slice %73 {offsets = [4, 0, 0], sizes = [2, 8, 8], strides = [1, 1, 1]} : vector<8x8x8xf32> to vector<2x8x8xf32>
    %77 = vector.extract_strided_slice %73 {offsets = [6, 0, 0], sizes = [2, 8, 8], strides = [1, 1, 1]} : vector<8x8x8xf32> to vector<2x8x8xf32>
    %78 = tpu.concatenate %74, %75, %76, %77 in 2 : vector<2x8x8xf32>, vector<2x8x8xf32>, vector<2x8x8xf32>, vector<2x8x8xf32> -> vector<2x8x32xf32>
    %79 = vector.shape_cast %78 : vector<2x8x32xf32> to vector<16x32xf32>
    %80 = arith.truncf %79 : vector<16x32xf32> to vector<16x32xbf16>
    %c0_22 = arith.constant 0 : index
    %c0_23 = arith.constant 0 : index
    %81 = vector.load %arg8[%c0_22, %c0_23] : memref<32x32xbf16, #tpu.memory_space<vmem>>, vector<32x32xbf16>
    %cst_24 = arith.constant dense<0.000000e+00> : vector<16x32xf32>
    %82 = tpu.matmul %80, %81, %cst_24 {dimension_numbers = #tpu.dot_dimension_numbers<[1], [0], [0], [1], [0, 0, 1, 1], [], []>} : vector<16x32xbf16>, vector<32x32xbf16>, vector<16x32xf32> -> vector<16x32xf32>
    %c0_25 = arith.constant 0 : index
    %c0_26 = arith.constant 0 : index
    %83 = vector.load %arg9[%c0_25, %c0_26] : memref<1x32xf32, #tpu.memory_space<vmem>>, vector<1x32xf32>
    %84 = vector.broadcast %83 : vector<1x32xf32> to vector<16x32xf32>
    %85 = arith.addf %82, %84 : vector<16x32xf32>
    %c0_27 = arith.constant 0 : index
    %c0_28 = arith.constant 0 : index
    %c0_29 = arith.constant 0 : index
    %86 = vector.load %arg4[%c0_27, %c0_28, %c0_29] : memref<2x8x32xf32, #tpu.memory_space<vmem>>, vector<2x8x32xf32>
    %87 = vector.shape_cast %86 : vector<2x8x32xf32> to vector<16x32xf32>
    %88 = arith.addf %87, %85 : vector<16x32xf32>
    %89 = vector.shape_cast %88 : vector<16x32xf32> to vector<2x8x32xf32>
    %c0_30 = arith.constant 0 : index
    %c0_31 = arith.constant 0 : index
    %c0_32 = arith.constant 0 : index
    %90 = vector.load %arg10[%c0_30, %c0_31, %c0_32] : memref<2x8x32xf32, #tpu.memory_space<vmem>>, vector<2x8x32xf32>
    tpu.vector_store %arg10[%c0_30, %c0_31, %c0_32], %89 {strides = array<i32>} : memref<2x8x32xf32, #tpu.memory_space<vmem>>, vector<2x8x32xf32>,
    return
  }
  func.func @transform_0(%arg0: i32) -> (i32, i32, i32) {
    %c0_i32 = arith.constant 0 : i32
    %c0_i32_0 = arith.constant 0 : i32
    %c0_i32_1 = arith.constant 0 : i32
    return %arg0, %c0_i32, %c0_i32_0 : i32, i32, i32
  }
  func.func @transform_1(%arg0: i32) -> (i32, i32, i32) {
    %c0_i32 = arith.constant 0 : i32
    %c0_i32_0 = arith.constant 0 : i32
    %c0_i32_1 = arith.constant 0 : i32
    return %arg0, %c0_i32, %c0_i32_0 : i32, i32, i32
  }
  func.func @transform_2(%arg0: i32) -> (i32, i32, i32) {
    %c0_i32 = arith.constant 0 : i32
    %c0_i32_0 = arith.constant 0 : i32
    %c0_i32_1 = arith.constant 0 : i32
    return %arg0, %c0_i32, %c0_i32_0 : i32, i32, i32
  }
  func.func @transform_3(%arg0: i32) -> (i32, i32, i32) {
    %c0_i32 = arith.constant 0 : i32
    %c0_i32_0 = arith.constant 0 : i32
    %c0_i32_1 = arith.constant 0 : i32
    return %arg0, %c0_i32, %c0_i32_0 : i32, i32, i32
  }
  func.func @transform_4(%arg0: i32) -> (i32, i32) {
    %c0_i32 = arith.constant 0 : i32
    %c0_i32_0 = arith.constant 0 : i32
    %c0_i32_1 = arith.constant 0 : i32
    return %c0_i32, %c0_i32_0 : i32, i32
  }
  func.func @transform_5(%arg0: i32) -> (i32, i32) {
    %c0_i32 = arith.constant 0 : i32
    %c0_i32_0 = arith.constant 0 : i32
    %c0_i32_1 = arith.constant 0 : i32
    return %c0_i32, %c0_i32_0 : i32, i32
  }
  func.func @transform_6(%arg0: i32) -> (i32, i32) {
    %c0_i32 = arith.constant 0 : i32
    %c0_i32_0 = arith.constant 0 : i32
    %c0_i32_1 = arith.constant 0 : i32
    return %c0_i32, %c0_i32_0 : i32, i32
  }
  func.func @transform_7(%arg0: i32) -> (i32, i32) {
    %c0_i32 = arith.constant 0 : i32
    %c0_i32_0 = arith.constant 0 : i32
    %c0_i32_1 = arith.constant 0 : i32
    return %c0_i32, %c0_i32_0 : i32, i32
  }
  func.func @transform_8(%arg0: i32) -> (i32, i32) {
    %c0_i32 = arith.constant 0 : i32
    %c0_i32_0 = arith.constant 0 : i32
    %c0_i32_1 = arith.constant 0 : i32
    return %c0_i32, %c0_i32_0 : i32, i32
  }
  func.func @transform_9(%arg0: i32) -> (i32, i32, i32) {
    %c0_i32 = arith.constant 0 : i32
    %c0_i32_0 = arith.constant 0 : i32
    %c0_i32_1 = arith.constant 0 : i32
    return %arg0, %c0_i32, %c0_i32_0 : i32, i32, i32
  }
}

</mosaic_0001>

<llo_original>
// kernel: tpu_custom_call.1
$region0: #{tpu_custom_call.1}
  #allocation0 [shape = 'u32[]', space=smem, size = 0x4, offset = 0x4, fixed_abs, tag = 'smem constant byte address 0x4 - core index']
  #allocation1 [shape = 'u32[144,128]{1,0:T(1,128)}', space=vmem, size = 0x12000, scoped, tag = 'internal scratch']
  %s0 = inlined_call_operand.hbm [shape: f32[2,8,32], index: 0, kind: input, shape index: {}]
  %s1 = inlined_call_operand.hbm [shape: f32[2,8,32], index: 1, kind: input, shape index: {}]
  %s2 = inlined_call_operand.hbm [shape: f32[2,8,32], index: 2, kind: input, shape index: {}]
  %s3 = inlined_call_operand.hbm [shape: f32[2,8,32], index: 3, kind: input, shape index: {}]
  %s4 = inlined_call_operand.hbm [shape: bf16[32,32], index: 4, kind: input, shape index: {}]
  %s5 = inlined_call_operand.vmem [shape: bf16[32,64], index: 5, kind: input, shape index: {}]
  %s6 = inlined_call_operand.hbm [shape: bf16[32,64], index: 6, kind: input, shape index: {}]
  %s7 = inlined_call_operand.hbm [shape: bf16[32,32], index: 7, kind: input, shape index: {}]
  %s8 = inlined_call_operand.vmem [shape: f32[1,32], index: 8, kind: input, shape index: {}]
  %s9 = inlined_call_operand.hbm [shape: f32[2,8,32], index: 9, kind: output, shape index: {}]
  %s10 = sld [smem:[#allocation0]]
  $region74: #{tpu_custom_call.1} parent=0
    _
  %s12 = ssub.s32 1, %s10
  %s13 = scalar_select 0, %s12, %s10
  $region1: #{tpu_custom_call.1} parent=0
    #allocation2 [shape = 'u8[8192]{0}', space=vmem, size = 0x2000, scoped, tag = 'input window, operand 0, single buffered']
    #allocation3 [shape = 's32[1]{0}', space=sflag, size = 0x4, scoped, tag = 'scoped memory for tpu_custom_call.1']
    #allocation4 [shape = 's32[1]{0}', space=sflag, size = 0x4, scoped, tag = 'scoped memory for tpu_custom_call.1']
    #allocation5 [shape = 'u8[8192]{0}', space=vmem, size = 0x2000, scoped, tag = 'input window, operand 1, single buffered']
    #allocation6 [shape = 's32[1]{0}', space=sflag, size = 0x4, scoped, tag = 'scoped memory for tpu_custom_call.1']
    #allocation7 [shape = 'u8[8192]{0}', space=vmem, size = 0x2000, scoped, tag = 'input window, operand 2, single buffered']
    #allocation8 [shape = 'u8[8192]{0}', space=vmem, size = 0x2000, scoped, tag = 'input window, operand 3, single buffered']
    #allocation9 [shape = 's32[1]{0}', space=sflag, size = 0x4, scoped, tag = 'scoped memory for tpu_custom_call.1']
    #allocation10 [shape = 'u8[8192]{0}', space=vmem, size = 0x2000, scoped, tag = 'input window, operand 4, single buffered']
    #allocation11 [shape = 'u8[8192]{0}', space=vmem, size = 0x2000, scoped, tag = 'input window, operand 6, single buffered']
    #allocation12 [shape = 's32[1]{0}', space=sflag, size = 0x4, scoped, tag = 'scoped memory for tpu_custom_call.1']
    #allocation13 [shape = 'u8[8192]{0}', space=vmem, size = 0x2000, scoped, tag = 'input window, operand 7, single buffered']
    #allocation14 [shape = 'u8[8192]{0}', space=vmem, size = 0x2000, scoped, tag = 'output window, operand 0, single buffered']
    %14 = vsyncpa [#allocation3], 0
    %15 = vsyncpa [#allocation6], 0
    %16 = vsyncpa [#allocation9], 0
    %17 = vsyncpa [#allocation12], 0
    %18 = vsyncpa [#allocation4], 0
    // Predicated region
    $region2: #{tpu_custom_call.1} parent=1 // pred_check
      _
    $region3: #{tpu_custom_call.1} parent=1 // pred_check_branch
      %20 = sbr.rel (0) target = $region5
    $region4: #{tpu_custom_call.1} parent=1 // pred_region
      %s22 = ssub.s32 256, 256
      %23 = vsyncadd [#allocation3], %s22
      %s24 = sshll.u32 [#allocation2], 4
      %s25 = int_to_ptr.vmem [resolvable:$true] %s24
      %30 = dma.hbm_to_vmem [thread:$0]  %s0, 256, %s25, [#allocation3], 128, 128, 8
    $region5: #{tpu_custom_call.1} parent=1 // pred_fallthru
      _
    // Predicated region
    $region6: #{tpu_custom_call.1} parent=1 // pred_check
      _
    $region7: #{tpu_custom_call.1} parent=1 // pred_check_branch
      %32 = sbr.rel (0) target = $region9
    $region8: #{tpu_custom_call.1} parent=1 // pred_region
      %s34 = ssub.s32 256, 256
      %35 = vsyncadd [#allocation6], %s34
      %s36 = sshll.u32 [#allocation5], 4
      %s37 = int_to_ptr.vmem [resolvable:$true] %s36
      %42 = dma.hbm_to_vmem [thread:$0]  %s1, 256, %s37, [#allocation6], 128, 128, 8
    $region9: #{tpu_custom_call.1} parent=1 // pred_fallthru
      _
    // Predicated region
    $region10: #{tpu_custom_call.1} parent=1 // pred_check
      _
    $region11: #{tpu_custom_call.1} parent=1 // pred_check_branch
      %44 = sbr.rel (0) target = $region13
    $region12: #{tpu_custom_call.1} parent=1 // pred_region
      %s46 = ssub.s32 256, 256
      %47 = vsyncadd [#allocation6], %s46
      %s48 = sshll.u32 [#allocation7], 4
      %s49 = int_to_ptr.vmem [resolvable:$true] %s48
      %54 = dma.hbm_to_vmem [thread:$0]  %s2, 256, %s49, [#allocation6], 128, 128, 8
    $region13: #{tpu_custom_call.1} parent=1 // pred_fallthru
      _
    // Predicated region
    $region14: #{tpu_custom_call.1} parent=1 // pred_check
      _
    $region15: #{tpu_custom_call.1} parent=1 // pred_check_branch
      %56 = sbr.rel (0) target = $region17
    $region16: #{tpu_custom_call.1} parent=1 // pred_region
      %s58 = ssub.s32 256, 256
      %59 = vsyncadd [#allocation9], %s58
      %s60 = sshll.u32 [#allocation8], 4
      %s61 = int_to_ptr.vmem [resolvable:$true] %s60
      %66 = dma.hbm_to_vmem [thread:$0]  %s3, 256, %s61, [#allocation9], 128, 128, 8
    $region17: #{tpu_custom_call.1} parent=1 // pred_fallthru
      _
    // Predicated region
    $region18: #{tpu_custom_call.1} parent=1 // pred_check
      _
    $region19: #{tpu_custom_call.1} parent=1 // pred_check_branch
      %68 = sbr.rel (0) target = $region21
    $region20: #{tpu_custom_call.1} parent=1 // pred_region
      %s70 = ssub.s32 256, 256
      %71 = vsyncadd [#allocation9], %s70
      %s72 = sshll.u32 [#allocation10], 4
      %s73 = int_to_ptr.vmem [resolvable:$true] %s72
      %78 = dma.hbm_to_vmem [thread:$0]  %s4, 256, %s73, [#allocation9], 64, 64, 4
    $region21: #{tpu_custom_call.1} parent=1 // pred_fallthru
      _
    // Predicated region
    $region22: #{tpu_custom_call.1} parent=1 // pred_check
      _
    $region23: #{tpu_custom_call.1} parent=1 // pred_check_branch
      %80 = sbr.rel (0) target = $region25
    $region24: #{tpu_custom_call.1} parent=1 // pred_region
      _
    $region25: #{tpu_custom_call.1} parent=1 // pred_fallthru
      _
    // Predicated region
    $region26: #{tpu_custom_call.1} parent=1 // pred_check
      _
    $region27: #{tpu_custom_call.1} parent=1 // pred_check_branch
      %82 = sbr.rel (0) target = $region29
    $region28: #{tpu_custom_call.1} parent=1 // pred_region
      %s84 = ssub.s32 256, 256
      %85 = vsyncadd [#allocation12], %s84
      %s86 = sshll.u32 [#allocation11], 4
      %s87 = int_to_ptr.vmem [resolvable:$true] %s86
      %92 = dma.hbm_to_vmem [thread:$0]  %s6, 256, %s87, [#allocation12], 64, 64, 4
    $region29: #{tpu_custom_call.1} parent=1 // pred_fallthru
      _
    // Predicated region
    $region30: #{tpu_custom_call.1} parent=1 // pred_check
      _
    $region31: #{tpu_custom_call.1} parent=1 // pred_check_branch
      %94 = sbr.rel (0) target = $region33
    $region32: #{tpu_custom_call.1} parent=1 // pred_region
      %s96 = ssub.s32 256, 256
      %97 = vsyncadd [#allocation12], %s96
      %s98 = sshll.u32 [#allocation13], 4
      %s99 = int_to_ptr.vmem [resolvable:$true] %s98
      %104 = dma.hbm_to_vmem [thread:$0]  %s7, 256, %s99, [#allocation12], 64, 64, 4
    $region33: #{tpu_custom_call.1} parent=1 // pred_fallthru
      _
    // Predicated region
    $region34: #{tpu_custom_call.1} parent=1 // pred_check
      _
    $region35: #{tpu_custom_call.1} parent=1 // pred_check_branch
      %106 = sbr.rel (0) target = $region37
    $region36: #{tpu_custom_call.1} parent=1 // pred_region
      _
    $region37: #{tpu_custom_call.1} parent=1 // pred_fallthru
      _
    // Predicated region
    $region38: #{tpu_custom_call.1} parent=1 // pred_check
      _
    $region39: #{tpu_custom_call.1} parent=1 // pred_check_branch
      %108 = sbr.rel (0) target = $region41
    $region40: #{tpu_custom_call.1} parent=1 // pred_region
      %109 = dma.done [#allocation3], 256
    $region41: #{tpu_custom_call.1} parent=1 // pred_fallthru
      _
    // Predicated region
    $region42: #{tpu_custom_call.1} parent=1 // pred_check
      _
    $region43: #{tpu_custom_call.1} parent=1 // pred_check_branch
      %111 = sbr.rel (0) target = $region45
    $region44: #{tpu_custom_call.1} parent=1 // pred_region
      %112 = dma.done [#allocation6], 256
    $region45: #{tpu_custom_call.1} parent=1 // pred_fallthru
      _
    // Predicated region
    $region46: #{tpu_custom_call.1} parent=1 // pred_check
      _
    $region47: #{tpu_custom_call.1} parent=1 // pred_check_branch
      %114 = sbr.rel (0) target = $region49
    $region48: #{tpu_custom_call.1} parent=1 // pred_region
      %115 = dma.done [#allocation6], 256
    $region49: #{tpu_custom_call.1} parent=1 // pred_fallthru
      _
    // Predicated region
    $region50: #{tpu_custom_call.1} parent=1 // pred_check
      _
    $region51: #{tpu_custom_call.1} parent=1 // pred_check_branch
      %117 = sbr.rel (0) target = $region53
    $region52: #{tpu_custom_call.1} parent=1 // pred_region
      %118 = dma.done [#allocation9], 256
    $region53: #{tpu_custom_call.1} parent=1 // pred_fallthru
      _
    // Predicated region
    $region54: #{tpu_custom_call.1} parent=1 // pred_check
      _
    $region55: #{tpu_custom_call.1} parent=1 // pred_check_branch
      %120 = sbr.rel (0) target = $region57
    $region56: #{tpu_custom_call.1} parent=1 // pred_region
      %121 = dma.done [#allocation9], 256
    $region57: #{tpu_custom_call.1} parent=1 // pred_fallthru
      _
    // Predicated region
    $region58: #{tpu_custom_call.1} parent=1 // pred_check
      _
    $region59: #{tpu_custom_call.1} parent=1 // pred_check_branch
      %123 = sbr.rel (0) target = $region61
    $region60: #{tpu_custom_call.1} parent=1 // pred_region
      %124 = dma.done [#allocation12], 256
    $region61: #{tpu_custom_call.1} parent=1 // pred_fallthru
      _
    // Predicated region
    $region62: #{tpu_custom_call.1} parent=1 // pred_check
      _
    $region63: #{tpu_custom_call.1} parent=1 // pred_check_branch
      %126 = sbr.rel (0) target = $region65
    $region64: #{tpu_custom_call.1} parent=1 // pred_region
      %127 = dma.done [#allocation12], 256
    $region65: #{tpu_custom_call.1} parent=1 // pred_fallthru
      _
    %v129 = vld [vmem:[#allocation10] sm:$0xf]
    %v130 = vld [vmem:[#allocation10 + $0x4] sm:$0xf]
    %v131 = vld [vmem:[#allocation10 + $0x8] sm:$0xf]
    %v132 = vld [vmem:[#allocation10 + $0xc] sm:$0xf]
    %v133 = vld [vmem:[#allocation2] sm:$0xff]
    %v134 = vld [vmem:[#allocation2 + $0x8] sm:$0xff]
    %v135 = vpack.c.bf16 %v134, %v133
    %v136 = vld [vmem:[#allocation5] sm:$0xff]
    %v137 = vld [vmem:[#allocation5 + $0x8] sm:$0xff]
    %v138 = vpack.c.bf16 %v137, %v136
    %v139 = vld [vmem:[#allocation7] sm:$0xff]
    %v140 = vld [vmem:[#allocation7 + $0x8] sm:$0xff]
    %v141 = vpack.c.bf16 %v140, %v139
    %v146 = vunpack.c.l.b16 %v129
    %v147 = vunpack.c.l.b16 %v130
    %v148 = vunpack.c.l.b16 %v131
    %v149 = vunpack.c.l.b16 %v132
    %v150 = vpack.c.b16 %v147, %v146
    %v151 = vpack.c.b16 %v149, %v148
    %vm154 = vcmask 261120
    %v156 = vsel %vm154, %v135, 0
    %158 = vmatprep.subr.bf16.mxu0 0
    %159 = vmatpush1.bf16.msra.mxu0 %v150
    %160 = vmatprep.subr.bf16.mxu0 0
    %161 = vmatpush1.bf16.msra.mxu0 %v151
    %162 = vmatprep.subr.bf16.mxu0 0
    %163 = vmatpush1.bf16.msra.mxu0 0
    %164 = vmatprep.subr.bf16.mxu0 0
    %165 = vmatpush1.bf16.msra.mxu0 0
    %166 = vmatprep.subr.bf16.mxu0 0
    %167 = vmatpush1.bf16.msra.mxu0 0
    %168 = vmatprep.subr.bf16.mxu0 0
    %169 = vmatpush1.bf16.msra.mxu0 0
    %170 = vmatprep.subr.bf16.mxu0 0
    %171 = vmatpush1.bf16.msra.mxu0 0
    %172 = vmatprep.subr.bf16.mxu0 0
    %173 = vmatpush1.bf16.msra.mxu0 0
    %174 = vmatprep.subr.bf16.mxu0 0
    %175 = vmatpush1.bf16.msra.mxu0 0
    %176 = vmatprep.subr.bf16.mxu0 0
    %177 = vmatpush1.bf16.msra.mxu0 0
    %178 = vmatprep.subr.bf16.mxu0 0
    %179 = vmatpush1.bf16.msra.mxu0 0
    %180 = vmatprep.subr.bf16.mxu0 0
    %181 = vmatpush1.bf16.msra.mxu0 0
    %182 = vmatprep.subr.bf16.mxu0 0
    %183 = vmatpush1.bf16.msra.mxu0 0
    %184 = vmatprep.subr.bf16.mxu0 0
    %185 = vmatpush1.bf16.msra.mxu0 0
    %186 = vmatprep.subr.bf16.mxu0 0
    %187 = vmatpush1.bf16.msra.mxu0 0
    %188 = vmatprep.subr.bf16.mxu0 0
    %189 = vmatpush1.bf16.msra.mxu0 0
    %190 = vmatprep.mubr.bf16.mxu0 0
    %191 = vmatmul.mubr.bf16.gmra.mrb[0].mxu0 %v156
    %v192 = vpop.f32.mrb[0].mxu0
    %v193 = vadd.f32 0.0, %v192
    %v194 = vpop.f32.mrb[0].mxu0
    %v195 = vpop.f32.mrb[0].mxu0
    %v196 = vadd.f32 0.0, %v195
    %v197 = vpop.f32.mrb[0].mxu0
    %198 = vdwg.mxu0
    %v199 = vld [vmem:[%s5] sm:$0xf]
    %v200 = vld [vmem:[%s5 + $0x4] sm:$0xf]
    %v201 = vld [vmem:[%s5 + $0x8] sm:$0xf]
    %v202 = vld [vmem:[%s5 + $0xc] sm:$0xf]
    %v207 = vunpack.c.l.b16 %v199
    %v208 = vunpack.c.l.b16 %v200
    %v209 = vunpack.c.l.b16 %v201
    %v210 = vunpack.c.l.b16 %v202
    %v211 = vpack.c.b16 %v208, %v207
    %v212 = vpack.c.b16 %v210, %v209
    %v216 = vsel %vm154, %v138, 0
    %218 = vmatprep.subr.bf16.mxu0 0
    %219 = vmatpush1.bf16.msra.mxu0 %v211
    %220 = vmatprep.subr.bf16.mxu0 0
    %221 = vmatpush1.bf16.msra.mxu0 %v212
    %222 = vmatprep.subr.bf16.mxu0 0
    %223 = vmatpush1.bf16.msra.mxu0 0
    %224 = vmatprep.subr.bf16.mxu0 0
    %225 = vmatpush1.bf16.msra.mxu0 0
    %226 = vmatprep.subr.bf16.mxu0 0
    %227 = vmatpush1.bf16.msra.mxu0 0
    %228 = vmatprep.subr.bf16.mxu0 0
    %229 = vmatpush1.bf16.msra.mxu0 0
    %230 = vmatprep.subr.bf16.mxu0 0
    %231 = vmatpush1.bf16.msra.mxu0 0
    %232 = vmatprep.subr.bf16.mxu0 0
    %233 = vmatpush1.bf16.msra.mxu0 0
    %234 = vmatprep.subr.bf16.mxu0 0
    %235 = vmatpush1.bf16.msra.mxu0 0
    %236 = vmatprep.subr.bf16.mxu0 0
    %237 = vmatpush1.bf16.msra.mxu0 0
    %238 = vmatprep.subr.bf16.mxu0 0
    %239 = vmatpush1.bf16.msra.mxu0 0
    %240 = vmatprep.subr.bf16.mxu0 0
    %241 = vmatpush1.bf16.msra.mxu0 0
    %242 = vmatprep.subr.bf16.mxu0 0
    %243 = vmatpush1.bf16.msra.mxu0 0
    %244 = vmatprep.subr.bf16.mxu0 0
    %245 = vmatpush1.bf16.msra.mxu0 0
    %246 = vmatprep.subr.bf16.mxu0 0
    %247 = vmatpush1.bf16.msra.mxu0 0
    %248 = vmatprep.subr.bf16.mxu0 0
    %249 = vmatpush1.bf16.msra.mxu0 0
    %250 = vmatprep.mubr.bf16.mxu0 0
    %251 = vmatmul.mubr.bf16.gmra.mrb[0].mxu0 %v216
    %v252 = vpop.f32.mrb[0].mxu0
    %v253 = vadd.f32 0.0, %v252
    %v254 = vpop.f32.mrb[0].mxu0
    %v255 = vpop.f32.mrb[0].mxu0
    %v256 = vadd.f32 0.0, %v255
    %v257 = vpop.f32.mrb[0].mxu0
    %258 = vdwg.mxu0
    %v259 = vld [vmem:[#allocation11] sm:$0xf]
    %v260 = vld [vmem:[#allocation11 + $0x4] sm:$0xf]
    %v261 = vld [vmem:[#allocation11 + $0x8] sm:$0xf]
    %v262 = vld [vmem:[#allocation11 + $0xc] sm:$0xf]
    %v267 = vunpack.c.l.b16 %v259
    %v268 = vunpack.c.l.b16 %v260
    %v269 = vunpack.c.l.b16 %v261
    %v270 = vunpack.c.l.b16 %v262
    %v271 = vpack.c.b16 %v268, %v267
    %v272 = vpack.c.b16 %v270, %v269
    %v276 = vsel %vm154, %v141, 0
    %278 = vmatprep.subr.bf16.mxu0 0
    %279 = vmatpush1.bf16.msra.mxu0 %v271
    %280 = vmatprep.subr.bf16.mxu0 0
    %281 = vmatpush1.bf16.msra.mxu0 %v272
    %282 = vmatprep.subr.bf16.mxu0 0
    %283 = vmatpush1.bf16.msra.mxu0 0
    %284 = vmatprep.subr.bf16.mxu0 0
    %285 = vmatpush1.bf16.msra.mxu0 0
    %286 = vmatprep.subr.bf16.mxu0 0
    %287 = vmatpush1.bf16.msra.mxu0 0
    %288 = vmatprep.subr.bf16.mxu0 0
    %289 = vmatpush1.bf16.msra.mxu0 0
    %290 = vmatprep.subr.bf16.mxu0 0
    %291 = vmatpush1.bf16.msra.mxu0 0
    %292 = vmatprep.subr.bf16.mxu0 0
    %293 = vmatpush1.bf16.msra.mxu0 0
    %294 = vmatprep.subr.bf16.mxu0 0
    %295 = vmatpush1.bf16.msra.mxu0 0
    %296 = vmatprep.subr.bf16.mxu0 0
    %297 = vmatpush1.bf16.msra.mxu0 0
    %298 = vmatprep.subr.bf16.mxu0 0
    %299 = vmatpush1.bf16.msra.mxu0 0
    %300 = vmatprep.subr.bf16.mxu0 0
    %301 = vmatpush1.bf16.msra.mxu0 0
    %302 = vmatprep.subr.bf16.mxu0 0
    %303 = vmatpush1.bf16.msra.mxu0 0
    %304 = vmatprep.subr.bf16.mxu0 0
    %305 = vmatpush1.bf16.msra.mxu0 0
    %306 = vmatprep.subr.bf16.mxu0 0
    %307 = vmatpush1.bf16.msra.mxu0 0
    %308 = vmatprep.subr.bf16.mxu0 0
    %309 = vmatpush1.bf16.msra.mxu0 0
    %310 = vmatprep.mubr.bf16.mxu0 0
    %311 = vmatmul.mubr.bf16.gmra.mrb[0].mxu0 %v276
    %v312 = vpop.f32.mrb[0].mxu0
    %v313 = vadd.f32 0.0, %v312
    %v314 = vpop.f32.mrb[0].mxu0
    %v315 = vpop.f32.mrb[0].mxu0
    %v316 = vadd.f32 0.0, %v315
    %v317 = vpop.f32.mrb[0].mxu0
    %318 = vdwg.mxu0
    %321 = vrot.lane.b32.xlu0 %v193, 120
    %v322 = vpop.permute.xlu0 %321
    %323 = vrot.lane.b32.xlu0 %v196, 120
    %v324 = vpop.permute.xlu0 %323
    %327 = vrot.lane.b32.xlu0 %v193, 112
    %v328 = vpop.permute.xlu0 %327
    %329 = vrot.lane.b32.xlu0 %v196, 112
    %v330 = vpop.permute.xlu0 %329
    %333 = vrot.lane.b32.xlu0 %v193, 104
    %v334 = vpop.permute.xlu0 %333
    %335 = vrot.lane.b32.xlu0 %v196, 104
    %v336 = vpop.permute.xlu0 %335
    %v339 = vpack.c.bf16 %v193, %v193
    %v340 = vpack.c.bf16 %v196, %v196
    %v341 = vpack.c.bf16 %v322, %v322
    %v342 = vpack.c.bf16 %v324, %v324
    %v343 = vpack.c.bf16 %v328, %v328
    %v344 = vpack.c.bf16 %v330, %v330
    %v345 = vpack.c.bf16 %v334, %v334
    %v346 = vpack.c.bf16 %v336, %v336
    %349 = vrot.lane.b32.xlu0 %v253, 120
    %v350 = vpop.permute.xlu0 %349
    %351 = vrot.lane.b32.xlu0 %v256, 120
    %v352 = vpop.permute.xlu0 %351
    %355 = vrot.lane.b32.xlu0 %v253, 112
    %v356 = vpop.permute.xlu0 %355
    %357 = vrot.lane.b32.xlu0 %v256, 112
    %v358 = vpop.permute.xlu0 %357
    %361 = vrot.lane.b32.xlu0 %v253, 104
    %v362 = vpop.permute.xlu0 %361
    %363 = vrot.lane.b32.xlu0 %v256, 104
    %v364 = vpop.permute.xlu0 %363
    %369 = vrot.lane.b32.xlu0 %v313, 120
    %v370 = vpop.permute.xlu0 %369
    %371 = vrot.lane.b32.xlu0 %v316, 120
    %v372 = vpop.permute.xlu0 %371
    %375 = vrot.lane.b32.xlu0 %v313, 112
    %v376 = vpop.permute.xlu0 %375
    %377 = vrot.lane.b32.xlu0 %v316, 112
    %v378 = vpop.permute.xlu0 %377
    %381 = vrot.lane.b32.xlu0 %v313, 104
    %v382 = vpop.permute.xlu0 %381
    %383 = vrot.lane.b32.xlu0 %v316, 104
    %v384 = vpop.permute.xlu0 %383
    %v387 = vpack.c.bf16 %v313, %v253
    %v388 = vpack.c.bf16 %v316, %v256
    %v389 = vpack.c.bf16 %v370, %v350
    %v390 = vpack.c.bf16 %v372, %v352
    %v391 = vpack.c.bf16 %v376, %v356
    %v392 = vpack.c.bf16 %v378, %v358
    %v393 = vpack.c.bf16 %v382, %v362
    %v394 = vpack.c.bf16 %v384, %v364
    %vm395 = vcmask 64512
    %v397 = vsel %vm395, %v339, 0
    %v400 = vsel %vm395, %v387, 0
    %402 = vmatprep.subr.bf16.mxu0 0
    %403 = vmatpush1.bf16.xpose.msra.mxu0 %v400
    %404 = vmatprep.subr.bf16.mxu0 0
    %405 = vmatpush1.bf16.xpose.msra.mxu0 0
    %406 = vmatprep.subr.bf16.mxu0 0
    %407 = vmatpush1.bf16.xpose.msra.mxu0 0
    %408 = vmatprep.subr.bf16.mxu0 0
    %409 = vmatpush1.bf16.xpose.msra.mxu0 0
    %410 = vmatprep.subr.bf16.mxu0 0
    %411 = vmatpush1.bf16.xpose.msra.mxu0 0
    %412 = vmatprep.subr.bf16.mxu0 0
    %413 = vmatpush1.bf16.xpose.msra.mxu0 0
    %414 = vmatprep.subr.bf16.mxu0 0
    %415 = vmatpush1.bf16.xpose.msra.mxu0 0
    %416 = vmatprep.subr.bf16.mxu0 0
    %417 = vmatpush1.bf16.xpose.msra.mxu0 0
    %418 = vmatprep.subr.bf16.mxu0 0
    %419 = vmatpush1.bf16.xpose.msra.mxu0 0
    %420 = vmatprep.subr.bf16.mxu0 0
    %421 = vmatpush1.bf16.xpose.msra.mxu0 0
    %422 = vmatprep.subr.bf16.mxu0 0
    %423 = vmatpush1.bf16.xpose.msra.mxu0 0
    %424 = vmatprep.subr.bf16.mxu0 0
    %425 = vmatpush1.bf16.xpose.msra.mxu0 0
    %426 = vmatprep.subr.bf16.mxu0 0
    %427 = vmatpush1.bf16.xpose.msra.mxu0 0
    %428 = vmatprep.subr.bf16.mxu0 0
    %429 = vmatpush1.bf16.xpose.msra.mxu0 0
    %430 = vmatprep.subr.bf16.mxu0 0
    %431 = vmatpush1.bf16.xpose.msra.mxu0 0
    %432 = vmatprep.subr.bf16.mxu0 0
    %433 = vmatpush1.bf16.xpose.msra.mxu0 0
    %434 = vmatprep.mubr.bf16.mxu0 0
    %435 = vmatmul.mubr.bf16.gmra.mrb[0].mxu0 %v397
    %v436 = vpop.f32.mrb[0].mxu0
    %v437 = vadd.f32 0.0, %v436
    %v438 = vpop.f32.mrb[0].mxu0
    %v439 = vpop.f32.mrb[0].mxu0
    %v440 = vpop.f32.mrb[0].mxu0
    %441 = vdwg.mxu0
    %v443 = vsel %vm395, %v340, 0
    %v446 = vsel %vm395, %v388, 0
    %448 = vmatprep.subr.bf16.mxu0 0
    %449 = vmatpush1.bf16.xpose.msra.mxu0 %v446
    %450 = vmatprep.subr.bf16.mxu0 0
    %451 = vmatpush1.bf16.xpose.msra.mxu0 0
    %452 = vmatprep.subr.bf16.mxu0 0
    %453 = vmatpush1.bf16.xpose.msra.mxu0 0
    %454 = vmatprep.subr.bf16.mxu0 0
    %455 = vmatpush1.bf16.xpose.msra.mxu0 0
    %456 = vmatprep.subr.bf16.mxu0 0
    %457 = vmatpush1.bf16.xpose.msra.mxu0 0
    %458 = vmatprep.subr.bf16.mxu0 0
    %459 = vmatpush1.bf16.xpose.msra.mxu0 0
    %460 = vmatprep.subr.bf16.mxu0 0
    %461 = vmatpush1.bf16.xpose.msra.mxu0 0
    %462 = vmatprep.subr.bf16.mxu0 0
    %463 = vmatpush1.bf16.xpose.msra.mxu0 0
    %464 = vmatprep.subr.bf16.mxu0 0
    %465 = vmatpush1.bf16.xpose.msra.mxu0 0
    %466 = vmatprep.subr.bf16.mxu0 0
    %467 = vmatpush1.bf16.xpose.msra.mxu0 0
    %468 = vmatprep.subr.bf16.mxu0 0
    %469 = vmatpush1.bf16.xpose.msra.mxu0 0
    %470 = vmatprep.subr.bf16.mxu0 0
    %471 = vmatpush1.bf16.xpose.msra.mxu0 0
    %472 = vmatprep.subr.bf16.mxu0 0
    %473 = vmatpush1.bf16.xpose.msra.mxu0 0
    %474 = vmatprep.subr.bf16.mxu0 0
    %475 = vmatpush1.bf16.xpose.msra.mxu0 0
    %476 = vmatprep.subr.bf16.mxu0 0
    %477 = vmatpush1.bf16.xpose.msra.mxu0 0
    %478 = vmatprep.subr.bf16.mxu0 0
    %479 = vmatpush1.bf16.xpose.msra.mxu0 0
    %480 = vmatprep.mubr.bf16.mxu0 0
    %481 = vmatmul.mubr.bf16.gmra.mrb[0].mxu0 %v443
    %v482 = vpop.f32.mrb[0].mxu0
    %v483 = vadd.f32 0.0, %v482
    %v484 = vpop.f32.mrb[0].mxu0
    %v485 = vpop.f32.mrb[0].mxu0
    %v486 = vpop.f32.mrb[0].mxu0
    %487 = vdwg.mxu0
    %v489 = vsel %vm395, %v341, 0
    %v492 = vsel %vm395, %v389, 0
    %494 = vmatprep.subr.bf16.mxu0 0
    %495 = vmatpush1.bf16.xpose.msra.mxu0 %v492
    %496 = vmatprep.subr.bf16.mxu0 0
    %497 = vmatpush1.bf16.xpose.msra.mxu0 0
    %498 = vmatprep.subr.bf16.mxu0 0
    %499 = vmatpush1.bf16.xpose.msra.mxu0 0
    %500 = vmatprep.subr.bf16.mxu0 0
    %501 = vmatpush1.bf16.xpose.msra.mxu0 0
    %502 = vmatprep.subr.bf16.mxu0 0
    %503 = vmatpush1.bf16.xpose.msra.mxu0 0
    %504 = vmatprep.subr.bf16.mxu0 0
    %505 = vmatpush1.bf16.xpose.msra.mxu0 0
    %506 = vmatprep.subr.bf16.mxu0 0
    %507 = vmatpush1.bf16.xpose.msra.mxu0 0
    %508 = vmatprep.subr.bf16.mxu0 0
    %509 = vmatpush1.bf16.xpose.msra.mxu0 0
    %510 = vmatprep.subr.bf16.mxu0 0
    %511 = vmatpush1.bf16.xpose.msra.mxu0 0
    %512 = vmatprep.subr.bf16.mxu0 0
    %513 = vmatpush1.bf16.xpose.msra.mxu0 0
    %514 = vmatprep.subr.bf16.mxu0 0
    %515 = vmatpush1.bf16.xpose.msra.mxu0 0
    %516 = vmatprep.subr.bf16.mxu0 0
    %517 = vmatpush1.bf16.xpose.msra.mxu0 0
    %518 = vmatprep.subr.bf16.mxu0 0
    %519 = vmatpush1.bf16.xpose.msra.mxu0 0
    %520 = vmatprep.subr.bf16.mxu0 0
    %521 = vmatpush1.bf16.xpose.msra.mxu0 0
    %522 = vmatprep.subr.bf16.mxu0 0
    %523 = vmatpush1.bf16.xpose.msra.mxu0 0
    %524 = vmatprep.subr.bf16.mxu0 0
    %525 = vmatpush1.bf16.xpose.msra.mxu0 0
    %526 = vmatprep.mubr.bf16.mxu0 0
    %527 = vmatmul.mubr.bf16.gmra.mrb[0].mxu0 %v489
    %v528 = vpop.f32.mrb[0].mxu0
    %v529 = vadd.f32 0.0, %v528
    %v530 = vpop.f32.mrb[0].mxu0
    %v531 = vpop.f32.mrb[0].mxu0
    %v532 = vpop.f32.mrb[0].mxu0
    %533 = vdwg.mxu0
    %v535 = vsel %vm395, %v342, 0
    %v538 = vsel %vm395, %v390, 0
    %540 = vmatprep.subr.bf16.mxu0 0
    %541 = vmatpush1.bf16.xpose.msra.mxu0 %v538
    %542 = vmatprep.subr.bf16.mxu0 0
    %543 = vmatpush1.bf16.xpose.msra.mxu0 0
    %544 = vmatprep.subr.bf16.mxu0 0
    %545 = vmatpush1.bf16.xpose.msra.mxu0 0
    %546 = vmatprep.subr.bf16.mxu0 0
    %547 = vmatpush1.bf16.xpose.msra.mxu0 0
    %548 = vmatprep.subr.bf16.mxu0 0
    %549 = vmatpush1.bf16.xpose.msra.mxu0 0
    %550 = vmatprep.subr.bf16.mxu0 0
    %551 = vmatpush1.bf16.xpose.msra.mxu0 0
    %552 = vmatprep.subr.bf16.mxu0 0
    %553 = vmatpush1.bf16.xpose.msra.mxu0 0
    %554 = vmatprep.subr.bf16.mxu0 0
    %555 = vmatpush1.bf16.xpose.msra.mxu0 0
    %556 = vmatprep.subr.bf16.mxu0 0
    %557 = vmatpush1.bf16.xpose.msra.mxu0 0
    %558 = vmatprep.subr.bf16.mxu0 0
    %559 = vmatpush1.bf16.xpose.msra.mxu0 0
    %560 = vmatprep.subr.bf16.mxu0 0
    %561 = vmatpush1.bf16.xpose.msra.mxu0 0
    %562 = vmatprep.subr.bf16.mxu0 0
    %563 = vmatpush1.bf16.xpose.msra.mxu0 0
    %564 = vmatprep.subr.bf16.mxu0 0
    %565 = vmatpush1.bf16.xpose.msra.mxu0 0
    %566 = vmatprep.subr.bf16.mxu0 0
    %567 = vmatpush1.bf16.xpose.msra.mxu0 0
    %568 = vmatprep.subr.bf16.mxu0 0
    %569 = vmatpush1.bf16.xpose.msra.mxu0 0
    %570 = vmatprep.subr.bf16.mxu0 0
    %571 = vmatpush1.bf16.xpose.msra.mxu0 0
    %572 = vmatprep.mubr.bf16.mxu0 0
    %573 = vmatmul.mubr.bf16.gmra.mrb[0].mxu0 %v535
    %v574 = vpop.f32.mrb[0].mxu0
    %v575 = vadd.f32 0.0, %v574
    %v576 = vpop.f32.mrb[0].mxu0
    %v577 = vpop.f32.mrb[0].mxu0
    %v578 = vpop.f32.mrb[0].mxu0
    %579 = vdwg.mxu0
    %v581 = vsel %vm395, %v343, 0
    %v584 = vsel %vm395, %v391, 0
    %586 = vmatprep.subr.bf16.mxu0 0
    %587 = vmatpush1.bf16.xpose.msra.mxu0 %v584
    %588 = vmatprep.subr.bf16.mxu0 0
    %589 = vmatpush1.bf16.xpose.msra.mxu0 0
    %590 = vmatprep.subr.bf16.mxu0 0
    %591 = vmatpush1.bf16.xpose.msra.mxu0 0
    %592 = vmatprep.subr.bf16.mxu0 0
    %593 = vmatpush1.bf16.xpose.msra.mxu0 0
    %594 = vmatprep.subr.bf16.mxu0 0
    %595 = vmatpush1.bf16.xpose.msra.mxu0 0
    %596 = vmatprep.subr.bf16.mxu0 0
    %597 = vmatpush1.bf16.xpose.msra.mxu0 0
    %598 = vmatprep.subr.bf16.mxu0 0
    %599 = vmatpush1.bf16.xpose.msra.mxu0 0
    %600 = vmatprep.subr.bf16.mxu0 0
    %601 = vmatpush1.bf16.xpose.msra.mxu0 0
    %602 = vmatprep.subr.bf16.mxu0 0
    %603 = vmatpush1.bf16.xpose.msra.mxu0 0
    %604 = vmatprep.subr.bf16.mxu0 0
    %605 = vmatpush1.bf16.xpose.msra.mxu0 0
    %606 = vmatprep.subr.bf16.mxu0 0
    %607 = vmatpush1.bf16.xpose.msra.mxu0 0
    %608 = vmatprep.subr.bf16.mxu0 0
    %609 = vmatpush1.bf16.xpose.msra.mxu0 0
    %610 = vmatprep.subr.bf16.mxu0 0
    %611 = vmatpush1.bf16.xpose.msra.mxu0 0
    %612 = vmatprep.subr.bf16.mxu0 0
    %613 = vmatpush1.bf16.xpose.msra.mxu0 0
    %614 = vmatprep.subr.bf16.mxu0 0
    %615 = vmatpush1.bf16.xpose.msra.mxu0 0
    %616 = vmatprep.subr.bf16.mxu0 0
    %617 = vmatpush1.bf16.xpose.msra.mxu0 0
    %618 = vmatprep.mubr.bf16.mxu0 0
    %619 = vmatmul.mubr.bf16.gmra.mrb[0].mxu0 %v581
    %v620 = vpop.f32.mrb[0].mxu0
    %v621 = vadd.f32 0.0, %v620
    %v622 = vpop.f32.mrb[0].mxu0
    %v623 = vpop.f32.mrb[0].mxu0
    %v624 = vpop.f32.mrb[0].mxu0
    %625 = vdwg.mxu0
    %v627 = vsel %vm395, %v344, 0
    %v630 = vsel %vm395, %v392, 0
    %632 = vmatprep.subr.bf16.mxu0 0
    %633 = vmatpush1.bf16.xpose.msra.mxu0 %v630
    %634 = vmatprep.subr.bf16.mxu0 0
    %635 = vmatpush1.bf16.xpose.msra.mxu0 0
    %636 = vmatprep.subr.bf16.mxu0 0
    %637 = vmatpush1.bf16.xpose.msra.mxu0 0
    %638 = vmatprep.subr.bf16.mxu0 0
    %639 = vmatpush1.bf16.xpose.msra.mxu0 0
    %640 = vmatprep.subr.bf16.mxu0 0
    %641 = vmatpush1.bf16.xpose.msra.mxu0 0
    %642 = vmatprep.subr.bf16.mxu0 0
    %643 = vmatpush1.bf16.xpose.msra.mxu0 0
    %644 = vmatprep.subr.bf16.mxu0 0
    %645 = vmatpush1.bf16.xpose.msra.mxu0 0
    %646 = vmatprep.subr.bf16.mxu0 0
    %647 = vmatpush1.bf16.xpose.msra.mxu0 0
    %648 = vmatprep.subr.bf16.mxu0 0
    %649 = vmatpush1.bf16.xpose.msra.mxu0 0
    %650 = vmatprep.subr.bf16.mxu0 0
    %651 = vmatpush1.bf16.xpose.msra.mxu0 0
    %652 = vmatprep.subr.bf16.mxu0 0
    %653 = vmatpush1.bf16.xpose.msra.mxu0 0
    %654 = vmatprep.subr.bf16.mxu0 0
    %655 = vmatpush1.bf16.xpose.msra.mxu0 0
    %656 = vmatprep.subr.bf16.mxu0 0
    %657 = vmatpush1.bf16.xpose.msra.mxu0 0
    %658 = vmatprep.subr.bf16.mxu0 0
    %659 = vmatpush1.bf16.xpose.msra.mxu0 0
    %660 = vmatprep.subr.bf16.mxu0 0
    %661 = vmatpush1.bf16.xpose.msra.mxu0 0
    %662 = vmatprep.subr.bf16.mxu0 0
    %663 = vmatpush1.bf16.xpose.msra.mxu0 0
    %664 = vmatprep.mubr.bf16.mxu0 0
    %665 = vmatmul.mubr.bf16.gmra.mrb[0].mxu0 %v627
    %v666 = vpop.f32.mrb[0].mxu0
    %v667 = vadd.f32 0.0, %v666
    %v668 = vpop.f32.mrb[0].mxu0
    %v669 = vpop.f32.mrb[0].mxu0
    %v670 = vpop.f32.mrb[0].mxu0
    %671 = vdwg.mxu0
    %v673 = vsel %vm395, %v345, 0
    %v676 = vsel %vm395, %v393, 0
    %678 = vmatprep.subr.bf16.mxu0 0
    %679 = vmatpush1.bf16.xpose.msra.mxu0 %v676
    %680 = vmatprep.subr.bf16.mxu0 0
    %681 = vmatpush1.bf16.xpose.msra.mxu0 0
    %682 = vmatprep.subr.bf16.mxu0 0
    %683 = vmatpush1.bf16.xpose.msra.mxu0 0
    %684 = vmatprep.subr.bf16.mxu0 0
    %685 = vmatpush1.bf16.xpose.msra.mxu0 0
    %686 = vmatprep.subr.bf16.mxu0 0
    %687 = vmatpush1.bf16.xpose.msra.mxu0 0
    %688 = vmatprep.subr.bf16.mxu0 0
    %689 = vmatpush1.bf16.xpose.msra.mxu0 0
    %690 = vmatprep.subr.bf16.mxu0 0
    %691 = vmatpush1.bf16.xpose.msra.mxu0 0
    %692 = vmatprep.subr.bf16.mxu0 0
    %693 = vmatpush1.bf16.xpose.msra.mxu0 0
    %694 = vmatprep.subr.bf16.mxu0 0
    %695 = vmatpush1.bf16.xpose.msra.mxu0 0
    %696 = vmatprep.subr.bf16.mxu0 0
    %697 = vmatpush1.bf16.xpose.msra.mxu0 0
    %698 = vmatprep.subr.bf16.mxu0 0
    %699 = vmatpush1.bf16.xpose.msra.mxu0 0
    %700 = vmatprep.subr.bf16.mxu0 0
    %701 = vmatpush1.bf16.xpose.msra.mxu0 0
    %702 = vmatprep.subr.bf16.mxu0 0
    %703 = vmatpush1.bf16.xpose.msra.mxu0 0
    %704 = vmatprep.subr.bf16.mxu0 0
    %705 = vmatpush1.bf16.xpose.msra.mxu0 0
    %706 = vmatprep.subr.bf16.mxu0 0
    %707 = vmatpush1.bf16.xpose.msra.mxu0 0
    %708 = vmatprep.subr.bf16.mxu0 0
    %709 = vmatpush1.bf16.xpose.msra.mxu0 0
    %710 = vmatprep.mubr.bf16.mxu0 0
    %711 = vmatmul.mubr.bf16.gmra.mrb[0].mxu0 %v673
    %v712 = vpop.f32.mrb[0].mxu0
    %v713 = vadd.f32 0.0, %v712
    %v714 = vpop.f32.mrb[0].mxu0
    %v715 = vpop.f32.mrb[0].mxu0
    %v716 = vpop.f32.mrb[0].mxu0
    %717 = vdwg.mxu0
    %v719 = vsel %vm395, %v346, 0
    %v722 = vsel %vm395, %v394, 0
    %724 = vmatprep.subr.bf16.mxu0 0
    %725 = vmatpush1.bf16.xpose.msra.mxu0 %v722
    %726 = vmatprep.subr.bf16.mxu0 0
    %727 = vmatpush1.bf16.xpose.msra.mxu0 0
    %728 = vmatprep.subr.bf16.mxu0 0
    %729 = vmatpush1.bf16.xpose.msra.mxu0 0
    %730 = vmatprep.subr.bf16.mxu0 0
    %731 = vmatpush1.bf16.xpose.msra.mxu0 0
    %732 = vmatprep.subr.bf16.mxu0 0
    %733 = vmatpush1.bf16.xpose.msra.mxu0 0
    %734 = vmatprep.subr.bf16.mxu0 0
    %735 = vmatpush1.bf16.xpose.msra.mxu0 0
    %736 = vmatprep.subr.bf16.mxu0 0
    %737 = vmatpush1.bf16.xpose.msra.mxu0 0
    %738 = vmatprep.subr.bf16.mxu0 0
    %739 = vmatpush1.bf16.xpose.msra.mxu0 0
    %740 = vmatprep.subr.bf16.mxu0 0
    %741 = vmatpush1.bf16.xpose.msra.mxu0 0
    %742 = vmatprep.subr.bf16.mxu0 0
    %743 = vmatpush1.bf16.xpose.msra.mxu0 0
    %744 = vmatprep.subr.bf16.mxu0 0
    %745 = vmatpush1.bf16.xpose.msra.mxu0 0
    %746 = vmatprep.subr.bf16.mxu0 0
    %747 = vmatpush1.bf16.xpose.msra.mxu0 0
    %748 = vmatprep.subr.bf16.mxu0 0
    %749 = vmatpush1.bf16.xpose.msra.mxu0 0
    %750 = vmatprep.subr.bf16.mxu0 0
    %751 = vmatpush1.bf16.xpose.msra.mxu0 0
    %752 = vmatprep.subr.bf16.mxu0 0
    %753 = vmatpush1.bf16.xpose.msra.mxu0 0
    %754 = vmatprep.subr.bf16.mxu0 0
    %755 = vmatpush1.bf16.xpose.msra.mxu0 0
    %756 = vmatprep.mubr.bf16.mxu0 0
    %757 = vmatmul.mubr.bf16.gmra.mrb[0].mxu0 %v719
    %v758 = vpop.f32.mrb[0].mxu0
    %v759 = vadd.f32 0.0, %v758
    %v760 = vpop.f32.mrb[0].mxu0
    %v761 = vpop.f32.mrb[0].mxu0
    %v762 = vpop.f32.mrb[0].mxu0
    %763 = vdwg.mxu0
    %v764 = vsel %vm395, %v437, -inf
    %765 = vmax.xlane.f32.xlu0 %v764
    %v766 = vpop.xlane.xlu0 %765
    %v767 = vsel %vm395, %v483, -inf
    %768 = vmax.xlane.f32.xlu0 %v767
    %v769 = vpop.xlane.xlu0 %768
    %v770 = vsel %vm395, %v529, -inf
    %771 = vmax.xlane.f32.xlu0 %v770
    %v772 = vpop.xlane.xlu0 %771
    %v773 = vsel %vm395, %v575, -inf
    %774 = vmax.xlane.f32.xlu0 %v773
    %v775 = vpop.xlane.xlu0 %774
    %v776 = vsel %vm395, %v621, -inf
    %777 = vmax.xlane.f32.xlu0 %v776
    %v778 = vpop.xlane.xlu0 %777
    %v779 = vsel %vm395, %v667, -inf
    %780 = vmax.xlane.f32.xlu0 %v779
    %v781 = vpop.xlane.xlu0 %780
    %v782 = vsel %vm395, %v713, -inf
    %783 = vmax.xlane.f32.xlu0 %v782
    %v784 = vpop.xlane.xlu0 %783
    %v785 = vsel %vm395, %v759, -inf
    %786 = vmax.xlane.f32.xlu0 %v785
    %v787 = vpop.xlane.xlu0 %786
    %v788 = vsub.f32 %v437, %v766
    %v789 = vsub.f32 %v483, %v769
    %v790 = vsub.f32 %v529, %v772
    %v791 = vsub.f32 %v575, %v775
    %v792 = vsub.f32 %v621, %v778
    %v793 = vsub.f32 %v667, %v781
    %v794 = vsub.f32 %v713, %v784
    %v795 = vsub.f32 %v759, %v787
    %v796 = vmul.f32 %v788, 1.442695
    %v797 = vpow.pop %v796
    %v798 = vmul.f32 %v789, 1.442695
    %v799 = vpow.pop %v798
    %v800 = vmul.f32 %v790, 1.442695
    %v801 = vpow.pop %v800
    %v802 = vmul.f32 %v791, 1.442695
    %v803 = vpow.pop %v802
    %v804 = vmul.f32 %v792, 1.442695
    %v805 = vpow.pop %v804
    %v806 = vmul.f32 %v793, 1.442695
    %v807 = vpow.pop %v806
    %v808 = vmul.f32 %v794, 1.442695
    %v809 = vpow.pop %v808
    %v810 = vmul.f32 %v795, 1.442695
    %v811 = vpow.pop %v810
    %v812 = vsel %vm395, %v797, 0.0
    %813 = vadd.xlane.f32.xlu0 %v812
    %v814 = vpop.xlane.xlu0 %813
    %v815 = vsel %vm395, %v799, 0.0
    %816 = vadd.xlane.f32.xlu0 %v815
    %v817 = vpop.xlane.xlu0 %816
    %v818 = vsel %vm395, %v801, 0.0
    %819 = vadd.xlane.f32.xlu0 %v818
    %v820 = vpop.xlane.xlu0 %819
    %v821 = vsel %vm395, %v803, 0.0
    %822 = vadd.xlane.f32.xlu0 %v821
    %v823 = vpop.xlane.xlu0 %822
    %v824 = vsel %vm395, %v805, 0.0
    %825 = vadd.xlane.f32.xlu0 %v824
    %v826 = vpop.xlane.xlu0 %825
    %v827 = vsel %vm395, %v807, 0.0
    %828 = vadd.xlane.f32.xlu0 %v827
    %v829 = vpop.xlane.xlu0 %828
    %v830 = vsel %vm395, %v809, 0.0
    %831 = vadd.xlane.f32.xlu0 %v830
    %v832 = vpop.xlane.xlu0 %831
    %v833 = vsel %vm395, %v811, 0.0
    %834 = vadd.xlane.f32.xlu0 %v833
    %v835 = vpop.xlane.xlu0 %834
    %v836 = vrcp.pop %v814
    %v837 = vrcp.pop %v817
    %v838 = vrcp.pop %v820
    %v839 = vrcp.pop %v823
    %v840 = vrcp.pop %v826
    %v841 = vrcp.pop %v829
    %v842 = vrcp.pop %v832
    %v843 = vrcp.pop %v835
    %v844 = vmul.f32 %v797, %v836
    %v845 = vmul.f32 %v799, %v837
    %v846 = vmul.f32 %v801, %v838
    %v847 = vmul.f32 %v803, %v839
    %v848 = vmul.f32 %v805, %v840
    %v849 = vmul.f32 %v807, %v841
    %v850 = vmul.f32 %v809, %v842
    %v851 = vmul.f32 %v811, %v843
    %vm852 = vcmask 130112
    %v853 = vsel %vm852, %v437, -inf
    %854 = vmax.xlane.f32.xlu0 %v853
    %v855 = vpop.xlane.xlu0 %854
    %v856 = vsel %vm852, %v483, -inf
    %857 = vmax.xlane.f32.xlu0 %v856
    %v858 = vpop.xlane.xlu0 %857
    %v859 = vsel %vm852, %v529, -inf
    %860 = vmax.xlane.f32.xlu0 %v859
    %v861 = vpop.xlane.xlu0 %860
    %v862 = vsel %vm852, %v575, -inf
    %863 = vmax.xlane.f32.xlu0 %v862
    %v864 = vpop.xlane.xlu0 %863
    %v865 = vsel %vm852, %v621, -inf
    %866 = vmax.xlane.f32.xlu0 %v865
    %v867 = vpop.xlane.xlu0 %866
    %v868 = vsel %vm852, %v667, -inf
    %869 = vmax.xlane.f32.xlu0 %v868
    %v870 = vpop.xlane.xlu0 %869
    %v871 = vsel %vm852, %v713, -inf
    %872 = vmax.xlane.f32.xlu0 %v871
    %v873 = vpop.xlane.xlu0 %872
    %v874 = vsel %vm852, %v759, -inf
    %875 = vmax.xlane.f32.xlu0 %v874
    %v876 = vpop.xlane.xlu0 %875
    %v877 = vsub.f32 %v437, %v855
    %v878 = vsub.f32 %v483, %v858
    %v879 = vsub.f32 %v529, %v861
    %v880 = vsub.f32 %v575, %v864
    %v881 = vsub.f32 %v621, %v867
    %v882 = vsub.f32 %v667, %v870
    %v883 = vsub.f32 %v713, %v873
    %v884 = vsub.f32 %v759, %v876
    %v885 = vmul.f32 %v877, 1.442695
    %v886 = vpow.pop %v885
    %v887 = vmul.f32 %v878, 1.442695
    %v888 = vpow.pop %v887
    %v889 = vmul.f32 %v879, 1.442695
    %v890 = vpow.pop %v889
    %v891 = vmul.f32 %v880, 1.442695
    %v892 = vpow.pop %v891
    %v893 = vmul.f32 %v881, 1.442695
    %v894 = vpow.pop %v893
    %v895 = vmul.f32 %v882, 1.442695
    %v896 = vpow.pop %v895
    %v897 = vmul.f32 %v883, 1.442695
    %v898 = vpow.pop %v897
    %v899 = vmul.f32 %v884, 1.442695
    %v900 = vpow.pop %v899
    %909 = vrot.lane.b32.xlu0 %v886, 120
    %v910 = vpop.permute.xlu0 %909
    %911 = vrot.lane.b32.xlu0 %v888, 120
    %v912 = vpop.permute.xlu0 %911
    %913 = vrot.lane.b32.xlu0 %v890, 120
    %v914 = vpop.permute.xlu0 %913
    %915 = vrot.lane.b32.xlu0 %v892, 120
    %v916 = vpop.permute.xlu0 %915
    %917 = vrot.lane.b32.xlu0 %v894, 120
    %v918 = vpop.permute.xlu0 %917
    %919 = vrot.lane.b32.xlu0 %v896, 120
    %v920 = vpop.permute.xlu0 %919
    %921 = vrot.lane.b32.xlu0 %v898, 120
    %v922 = vpop.permute.xlu0 %921
    %923 = vrot.lane.b32.xlu0 %v900, 120
    %v924 = vpop.permute.xlu0 %923
    %v933 = vsel %vm395, %v910, 0.0
    %934 = vadd.xlane.f32.xlu0 %v933
    %v935 = vpop.xlane.xlu0 %934
    %v936 = vsel %vm395, %v912, 0.0
    %937 = vadd.xlane.f32.xlu0 %v936
    %v938 = vpop.xlane.xlu0 %937
    %v939 = vsel %vm395, %v914, 0.0
    %940 = vadd.xlane.f32.xlu0 %v939
    %v941 = vpop.xlane.xlu0 %940
    %v942 = vsel %vm395, %v916, 0.0
    %943 = vadd.xlane.f32.xlu0 %v942
    %v944 = vpop.xlane.xlu0 %943
    %v945 = vsel %vm395, %v918, 0.0
    %946 = vadd.xlane.f32.xlu0 %v945
    %v947 = vpop.xlane.xlu0 %946
    %v948 = vsel %vm395, %v920, 0.0
    %949 = vadd.xlane.f32.xlu0 %v948
    %v950 = vpop.xlane.xlu0 %949
    %v951 = vsel %vm395, %v922, 0.0
    %952 = vadd.xlane.f32.xlu0 %v951
    %v953 = vpop.xlane.xlu0 %952
    %v954 = vsel %vm395, %v924, 0.0
    %955 = vadd.xlane.f32.xlu0 %v954
    %v956 = vpop.xlane.xlu0 %955
    %v957 = vrcp.pop %v935
    %v958 = vrcp.pop %v938
    %v959 = vrcp.pop %v941
    %v960 = vrcp.pop %v944
    %v961 = vrcp.pop %v947
    %v962 = vrcp.pop %v950
    %v963 = vrcp.pop %v953
    %v964 = vrcp.pop %v956
    %v965 = vmul.f32 %v886, %v957
    %v966 = vmul.f32 %v888, %v958
    %v967 = vmul.f32 %v890, %v959
    %v968 = vmul.f32 %v892, %v960
    %v969 = vmul.f32 %v894, %v961
    %v970 = vmul.f32 %v896, %v962
    %v971 = vmul.f32 %v898, %v963
    %v972 = vmul.f32 %v900, %v964
    %v973 = vsel %vm395, %v844, %v965
    %v974 = vsel %vm395, %v845, %v966
    %v975 = vsel %vm395, %v846, %v967
    %v976 = vsel %vm395, %v847, %v968
    %v977 = vsel %vm395, %v848, %v969
    %v978 = vsel %vm395, %v849, %v970
    %v979 = vsel %vm395, %v850, %v971
    %v980 = vsel %vm395, %v851, %v972
    %v981 = vpack.c.bf16 %v973, %v973
    %v982 = vpack.c.bf16 %v974, %v974
    %v983 = vpack.c.bf16 %v975, %v975
    %v984 = vpack.c.bf16 %v976, %v976
    %v985 = vpack.c.bf16 %v977, %v977
    %v986 = vpack.c.bf16 %v978, %v978
    %v987 = vpack.c.bf16 %v979, %v979
    %v988 = vpack.c.bf16 %v980, %v980
    %990 = vrot.lane.b32.xlu0 %v387, 96
    %v991 = vpop.permute.xlu0 %990
    %vm993 = vcmask 130048
    %v995 = vsel %vm993, %v981, 0
    %997 = vmatprep.subr.bf16.mxu0 0
    %998 = vmatpush1.bf16.msra.mxu0 %v991
    %999 = vmatprep.subr.bf16.mxu0 0
    %1000 = vmatpush1.bf16.msra.mxu0 0
    %1001 = vmatprep.subr.bf16.mxu0 0
    %1002 = vmatpush1.bf16.msra.mxu0 0
    %1003 = vmatprep.subr.bf16.mxu0 0
    %1004 = vmatpush1.bf16.msra.mxu0 0
    %1005 = vmatprep.subr.bf16.mxu0 0
    %1006 = vmatpush1.bf16.msra.mxu0 0
    %1007 = vmatprep.subr.bf16.mxu0 0
    %1008 = vmatpush1.bf16.msra.mxu0 0
    %1009 = vmatprep.subr.bf16.mxu0 0
    %1010 = vmatpush1.bf16.msra.mxu0 0
    %1011 = vmatprep.subr.bf16.mxu0 0
    %1012 = vmatpush1.bf16.msra.mxu0 0
    %1013 = vmatprep.subr.bf16.mxu0 0
    %1014 = vmatpush1.bf16.msra.mxu0 0
    %1015 = vmatprep.subr.bf16.mxu0 0
    %1016 = vmatpush1.bf16.msra.mxu0 0
    %1017 = vmatprep.subr.bf16.mxu0 0
    %1018 = vmatpush1.bf16.msra.mxu0 0
    %1019 = vmatprep.subr.bf16.mxu0 0
    %1020 = vmatpush1.bf16.msra.mxu0 0
    %1021 = vmatprep.subr.bf16.mxu0 0
    %1022 = vmatpush1.bf16.msra.mxu0 0
    %1023 = vmatprep.subr.bf16.mxu0 0
    %1024 = vmatpush1.bf16.msra.mxu0 0
    %1025 = vmatprep.subr.bf16.mxu0 0
    %1026 = vmatpush1.bf16.msra.mxu0 0
    %1027 = vmatprep.subr.bf16.mxu0 0
    %1028 = vmatpush1.bf16.msra.mxu0 0
    %1029 = vmatprep.mubr.bf16.mxu0 0
    %1030 = vmatmul.mubr.bf16.gmra.mrb[0].mxu0 %v995
    %v1031 = vpop.f32.mrb[0].mxu0
    %v1032 = vadd.f32 0.0, %v1031
    %v1033 = vpop.f32.mrb[0].mxu0
    %v1034 = vpop.f32.mrb[0].mxu0
    %v1035 = vpop.f32.mrb[0].mxu0
    %1036 = vdwg.mxu0
    %1038 = vrot.lane.b32.xlu0 %v388, 96
    %v1039 = vpop.permute.xlu0 %1038
    %v1042 = vsel %vm993, %v982, 0
    %1044 = vmatprep.subr.bf16.mxu0 0
    %1045 = vmatpush1.bf16.msra.mxu0 %v1039
    %1046 = vmatprep.subr.bf16.mxu0 0
    %1047 = vmatpush1.bf16.msra.mxu0 0
    %1048 = vmatprep.subr.bf16.mxu0 0
    %1049 = vmatpush1.bf16.msra.mxu0 0
    %1050 = vmatprep.subr.bf16.mxu0 0
    %1051 = vmatpush1.bf16.msra.mxu0 0
    %1052 = vmatprep.subr.bf16.mxu0 0
    %1053 = vmatpush1.bf16.msra.mxu0 0
    %1054 = vmatprep.subr.bf16.mxu0 0
    %1055 = vmatpush1.bf16.msra.mxu0 0
    %1056 = vmatprep.subr.bf16.mxu0 0
    %1057 = vmatpush1.bf16.msra.mxu0 0
    %1058 = vmatprep.subr.bf16.mxu0 0
    %1059 = vmatpush1.bf16.msra.mxu0 0
    %1060 = vmatprep.subr.bf16.mxu0 0
    %1061 = vmatpush1.bf16.msra.mxu0 0
    %1062 = vmatprep.subr.bf16.mxu0 0
    %1063 = vmatpush1.bf16.msra.mxu0 0
    %1064 = vmatprep.subr.bf16.mxu0 0
    %1065 = vmatpush1.bf16.msra.mxu0 0
    %1066 = vmatprep.subr.bf16.mxu0 0
    %1067 = vmatpush1.bf16.msra.mxu0 0
    %1068 = vmatprep.subr.bf16.mxu0 0
    %1069 = vmatpush1.bf16.msra.mxu0 0
    %1070 = vmatprep.subr.bf16.mxu0 0
    %1071 = vmatpush1.bf16.msra.mxu0 0
    %1072 = vmatprep.subr.bf16.mxu0 0
    %1073 = vmatpush1.bf16.msra.mxu0 0
    %1074 = vmatprep.subr.bf16.mxu0 0
    %1075 = vmatpush1.bf16.msra.mxu0 0
    %1076 = vmatprep.mubr.bf16.mxu0 0
    %1077 = vmatmul.mubr.bf16.gmra.mrb[0].mxu0 %v1042
    %v1078 = vpop.f32.mrb[0].mxu0
    %v1079 = vadd.f32 0.0, %v1078
    %v1080 = vpop.f32.mrb[0].mxu0
    %v1081 = vpop.f32.mrb[0].mxu0
    %v1082 = vpop.f32.mrb[0].mxu0
    %1083 = vdwg.mxu0
    %1085 = vrot.lane.b32.xlu0 %v389, 96
    %v1086 = vpop.permute.xlu0 %1085
    %v1089 = vsel %vm993, %v983, 0
    %1091 = vmatprep.subr.bf16.mxu0 0
    %1092 = vmatpush1.bf16.msra.mxu0 %v1086
    %1093 = vmatprep.subr.bf16.mxu0 0
    %1094 = vmatpush1.bf16.msra.mxu0 0
    %1095 = vmatprep.subr.bf16.mxu0 0
    %1096 = vmatpush1.bf16.msra.mxu0 0
    %1097 = vmatprep.subr.bf16.mxu0 0
    %1098 = vmatpush1.bf16.msra.mxu0 0
    %1099 = vmatprep.subr.bf16.mxu0 0
    %1100 = vmatpush1.bf16.msra.mxu0 0
    %1101 = vmatprep.subr.bf16.mxu0 0
    %1102 = vmatpush1.bf16.msra.mxu0 0
    %1103 = vmatprep.subr.bf16.mxu0 0
    %1104 = vmatpush1.bf16.msra.mxu0 0
    %1105 = vmatprep.subr.bf16.mxu0 0
    %1106 = vmatpush1.bf16.msra.mxu0 0
    %1107 = vmatprep.subr.bf16.mxu0 0
    %1108 = vmatpush1.bf16.msra.mxu0 0
    %1109 = vmatprep.subr.bf16.mxu0 0
    %1110 = vmatpush1.bf16.msra.mxu0 0
    %1111 = vmatprep.subr.bf16.mxu0 0
    %1112 = vmatpush1.bf16.msra.mxu0 0
    %1113 = vmatprep.subr.bf16.mxu0 0
    %1114 = vmatpush1.bf16.msra.mxu0 0
    %1115 = vmatprep.subr.bf16.mxu0 0
    %1116 = vmatpush1.bf16.msra.mxu0 0
    %1117 = vmatprep.subr.bf16.mxu0 0
    %1118 = vmatpush1.bf16.msra.mxu0 0
    %1119 = vmatprep.subr.bf16.mxu0 0
    %1120 = vmatpush1.bf16.msra.mxu0 0
    %1121 = vmatprep.subr.bf16.mxu0 0
    %1122 = vmatpush1.bf16.msra.mxu0 0
    %1123 = vmatprep.mubr.bf16.mxu0 0
    %1124 = vmatmul.mubr.bf16.gmra.mrb[0].mxu0 %v1089
    %v1125 = vpop.f32.mrb[0].mxu0
    %v1126 = vadd.f32 0.0, %v1125
    %v1127 = vpop.f32.mrb[0].mxu0
    %v1128 = vpop.f32.mrb[0].mxu0
    %v1129 = vpop.f32.mrb[0].mxu0
    %1130 = vdwg.mxu0
    %1132 = vrot.lane.b32.xlu0 %v390, 96
    %v1133 = vpop.permute.xlu0 %1132
    %v1136 = vsel %vm993, %v984, 0
    %1138 = vmatprep.subr.bf16.mxu0 0
    %1139 = vmatpush1.bf16.msra.mxu0 %v1133
    %1140 = vmatprep.subr.bf16.mxu0 0
    %1141 = vmatpush1.bf16.msra.mxu0 0
    %1142 = vmatprep.subr.bf16.mxu0 0
    %1143 = vmatpush1.bf16.msra.mxu0 0
    %1144 = vmatprep.subr.bf16.mxu0 0
    %1145 = vmatpush1.bf16.msra.mxu0 0
    %1146 = vmatprep.subr.bf16.mxu0 0
    %1147 = vmatpush1.bf16.msra.mxu0 0
    %1148 = vmatprep.subr.bf16.mxu0 0
    %1149 = vmatpush1.bf16.msra.mxu0 0
    %1150 = vmatprep.subr.bf16.mxu0 0
    %1151 = vmatpush1.bf16.msra.mxu0 0
    %1152 = vmatprep.subr.bf16.mxu0 0
    %1153 = vmatpush1.bf16.msra.mxu0 0
    %1154 = vmatprep.subr.bf16.mxu0 0
    %1155 = vmatpush1.bf16.msra.mxu0 0
    %1156 = vmatprep.subr.bf16.mxu0 0
    %1157 = vmatpush1.bf16.msra.mxu0 0
    %1158 = vmatprep.subr.bf16.mxu0 0
    %1159 = vmatpush1.bf16.msra.mxu0 0
    %1160 = vmatprep.subr.bf16.mxu0 0
    %1161 = vmatpush1.bf16.msra.mxu0 0
    %1162 = vmatprep.subr.bf16.mxu0 0
    %1163 = vmatpush1.bf16.msra.mxu0 0
    %1164 = vmatprep.subr.bf16.mxu0 0
    %1165 = vmatpush1.bf16.msra.mxu0 0
    %1166 = vmatprep.subr.bf16.mxu0 0
    %1167 = vmatpush1.bf16.msra.mxu0 0
    %1168 = vmatprep.subr.bf16.mxu0 0
    %1169 = vmatpush1.bf16.msra.mxu0 0
    %1170 = vmatprep.mubr.bf16.mxu0 0
    %1171 = vmatmul.mubr.bf16.gmra.mrb[0].mxu0 %v1136
    %v1172 = vpop.f32.mrb[0].mxu0
    %v1173 = vadd.f32 0.0, %v1172
    %v1174 = vpop.f32.mrb[0].mxu0
    %v1175 = vpop.f32.mrb[0].mxu0
    %v1176 = vpop.f32.mrb[0].mxu0
    %1177 = vdwg.mxu0
    %1179 = vrot.lane.b32.xlu0 %v391, 96
    %v1180 = vpop.permute.xlu0 %1179
    %v1183 = vsel %vm993, %v985, 0
    %1185 = vmatprep.subr.bf16.mxu0 0
    %1186 = vmatpush1.bf16.msra.mxu0 %v1180
    %1187 = vmatprep.subr.bf16.mxu0 0
    %1188 = vmatpush1.bf16.msra.mxu0 0
    %1189 = vmatprep.subr.bf16.mxu0 0
    %1190 = vmatpush1.bf16.msra.mxu0 0
    %1191 = vmatprep.subr.bf16.mxu0 0
    %1192 = vmatpush1.bf16.msra.mxu0 0
    %1193 = vmatprep.subr.bf16.mxu0 0
    %1194 = vmatpush1.bf16.msra.mxu0 0
    %1195 = vmatprep.subr.bf16.mxu0 0
    %1196 = vmatpush1.bf16.msra.mxu0 0
    %1197 = vmatprep.subr.bf16.mxu0 0
    %1198 = vmatpush1.bf16.msra.mxu0 0
    %1199 = vmatprep.subr.bf16.mxu0 0
    %1200 = vmatpush1.bf16.msra.mxu0 0
    %1201 = vmatprep.subr.bf16.mxu0 0
    %1202 = vmatpush1.bf16.msra.mxu0 0
    %1203 = vmatprep.subr.bf16.mxu0 0
    %1204 = vmatpush1.bf16.msra.mxu0 0
    %1205 = vmatprep.subr.bf16.mxu0 0
    %1206 = vmatpush1.bf16.msra.mxu0 0
    %1207 = vmatprep.subr.bf16.mxu0 0
    %1208 = vmatpush1.bf16.msra.mxu0 0
    %1209 = vmatprep.subr.bf16.mxu0 0
    %1210 = vmatpush1.bf16.msra.mxu0 0
    %1211 = vmatprep.subr.bf16.mxu0 0
    %1212 = vmatpush1.bf16.msra.mxu0 0
    %1213 = vmatprep.subr.bf16.mxu0 0
    %1214 = vmatpush1.bf16.msra.mxu0 0
    %1215 = vmatprep.subr.bf16.mxu0 0
    %1216 = vmatpush1.bf16.msra.mxu0 0
    %1217 = vmatprep.mubr.bf16.mxu0 0
    %1218 = vmatmul.mubr.bf16.gmra.mrb[0].mxu0 %v1183
    %v1219 = vpop.f32.mrb[0].mxu0
    %v1220 = vadd.f32 0.0, %v1219
    %v1221 = vpop.f32.mrb[0].mxu0
    %v1222 = vpop.f32.mrb[0].mxu0
    %v1223 = vpop.f32.mrb[0].mxu0
    %1224 = vdwg.mxu0
    %1226 = vrot.lane.b32.xlu0 %v392, 96
    %v1227 = vpop.permute.xlu0 %1226
    %v1230 = vsel %vm993, %v986, 0
    %1232 = vmatprep.subr.bf16.mxu0 0
    %1233 = vmatpush1.bf16.msra.mxu0 %v1227
    %1234 = vmatprep.subr.bf16.mxu0 0
    %1235 = vmatpush1.bf16.msra.mxu0 0
    %1236 = vmatprep.subr.bf16.mxu0 0
    %1237 = vmatpush1.bf16.msra.mxu0 0
    %1238 = vmatprep.subr.bf16.mxu0 0
    %1239 = vmatpush1.bf16.msra.mxu0 0
    %1240 = vmatprep.subr.bf16.mxu0 0
    %1241 = vmatpush1.bf16.msra.mxu0 0
    %1242 = vmatprep.subr.bf16.mxu0 0
    %1243 = vmatpush1.bf16.msra.mxu0 0
    %1244 = vmatprep.subr.bf16.mxu0 0
    %1245 = vmatpush1.bf16.msra.mxu0 0
    %1246 = vmatprep.subr.bf16.mxu0 0
    %1247 = vmatpush1.bf16.msra.mxu0 0
    %1248 = vmatprep.subr.bf16.mxu0 0
    %1249 = vmatpush1.bf16.msra.mxu0 0
    %1250 = vmatprep.subr.bf16.mxu0 0
    %1251 = vmatpush1.bf16.msra.mxu0 0
    %1252 = vmatprep.subr.bf16.mxu0 0
    %1253 = vmatpush1.bf16.msra.mxu0 0
    %1254 = vmatprep.subr.bf16.mxu0 0
    %1255 = vmatpush1.bf16.msra.mxu0 0
    %1256 = vmatprep.subr.bf16.mxu0 0
    %1257 = vmatpush1.bf16.msra.mxu0 0
    %1258 = vmatprep.subr.bf16.mxu0 0
    %1259 = vmatpush1.bf16.msra.mxu0 0
    %1260 = vmatprep.subr.bf16.mxu0 0
    %1261 = vmatpush1.bf16.msra.mxu0 0
    %1262 = vmatprep.subr.bf16.mxu0 0
    %1263 = vmatpush1.bf16.msra.mxu0 0
    %1264 = vmatprep.mubr.bf16.mxu0 0
    %1265 = vmatmul.mubr.bf16.gmra.mrb[0].mxu0 %v1230
    %v1266 = vpop.f32.mrb[0].mxu0
    %v1267 = vadd.f32 0.0, %v1266
    %v1268 = vpop.f32.mrb[0].mxu0
    %v1269 = vpop.f32.mrb[0].mxu0
    %v1270 = vpop.f32.mrb[0].mxu0
    %1271 = vdwg.mxu0
    %1273 = vrot.lane.b32.xlu0 %v393, 96
    %v1274 = vpop.permute.xlu0 %1273
    %v1277 = vsel %vm993, %v987, 0
    %1279 = vmatprep.subr.bf16.mxu0 0
    %1280 = vmatpush1.bf16.msra.mxu0 %v1274
    %1281 = vmatprep.subr.bf16.mxu0 0
    %1282 = vmatpush1.bf16.msra.mxu0 0
    %1283 = vmatprep.subr.bf16.mxu0 0
    %1284 = vmatpush1.bf16.msra.mxu0 0
    %1285 = vmatprep.subr.bf16.mxu0 0
    %1286 = vmatpush1.bf16.msra.mxu0 0
    %1287 = vmatprep.subr.bf16.mxu0 0
    %1288 = vmatpush1.bf16.msra.mxu0 0
    %1289 = vmatprep.subr.bf16.mxu0 0
    %1290 = vmatpush1.bf16.msra.mxu0 0
    %1291 = vmatprep.subr.bf16.mxu0 0
    %1292 = vmatpush1.bf16.msra.mxu0 0
    %1293 = vmatprep.subr.bf16.mxu0 0
    %1294 = vmatpush1.bf16.msra.mxu0 0
    %1295 = vmatprep.subr.bf16.mxu0 0
    %1296 = vmatpush1.bf16.msra.mxu0 0
    %1297 = vmatprep.subr.bf16.mxu0 0
    %1298 = vmatpush1.bf16.msra.mxu0 0
    %1299 = vmatprep.subr.bf16.mxu0 0
    %1300 = vmatpush1.bf16.msra.mxu0 0
    %1301 = vmatprep.subr.bf16.mxu0 0
    %1302 = vmatpush1.bf16.msra.mxu0 0
    %1303 = vmatprep.subr.bf16.mxu0 0
    %1304 = vmatpush1.bf16.msra.mxu0 0
    %1305 = vmatprep.subr.bf16.mxu0 0
    %1306 = vmatpush1.bf16.msra.mxu0 0
    %1307 = vmatprep.subr.bf16.mxu0 0
    %1308 = vmatpush1.bf16.msra.mxu0 0
    %1309 = vmatprep.subr.bf16.mxu0 0
    %1310 = vmatpush1.bf16.msra.mxu0 0
    %1311 = vmatprep.mubr.bf16.mxu0 0
    %1312 = vmatmul.mubr.bf16.gmra.mrb[0].mxu0 %v1277
    %v1313 = vpop.f32.mrb[0].mxu0
    %v1314 = vadd.f32 0.0, %v1313
    %v1315 = vpop.f32.mrb[0].mxu0
    %v1316 = vpop.f32.mrb[0].mxu0
    %v1317 = vpop.f32.mrb[0].mxu0
    %1318 = vdwg.mxu0
    %1320 = vrot.lane.b32.xlu0 %v394, 96
    %v1321 = vpop.permute.xlu0 %1320
    %v1324 = vsel %vm993, %v988, 0
    %1326 = vmatprep.subr.bf16.mxu0 0
    %1327 = vmatpush1.bf16.msra.mxu0 %v1321
    %1328 = vmatprep.subr.bf16.mxu0 0
    %1329 = vmatpush1.bf16.msra.mxu0 0
    %1330 = vmatprep.subr.bf16.mxu0 0
    %1331 = vmatpush1.bf16.msra.mxu0 0
    %1332 = vmatprep.subr.bf16.mxu0 0
    %1333 = vmatpush1.bf16.msra.mxu0 0
    %1334 = vmatprep.subr.bf16.mxu0 0
    %1335 = vmatpush1.bf16.msra.mxu0 0
    %1336 = vmatprep.subr.bf16.mxu0 0
    %1337 = vmatpush1.bf16.msra.mxu0 0
    %1338 = vmatprep.subr.bf16.mxu0 0
    %1339 = vmatpush1.bf16.msra.mxu0 0
    %1340 = vmatprep.subr.bf16.mxu0 0
    %1341 = vmatpush1.bf16.msra.mxu0 0
    %1342 = vmatprep.subr.bf16.mxu0 0
    %1343 = vmatpush1.bf16.msra.mxu0 0
    %1344 = vmatprep.subr.bf16.mxu0 0
    %1345 = vmatpush1.bf16.msra.mxu0 0
    %1346 = vmatprep.subr.bf16.mxu0 0
    %1347 = vmatpush1.bf16.msra.mxu0 0
    %1348 = vmatprep.subr.bf16.mxu0 0
    %1349 = vmatpush1.bf16.msra.mxu0 0
    %1350 = vmatprep.subr.bf16.mxu0 0
    %1351 = vmatpush1.bf16.msra.mxu0 0
    %1352 = vmatprep.subr.bf16.mxu0 0
    %1353 = vmatpush1.bf16.msra.mxu0 0
    %1354 = vmatprep.subr.bf16.mxu0 0
    %1355 = vmatpush1.bf16.msra.mxu0 0
    %1356 = vmatprep.subr.bf16.mxu0 0
    %1357 = vmatpush1.bf16.msra.mxu0 0
    %1358 = vmatprep.mubr.bf16.mxu0 0
    %1359 = vmatmul.mubr.bf16.gmra.mrb[0].mxu0 %v1324
    %v1360 = vpop.f32.mrb[0].mxu0
    %v1361 = vadd.f32 0.0, %v1360
    %v1362 = vpop.f32.mrb[0].mxu0
    %v1363 = vpop.f32.mrb[0].mxu0
    %v1364 = vpop.f32.mrb[0].mxu0
    %1365 = vdwg.mxu0
    %1368 = vrot.lane.b32.xlu0 %v1126, 8
    %v1369 = vpop.permute.xlu0 %1368
    %1370 = vrot.lane.b32.xlu0 %v1173, 8
    %v1371 = vpop.permute.xlu0 %1370
    %1376 = vrot.lane.b32.xlu0 %v1220, 16
    %v1377 = vpop.permute.xlu0 %1376
    %1378 = vrot.lane.b32.xlu0 %v1267, 16
    %v1379 = vpop.permute.xlu0 %1378
    %1384 = vrot.lane.b32.xlu0 %v1314, 24
    %v1385 = vpop.permute.xlu0 %1384
    %1386 = vrot.lane.b32.xlu0 %v1361, 24
    %v1387 = vpop.permute.xlu0 %1386
    %v1390 = vsel %vm395, %v1032, %v1369
    %v1391 = vsel %vm395, %v1079, %v1371
    %v1392 = vsel %vm993, %v1390, %v1377
    %v1393 = vsel %vm993, %v1391, %v1379
    %vm1394 = vcmask 195584
    %v1395 = vsel %vm1394, %v1392, %v1385
    %v1396 = vsel %vm1394, %v1393, %v1387
    %v1397 = vpack.c.bf16 %v1396, %v1395
    %v1398 = vld [vmem:[#allocation13] sm:$0xf]
    %v1399 = vld [vmem:[#allocation13 + $0x4] sm:$0xf]
    %v1400 = vld [vmem:[#allocation13 + $0x8] sm:$0xf]
    %v1401 = vld [vmem:[#allocation13 + $0xc] sm:$0xf]
    %v1402 = vld [vmem:[%s8] sm:$0x1]
    %v1404 = vlaneseq
    %v1405 = vshrl.u32 %v1404, 7
    %v1406 = vsub.s32 0, %v1405
    %v1407 = vrot.slane %v1402, %v1406
    %v1413 = vunpack.c.l.b16 %v1398
    %v1414 = vunpack.c.l.b16 %v1399
    %v1415 = vunpack.c.l.b16 %v1400
    %v1416 = vunpack.c.l.b16 %v1401
    %v1417 = vpack.c.b16 %v1414, %v1413
    %v1418 = vpack.c.b16 %v1416, %v1415
    %v1422 = vsel %vm154, %v1397, 0
    %1424 = vmatprep.subr.bf16.mxu0 0
    %1425 = vmatpush1.bf16.msra.mxu0 %v1417
    %1426 = vmatprep.subr.bf16.mxu0 0
    %1427 = vmatpush1.bf16.msra.mxu0 %v1418
    %1428 = vmatprep.subr.bf16.mxu0 0
    %1429 = vmatpush1.bf16.msra.mxu0 0
    %1430 = vmatprep.subr.bf16.mxu0 0
    %1431 = vmatpush1.bf16.msra.mxu0 0
    %1432 = vmatprep.subr.bf16.mxu0 0
    %1433 = vmatpush1.bf16.msra.mxu0 0
    %1434 = vmatprep.subr.bf16.mxu0 0
    %1435 = vmatpush1.bf16.msra.mxu0 0
    %1436 = vmatprep.subr.bf16.mxu0 0
    %1437 = vmatpush1.bf16.msra.mxu0 0
    %1438 = vmatprep.subr.bf16.mxu0 0
    %1439 = vmatpush1.bf16.msra.mxu0 0
    %1440 = vmatprep.subr.bf16.mxu0 0
    %1441 = vmatpush1.bf16.msra.mxu0 0
    %1442 = vmatprep.subr.bf16.mxu0 0
    %1443 = vmatpush1.bf16.msra.mxu0 0
    %1444 = vmatprep.subr.bf16.mxu0 0
    %1445 = vmatpush1.bf16.msra.mxu0 0
    %1446 = vmatprep.subr.bf16.mxu0 0
    %1447 = vmatpush1.bf16.msra.mxu0 0
    %1448 = vmatprep.subr.bf16.mxu0 0
    %1449 = vmatpush1.bf16.msra.mxu0 0
    %1450 = vmatprep.subr.bf16.mxu0 0
    %1451 = vmatpush1.bf16.msra.mxu0 0
    %1452 = vmatprep.subr.bf16.mxu0 0
    %1453 = vmatpush1.bf16.msra.mxu0 0
    %1454 = vmatprep.subr.bf16.mxu0 0
    %1455 = vmatpush1.bf16.msra.mxu0 0
    %1456 = vmatprep.mubr.bf16.mxu0 0
    %1457 = vmatmul.mubr.bf16.gmra.mrb[0].mxu0 %v1422
    %v1458 = vpop.f32.mrb[0].mxu0
    %v1459 = vadd.f32 %v1407, %v1458
    %v1460 = vpop.f32.mrb[0].mxu0
    %v1461 = vpop.f32.mrb[0].mxu0
    %v1462 = vadd.f32 %v1407, %v1461
    %v1463 = vpop.f32.mrb[0].mxu0
    %1464 = vdwg.mxu0
    %v1465 = vld [vmem:[#allocation8] sm:$0xff]
    %v1466 = vld [vmem:[#allocation8 + $0x8] sm:$0xff]
    %v1467 = vadd.f32 %v1465, %v1459
    %v1468 = vadd.f32 %v1466, %v1462
    %1469 = vst.msk [vmem:[#allocation14] sm:$0xff] %vm154, %v1467
    %1470 = vst.msk [vmem:[#allocation14 + $0x8] sm:$0xff] %vm154, %v1468
    // Predicated region
    $region66: #{tpu_custom_call.1} parent=1 // pred_check
      _
    $region67: #{tpu_custom_call.1} parent=1 // pred_check_branch
      %1472 = sbr.rel (0) target = $region69
    $region68: #{tpu_custom_call.1} parent=1 // pred_region
      %s1474 = ssub.s32 256, 256
      %1475 = vsyncadd [#allocation4], %s1474
      %s1476 = sshll.u32 [#allocation14], 4
      %s1477 = int_to_ptr.vmem [resolvable:$true] %s1476
      %1482 = dma.vmem_to_hbm [thread:$0]  %s1477, 256, %s9, [#allocation4], 128, 128, 8
    $region69: #{tpu_custom_call.1} parent=1 // pred_fallthru
      _
    // Predicated region
    $region70: #{tpu_custom_call.1} parent=1 // pred_check
      _
    $region71: #{tpu_custom_call.1} parent=1 // pred_check_branch
      %1484 = sbr.rel (0) target = $region73
    $region72: #{tpu_custom_call.1} parent=1 // pred_region
      %1485 = dma.done [#allocation4], 256
    $region73: #{tpu_custom_call.1} parent=1 // pred_fallthru
      _
    %1486 = vsyncpa [#allocation3], 1
    %1487 = vsyncpa [#allocation6], 1
    %1488 = vsyncpa [#allocation9], 1
    %1489 = vsyncpa [#allocation12], 1
    %1490 = vsyncpa [#allocation4], 1

// kernel: tpu_custom_call.1
$region0: #{tpu_custom_call.1}
  #allocation0 [shape = 'u32[]', space=smem, size = 0x4, offset = 0x4, fixed_abs, tag = 'smem constant byte address 0x4 - core index']
  #allocation1 [shape = 'u32[144,128]{1,0:T(1,128)}', space=vmem, size = 0x12000, scoped, tag = 'internal scratch']
  %s0 = inlined_call_operand.hbm [shape: f32[2,8,32], index: 0, kind: input, shape index: {}]
  %s1 = inlined_call_operand.hbm [shape: f32[2,8,32], index: 1, kind: input, shape index: {}]
  %s2 = inlined_call_operand.hbm [shape: f32[2,8,32], index: 2, kind: input, shape index: {}]
  %s3 = inlined_call_operand.hbm [shape: f32[2,8,32], index: 3, kind: input, shape index: {}]
  %s4 = inlined_call_operand.hbm [shape: bf16[32,32], index: 4, kind: input, shape index: {}]
  %s5 = inlined_call_operand.vmem [shape: bf16[32,64], index: 5, kind: input, shape index: {}]
  %s6 = inlined_call_operand.hbm [shape: bf16[32,64], index: 6, kind: input, shape index: {}]
  %s7 = inlined_call_operand.hbm [shape: bf16[32,32], index: 7, kind: input, shape index: {}]
  %s8 = inlined_call_operand.vmem [shape: f32[1,32], index: 8, kind: input, shape index: {}]
  %s9 = inlined_call_operand.hbm [shape: f32[2,8,32], index: 9, kind: output, shape index: {}]
  %s10 = sld [smem:[#allocation0]]
  $region74: #{tpu_custom_call.1} parent=0
    _
  %s12 = ssub.s32 1, %s10
  %s13 = scalar_select 0, %s12, %s10
  $region1: #{tpu_custom_call.1} parent=0
    #allocation2 [shape = 'u8[8192]{0}', space=vmem, size = 0x2000, scoped, tag = 'input window, operand 0, single buffered']
    #allocation3 [shape = 's32[1]{0}', space=sflag, size = 0x4, scoped, tag = 'scoped memory for tpu_custom_call.1']
    #allocation4 [shape = 's32[1]{0}', space=sflag, size = 0x4, scoped, tag = 'scoped memory for tpu_custom_call.1']
    #allocation5 [shape = 'u8[8192]{0}', space=vmem, size = 0x2000, scoped, tag = 'input window, operand 1, single buffered']
    #allocation6 [shape = 's32[1]{0}', space=sflag, size = 0x4, scoped, tag = 'scoped memory for tpu_custom_call.1']
    #allocation7 [shape = 'u8[8192]{0}', space=vmem, size = 0x2000, scoped, tag = 'input window, operand 2, single buffered']
    #allocation8 [shape = 'u8[8192]{0}', space=vmem, size = 0x2000, scoped, tag = 'input window, operand 3, single buffered']
    #allocation9 [shape = 's32[1]{0}', space=sflag, size = 0x4, scoped, tag = 'scoped memory for tpu_custom_call.1']
    #allocation10 [shape = 'u8[8192]{0}', space=vmem, size = 0x2000, scoped, tag = 'input window, operand 4, single buffered']
    #allocation11 [shape = 'u8[8192]{0}', space=vmem, size = 0x2000, scoped, tag = 'input window, operand 6, single buffered']
    #allocation12 [shape = 's32[1]{0}', space=sflag, size = 0x4, scoped, tag = 'scoped memory for tpu_custom_call.1']
    #allocation13 [shape = 'u8[8192]{0}', space=vmem, size = 0x2000, scoped, tag = 'input window, operand 7, single buffered']
    #allocation14 [shape = 'u8[8192]{0}', space=vmem, size = 0x2000, scoped, tag = 'output window, operand 0, single buffered']
    %14 = vsyncpa [#allocation3], 0
    %15 = vsyncpa [#allocation6], 0
    %16 = vsyncpa [#allocation9], 0
    %17 = vsyncpa [#allocation12], 0
    %18 = vsyncpa [#allocation4], 0
    // Predicated region
    $region2: #{tpu_custom_call.1} parent=1 // pred_check
      _
    $region3: #{tpu_custom_call.1} parent=1 // pred_check_branch
      %20 = sbr.rel (0) target = $region5
    $region4: #{tpu_custom_call.1} parent=1 // pred_region
      %s22 = ssub.s32 256, 256
      %23 = vsyncadd [#allocation3], %s22
      %s24 = sshll.u32 [#allocation2], 4
      %s25 = int_to_ptr.vmem [resolvable:$true] %s24
      %30 = dma.hbm_to_vmem [thread:$0]  %s0, 256, %s25, [#allocation3], 128, 128, 8
    $region5: #{tpu_custom_call.1} parent=1 // pred_fallthru
      _
    // Predicated region
    $region6: #{tpu_custom_call.1} parent=1 // pred_check
      _
    $region7: #{tpu_custom_call.1} parent=1 // pred_check_branch
      %32 = sbr.rel (0) target = $region9
    $region8: #{tpu_custom_call.1} parent=1 // pred_region
      %s34 = ssub.s32 256, 256
      %35 = vsyncadd [#allocation6], %s34
      %s36 = sshll.u32 [#allocation5], 4
      %s37 = int_to_ptr.vmem [resolvable:$true] %s36
      %42 = dma.hbm_to_vmem [thread:$0]  %s1, 256, %s37, [#allocation6], 128, 128, 8
    $region9: #{tpu_custom_call.1} parent=1 // pred_fallthru
      _
    // Predicated region
    $region10: #{tpu_custom_call.1} parent=1 // pred_check
      _
    $region11: #{tpu_custom_call.1} parent=1 // pred_check_branch
      %44 = sbr.rel (0) target = $region13
    $region12: #{tpu_custom_call.1} parent=1 // pred_region
      %s46 = ssub.s32 256, 256
      %47 = vsyncadd [#allocation6], %s46
      %s48 = sshll.u32 [#allocation7], 4
      %s49 = int_to_ptr.vmem [resolvable:$true] %s48
      %54 = dma.hbm_to_vmem [thread:$0]  %s2, 256, %s49, [#allocation6], 128, 128, 8
    $region13: #{tpu_custom_call.1} parent=1 // pred_fallthru
      _
    // Predicated region
    $region14: #{tpu_custom_call.1} parent=1 // pred_check
      _
    $region15: #{tpu_custom_call.1} parent=1 // pred_check_branch
      %56 = sbr.rel (0) target = $region17
    $region16: #{tpu_custom_call.1} parent=1 // pred_region
      %s58 = ssub.s32 256, 256
      %59 = vsyncadd [#allocation9], %s58
      %s60 = sshll.u32 [#allocation8], 4
      %s61 = int_to_ptr.vmem [resolvable:$true] %s60
      %66 = dma.hbm_to_vmem [thread:$0]  %s3, 256, %s61, [#allocation9], 128, 128, 8
    $region17: #{tpu_custom_call.1} parent=1 // pred_fallthru
      _
    // Predicated region
    $region18: #{tpu_custom_call.1} parent=1 // pred_check
      _
    $region19: #{tpu_custom_call.1} parent=1 // pred_check_branch
      %68 = sbr.rel (0) target = $region21
    $region20: #{tpu_custom_call.1} parent=1 // pred_region
      %s70 = ssub.s32 256, 256
      %71 = vsyncadd [#allocation9], %s70
      %s72 = sshll.u32 [#allocation10], 4
      %s73 = int_to_ptr.vmem [resolvable:$true] %s72
      %78 = dma.hbm_to_vmem [thread:$0]  %s4, 256, %s73, [#allocation9], 64, 64, 4
    $region21: #{tpu_custom_call.1} parent=1 // pred_fallthru
      _
    // Predicated region
    $region22: #{tpu_custom_call.1} parent=1 // pred_check
      _
    $region23: #{tpu_custom_call.1} parent=1 // pred_check_branch
      %80 = sbr.rel (0) target = $region25
    $region24: #{tpu_custom_call.1} parent=1 // pred_region
      _
    $region25: #{tpu_custom_call.1} parent=1 // pred_fallthru
      _
    // Predicated region
    $region26: #{tpu_custom_call.1} parent=1 // pred_check
      _
    $region27: #{tpu_custom_call.1} parent=1 // pred_check_branch
      %82 = sbr.rel (0) target = $region29
    $region28: #{tpu_custom_call.1} parent=1 // pred_region
      %s84 = ssub.s32 256, 256
      %85 = vsyncadd [#allocation12], %s84
      %s86 = sshll.u32 [#allocation11], 4
      %s87 = int_to_ptr.vmem [resolvable:$true] %s86
      %92 = dma.hbm_to_vmem [thread:$0]  %s6, 256, %s87, [#allocation12], 64, 64, 4
    $region29: #{tpu_custom_call.1} parent=1 // pred_fallthru
      _
    // Predicated region
    $region30: #{tpu_custom_call.1} parent=1 // pred_check
      _
    $region31: #{tpu_custom_call.1} parent=1 // pred_check_branch
      %94 = sbr.rel (0) target = $region33
    $region32: #{tpu_custom_call.1} parent=1 // pred_region
      %s96 = ssub.s32 256, 256
      %97 = vsyncadd [#allocation12], %s96
      %s98 = sshll.u32 [#allocation13], 4
      %s99 = int_to_ptr.vmem [resolvable:$true] %s98
      %104 = dma.hbm_to_vmem [thread:$0]  %s7, 256, %s99, [#allocation12], 64, 64, 4
    $region33: #{tpu_custom_call.1} parent=1 // pred_fallthru
      _
    // Predicated region
    $region34: #{tpu_custom_call.1} parent=1 // pred_check
      _
    $region35: #{tpu_custom_call.1} parent=1 // pred_check_branch
      %106 = sbr.rel (0) target = $region37
    $region36: #{tpu_custom_call.1} parent=1 // pred_region
      _
    $region37: #{tpu_custom_call.1} parent=1 // pred_fallthru
      _
    // Predicated region
    $region38: #{tpu_custom_call.1} parent=1 // pred_check
      _
    $region39: #{tpu_custom_call.1} parent=1 // pred_check_branch
      %108 = sbr.rel (0) target = $region41
    $region40: #{tpu_custom_call.1} parent=1 // pred_region
      %109 = dma.done [#allocation3], 256
    $region41: #{tpu_custom_call.1} parent=1 // pred_fallthru
      _
    // Predicated region
    $region42: #{tpu_custom_call.1} parent=1 // pred_check
      _
    $region43: #{tpu_custom_call.1} parent=1 // pred_check_branch
      %111 = sbr.rel (0) target = $region45
    $region44: #{tpu_custom_call.1} parent=1 // pred_region
      %112 = dma.done [#allocation6], 256
    $region45: #{tpu_custom_call.1} parent=1 // pred_fallthru
      _
    // Predicated region
    $region46: #{tpu_custom_call.1} parent=1 // pred_check
      _
    $region47: #{tpu_custom_call.1} parent=1 // pred_check_branch
      %114 = sbr.rel (0) target = $region49
    $region48: #{tpu_custom_call.1} parent=1 // pred_region
      %115 = dma.done [#allocation6], 256
    $region49: #{tpu_custom_call.1} parent=1 // pred_fallthru
      _
    // Predicated region
    $region50: #{tpu_custom_call.1} parent=1 // pred_check
      _
    $region51: #{tpu_custom_call.1} parent=1 // pred_check_branch
      %117 = sbr.rel (0) target = $region53
    $region52: #{tpu_custom_call.1} parent=1 // pred_region
      %118 = dma.done [#allocation9], 256
    $region53: #{tpu_custom_call.1} parent=1 // pred_fallthru
      _
    // Predicated region
    $region54: #{tpu_custom_call.1} parent=1 // pred_check
      _
    $region55: #{tpu_custom_call.1} parent=1 // pred_check_branch
      %120 = sbr.rel (0) target = $region57
    $region56: #{tpu_custom_call.1} parent=1 // pred_region
      %121 = dma.done [#allocation9], 256
    $region57: #{tpu_custom_call.1} parent=1 // pred_fallthru
      _
    // Predicated region
    $region58: #{tpu_custom_call.1} parent=1 // pred_check
      _
    $region59: #{tpu_custom_call.1} parent=1 // pred_check_branch
      %123 = sbr.rel (0) target = $region61
    $region60: #{tpu_custom_call.1} parent=1 // pred_region
      %124 = dma.done [#allocation12], 256
    $region61: #{tpu_custom_call.1} parent=1 // pred_fallthru
      _
    // Predicated region
    $region62: #{tpu_custom_call.1} parent=1 // pred_check
      _
    $region63: #{tpu_custom_call.1} parent=1 // pred_check_branch
      %126 = sbr.rel (0) target = $region65
    $region64: #{tpu_custom_call.1} parent=1 // pred_region
      %127 = dma.done [#allocation12], 256
    $region65: #{tpu_custom_call.1} parent=1 // pred_fallthru
      _
    %v129 = vld [vmem:[#allocation10] sm:$0xf]
    %v130 = vld [vmem:[#allocation10 + $0x4] sm:$0xf]
    %v131 = vld [vmem:[#allocation10 + $0x8] sm:$0xf]
    %v132 = vld [vmem:[#allocation10 + $0xc] sm:$0xf]
    %v133 = vld [vmem:[#allocation2] sm:$0xff]
    %v134 = vld [vmem:[#allocation2 + $0x8] sm:$0xff]
    %v135 = vpack.c.bf16 %v134, %v133
    %v136 = vld [vmem:[#allocation5] sm:$0xff]
    %v137 = vld [vmem:[#allocation5 + $0x8] sm:$0xff]
    %v138 = vpack.c.bf16 %v137, %v136
    %v139 = vld [vmem:[#allocation7] sm:$0xff]
    %v140 = vld [vmem:[#allocation7 + $0x8] sm:$0xff]
    %v141 = vpack.c.bf16 %v140, %v139
    %v146 = vunpack.c.l.b16 %v129
    %v147 = vunpack.c.l.b16 %v130
    %v148 = vunpack.c.l.b16 %v131
    %v149 = vunpack.c.l.b16 %v132
    %v150 = vpack.c.b16 %v147, %v146
    %v151 = vpack.c.b16 %v149, %v148
    %vm154 = vcmask 261120
    %v156 = vsel %vm154, %v135, 0
    %158 = vmatprep.subr.bf16.mxu0 0
    %159 = vmatpush1.bf16.msra.mxu0 %v150
    %160 = vmatprep.subr.bf16.mxu0 0
    %161 = vmatpush1.bf16.msra.mxu0 %v151
    %162 = vmatprep.subr.bf16.mxu0 0
    %163 = vmatpush1.bf16.msra.mxu0 0
    %164 = vmatprep.subr.bf16.mxu0 0
    %165 = vmatpush1.bf16.msra.mxu0 0
    %166 = vmatprep.subr.bf16.mxu0 0
    %167 = vmatpush1.bf16.msra.mxu0 0
    %168 = vmatprep.subr.bf16.mxu0 0
    %169 = vmatpush1.bf16.msra.mxu0 0
    %170 = vmatprep.subr.bf16.mxu0 0
    %171 = vmatpush1.bf16.msra.mxu0 0
    %172 = vmatprep.subr.bf16.mxu0 0
    %173 = vmatpush1.bf16.msra.mxu0 0
    %174 = vmatprep.subr.bf16.mxu0 0
    %175 = vmatpush1.bf16.msra.mxu0 0
    %176 = vmatprep.subr.bf16.mxu0 0
    %177 = vmatpush1.bf16.msra.mxu0 0
    %178 = vmatprep.subr.bf16.mxu0 0
    %179 = vmatpush1.bf16.msra.mxu0 0
    %180 = vmatprep.subr.bf16.mxu0 0
    %181 = vmatpush1.bf16.msra.mxu0 0
    %182 = vmatprep.subr.bf16.mxu0 0
    %183 = vmatpush1.bf16.msra.mxu0 0
    %184 = vmatprep.subr.bf16.mxu0 0
    %185 = vmatpush1.bf16.msra.mxu0 0
    %186 = vmatprep.subr.bf16.mxu0 0
    %187 = vmatpush1.bf16.msra.mxu0 0
    %188 = vmatprep.subr.bf16.mxu0 0
    %189 = vmatpush1.bf16.msra.mxu0 0
    %190 = vmatprep.mubr.bf16.mxu0 0
    %191 = vmatmul.mubr.bf16.gmra.mrb[0].mxu0 %v156
    %v192 = vpop.f32.mrb[0].mxu0
    %v193 = vadd.f32 0.0, %v192
    %v194 = vpop.f32.mrb[0].mxu0
    %v195 = vpop.f32.mrb[0].mxu0
    %v196 = vadd.f32 0.0, %v195
    %v197 = vpop.f32.mrb[0].mxu0
    %198 = vdwg.mxu0
    %v199 = vld [vmem:[%s5] sm:$0xf]
    %v200 = vld [vmem:[%s5 + $0x4] sm:$0xf]
    %v201 = vld [vmem:[%s5 + $0x8] sm:$0xf]
    %v202 = vld [vmem:[%s5 + $0xc] sm:$0xf]
    %v207 = vunpack.c.l.b16 %v199
    %v208 = vunpack.c.l.b16 %v200
    %v209 = vunpack.c.l.b16 %v201
    %v210 = vunpack.c.l.b16 %v202
    %v211 = vpack.c.b16 %v208, %v207
    %v212 = vpack.c.b16 %v210, %v209
    %v216 = vsel %vm154, %v138, 0
    %218 = vmatprep.subr.bf16.mxu0 0
    %219 = vmatpush1.bf16.msra.mxu0 %v211
    %220 = vmatprep.subr.bf16.mxu0 0
    %221 = vmatpush1.bf16.msra.mxu0 %v212
    %222 = vmatprep.subr.bf16.mxu0 0
    %223 = vmatpush1.bf16.msra.mxu0 0
    %224 = vmatprep.subr.bf16.mxu0 0
    %225 = vmatpush1.bf16.msra.mxu0 0
    %226 = vmatprep.subr.bf16.mxu0 0
    %227 = vmatpush1.bf16.msra.mxu0 0
    %228 = vmatprep.subr.bf16.mxu0 0
    %229 = vmatpush1.bf16.msra.mxu0 0
    %230 = vmatprep.subr.bf16.mxu0 0
    %231 = vmatpush1.bf16.msra.mxu0 0
    %232 = vmatprep.subr.bf16.mxu0 0
    %233 = vmatpush1.bf16.msra.mxu0 0
    %234 = vmatprep.subr.bf16.mxu0 0
    %235 = vmatpush1.bf16.msra.mxu0 0
    %236 = vmatprep.subr.bf16.mxu0 0
    %237 = vmatpush1.bf16.msra.mxu0 0
    %238 = vmatprep.subr.bf16.mxu0 0
    %239 = vmatpush1.bf16.msra.mxu0 0
    %240 = vmatprep.subr.bf16.mxu0 0
    %241 = vmatpush1.bf16.msra.mxu0 0
    %242 = vmatprep.subr.bf16.mxu0 0
    %243 = vmatpush1.bf16.msra.mxu0 0
    %244 = vmatprep.subr.bf16.mxu0 0
    %245 = vmatpush1.bf16.msra.mxu0 0
    %246 = vmatprep.subr.bf16.mxu0 0
    %247 = vmatpush1.bf16.msra.mxu0 0
    %248 = vmatprep.subr.bf16.mxu0 0
    %249 = vmatpush1.bf16.msra.mxu0 0
    %250 = vmatprep.mubr.bf16.mxu0 0
    %251 = vmatmul.mubr.bf16.gmra.mrb[0].mxu0 %v216
    %v252 = vpop.f32.mrb[0].mxu0
    %v253 = vadd.f32 0.0, %v252
    %v254 = vpop.f32.mrb[0].mxu0
    %v255 = vpop.f32.mrb[0].mxu0
    %v256 = vadd.f32 0.0, %v255
    %v257 = vpop.f32.mrb[0].mxu0
    %258 = vdwg.mxu0
    %v259 = vld [vmem:[#allocation11] sm:$0xf]
    %v260 = vld [vmem:[#allocation11 + $0x4] sm:$0xf]
    %v261 = vld [vmem:[#allocation11 + $0x8] sm:$0xf]
    %v262 = vld [vmem:[#allocation11 + $0xc] sm:$0xf]
    %v267 = vunpack.c.l.b16 %v259
    %v268 = vunpack.c.l.b16 %v260
    %v269 = vunpack.c.l.b16 %v261
    %v270 = vunpack.c.l.b16 %v262
    %v271 = vpack.c.b16 %v268, %v267
    %v272 = vpack.c.b16 %v270, %v269
    %v276 = vsel %vm154, %v141, 0
    %278 = vmatprep.subr.bf16.mxu0 0
    %279 = vmatpush1.bf16.msra.mxu0 %v271
    %280 = vmatprep.subr.bf16.mxu0 0
    %281 = vmatpush1.bf16.msra.mxu0 %v272
    %282 = vmatprep.subr.bf16.mxu0 0
    %283 = vmatpush1.bf16.msra.mxu0 0
    %284 = vmatprep.subr.bf16.mxu0 0
    %285 = vmatpush1.bf16.msra.mxu0 0
    %286 = vmatprep.subr.bf16.mxu0 0
    %287 = vmatpush1.bf16.msra.mxu0 0
    %288 = vmatprep.subr.bf16.mxu0 0
    %289 = vmatpush1.bf16.msra.mxu0 0
    %290 = vmatprep.subr.bf16.mxu0 0
    %291 = vmatpush1.bf16.msra.mxu0 0
    %292 = vmatprep.subr.bf16.mxu0 0
    %293 = vmatpush1.bf16.msra.mxu0 0
    %294 = vmatprep.subr.bf16.mxu0 0
    %295 = vmatpush1.bf16.msra.mxu0 0
    %296 = vmatprep.subr.bf16.mxu0 0
    %297 = vmatpush1.bf16.msra.mxu0 0
    %298 = vmatprep.subr.bf16.mxu0 0
    %299 = vmatpush1.bf16.msra.mxu0 0
    %300 = vmatprep.subr.bf16.mxu0 0
    %301 = vmatpush1.bf16.msra.mxu0 0
    %302 = vmatprep.subr.bf16.mxu0 0
    %303 = vmatpush1.bf16.msra.mxu0 0
    %304 = vmatprep.subr.bf16.mxu0 0
    %305 = vmatpush1.bf16.msra.mxu0 0
    %306 = vmatprep.subr.bf16.mxu0 0
    %307 = vmatpush1.bf16.msra.mxu0 0
    %308 = vmatprep.subr.bf16.mxu0 0
    %309 = vmatpush1.bf16.msra.mxu0 0
    %310 = vmatprep.mubr.bf16.mxu0 0
    %311 = vmatmul.mubr.bf16.gmra.mrb[0].mxu0 %v276
    %v312 = vpop.f32.mrb[0].mxu0
    %v313 = vadd.f32 0.0, %v312
    %v314 = vpop.f32.mrb[0].mxu0
    %v315 = vpop.f32.mrb[0].mxu0
    %v316 = vadd.f32 0.0, %v315
    %v317 = vpop.f32.mrb[0].mxu0
    %318 = vdwg.mxu0
    %321 = vrot.lane.b32.xlu0 %v193, 120
    %v322 = vpop.permute.xlu0 %321
    %323 = vrot.lane.b32.xlu0 %v196, 120
    %v324 = vpop.permute.xlu0 %323
    %327 = vrot.lane.b32.xlu0 %v193, 112
    %v328 = vpop.permute.xlu0 %327
    %329 = vrot.lane.b32.xlu0 %v196, 112
    %v330 = vpop.permute.xlu0 %329
    %333 = vrot.lane.b32.xlu0 %v193, 104
    %v334 = vpop.permute.xlu0 %333
    %335 = vrot.lane.b32.xlu0 %v196, 104
    %v336 = vpop.permute.xlu0 %335
    %v339 = vpack.c.bf16 %v193, %v193
    %v340 = vpack.c.bf16 %v196, %v196
    %v341 = vpack.c.bf16 %v322, %v322
    %v342 = vpack.c.bf16 %v324, %v324
    %v343 = vpack.c.bf16 %v328, %v328
    %v344 = vpack.c.bf16 %v330, %v330
    %v345 = vpack.c.bf16 %v334, %v334
    %v346 = vpack.c.bf16 %v336, %v336
    %349 = vrot.lane.b32.xlu0 %v253, 120
    %v350 = vpop.permute.xlu0 %349
    %351 = vrot.lane.b32.xlu0 %v256, 120
    %v352 = vpop.permute.xlu0 %351
    %355 = vrot.lane.b32.xlu0 %v253, 112
    %v356 = vpop.permute.xlu0 %355
    %357 = vrot.lane.b32.xlu0 %v256, 112
    %v358 = vpop.permute.xlu0 %357
    %361 = vrot.lane.b32.xlu0 %v253, 104
    %v362 = vpop.permute.xlu0 %361
    %363 = vrot.lane.b32.xlu0 %v256, 104
    %v364 = vpop.permute.xlu0 %363
    %369 = vrot.lane.b32.xlu0 %v313, 120
    %v370 = vpop.permute.xlu0 %369
    %371 = vrot.lane.b32.xlu0 %v316, 120
    %v372 = vpop.permute.xlu0 %371
    %375 = vrot.lane.b32.xlu0 %v313, 112
    %v376 = vpop.permute.xlu0 %375
    %377 = vrot.lane.b32.xlu0 %v316, 112
    %v378 = vpop.permute.xlu0 %377
    %381 = vrot.lane.b32.xlu0 %v313, 104
    %v382 = vpop.permute.xlu0 %381
    %383 = vrot.lane.b32.xlu0 %v316, 104
    %v384 = vpop.permute.xlu0 %383
    %v387 = vpack.c.bf16 %v313, %v253
    %v388 = vpack.c.bf16 %v316, %v256
    %v389 = vpack.c.bf16 %v370, %v350
    %v390 = vpack.c.bf16 %v372, %v352
    %v391 = vpack.c.bf16 %v376, %v356
    %v392 = vpack.c.bf16 %v378, %v358
    %v393 = vpack.c.bf16 %v382, %v362
    %v394 = vpack.c.bf16 %v384, %v364
    %vm395 = vcmask 64512
    %v397 = vsel %vm395, %v339, 0
    %v400 = vsel %vm395, %v387, 0
    %402 = vmatprep.subr.bf16.mxu0 0
    %403 = vmatpush1.bf16.xpose.msra.mxu0 %v400
    %404 = vmatprep.subr.bf16.mxu0 0
    %405 = vmatpush1.bf16.xpose.msra.mxu0 0
    %406 = vmatprep.subr.bf16.mxu0 0
    %407 = vmatpush1.bf16.xpose.msra.mxu0 0
    %408 = vmatprep.subr.bf16.mxu0 0
    %409 = vmatpush1.bf16.xpose.msra.mxu0 0
    %410 = vmatprep.subr.bf16.mxu0 0
    %411 = vmatpush1.bf16.xpose.msra.mxu0 0
    %412 = vmatprep.subr.bf16.mxu0 0
    %413 = vmatpush1.bf16.xpose.msra.mxu0 0
    %414 = vmatprep.subr.bf16.mxu0 0
    %415 = vmatpush1.bf16.xpose.msra.mxu0 0
    %416 = vmatprep.subr.bf16.mxu0 0
    %417 = vmatpush1.bf16.xpose.msra.mxu0 0
    %418 = vmatprep.subr.bf16.mxu0 0
    %419 = vmatpush1.bf16.xpose.msra.mxu0 0
    %420 = vmatprep.subr.bf16.mxu0 0
    %421 = vmatpush1.bf16.xpose.msra.mxu0 0
    %422 = vmatprep.subr.bf16.mxu0 0
    %423 = vmatpush1.bf16.xpose.msra.mxu0 0
    %424 = vmatprep.subr.bf16.mxu0 0
    %425 = vmatpush1.bf16.xpose.msra.mxu0 0
    %426 = vmatprep.subr.bf16.mxu0 0
    %427 = vmatpush1.bf16.xpose.msra.mxu0 0
    %428 = vmatprep.subr.bf16.mxu0 0
    %429 = vmatpush1.bf16.xpose.msra.mxu0 0
    %430 = vmatprep.subr.bf16.mxu0 0
    %431 = vmatpush1.bf16.xpose.msra.mxu0 0
    %432 = vmatprep.subr.bf16.mxu0 0
    %433 = vmatpush1.bf16.xpose.msra.mxu0 0
    %434 = vmatprep.mubr.bf16.mxu0 0
    %435 = vmatmul.mubr.bf16.gmra.mrb[0].mxu0 %v397
    %v436 = vpop.f32.mrb[0].mxu0
    %v437 = vadd.f32 0.0, %v436
    %v438 = vpop.f32.mrb[0].mxu0
    %v439 = vpop.f32.mrb[0].mxu0
    %v440 = vpop.f32.mrb[0].mxu0
    %441 = vdwg.mxu0
    %v443 = vsel %vm395, %v340, 0
    %v446 = vsel %vm395, %v388, 0
    %448 = vmatprep.subr.bf16.mxu0 0
    %449 = vmatpush1.bf16.xpose.msra.mxu0 %v446
    %450 = vmatprep.subr.bf16.mxu0 0
    %451 = vmatpush1.bf16.xpose.msra.mxu0 0
    %452 = vmatprep.subr.bf16.mxu0 0
    %453 = vmatpush1.bf16.xpose.msra.mxu0 0
    %454 = vmatprep.subr.bf16.mxu0 0
    %455 = vmatpush1.bf16.xpose.msra.mxu0 0
    %456 = vmatprep.subr.bf16.mxu0 0
    %457 = vmatpush1.bf16.xpose.msra.mxu0 0
    %458 = vmatprep.subr.bf16.mxu0 0
    %459 = vmatpush1.bf16.xpose.msra.mxu0 0
    %460 = vmatprep.subr.bf16.mxu0 0
    %461 = vmatpush1.bf16.xpose.msra.mxu0 0
    %462 = vmatprep.subr.bf16.mxu0 0
    %463 = vmatpush1.bf16.xpose.msra.mxu0 0
    %464 = vmatprep.subr.bf16.mxu0 0
    %465 = vmatpush1.bf16.xpose.msra.mxu0 0
    %466 = vmatprep.subr.bf16.mxu0 0
    %467 = vmatpush1.bf16.xpose.msra.mxu0 0
    %468 = vmatprep.subr.bf16.mxu0 0
    %469 = vmatpush1.bf16.xpose.msra.mxu0 0
    %470 = vmatprep.subr.bf16.mxu0 0
    %471 = vmatpush1.bf16.xpose.msra.mxu0 0
    %472 = vmatprep.subr.bf16.mxu0 0
    %473 = vmatpush1.bf16.xpose.msra.mxu0 0
    %474 = vmatprep.subr.bf16.mxu0 0
    %475 = vmatpush1.bf16.xpose.msra.mxu0 0
    %476 = vmatprep.subr.bf16.mxu0 0
    %477 = vmatpush1.bf16.xpose.msra.mxu0 0
    %478 = vmatprep.subr.bf16.mxu0 0
    %479 = vmatpush1.bf16.xpose.msra.mxu0 0
    %480 = vmatprep.mubr.bf16.mxu0 0
    %481 = vmatmul.mubr.bf16.gmra.mrb[0].mxu0 %v443
    %v482 = vpop.f32.mrb[0].mxu0
    %v483 = vadd.f32 0.0, %v482
    %v484 = vpop.f32.mrb[0].mxu0
    %v485 = vpop.f32.mrb[0].mxu0
    %v486 = vpop.f32.mrb[0].mxu0
    %487 = vdwg.mxu0
    %v489 = vsel %vm395, %v341, 0
    %v492 = vsel %vm395, %v389, 0
    %494 = vmatprep.subr.bf16.mxu0 0
    %495 = vmatpush1.bf16.xpose.msra.mxu0 %v492
    %496 = vmatprep.subr.bf16.mxu0 0
    %497 = vmatpush1.bf16.xpose.msra.mxu0 0
    %498 = vmatprep.subr.bf16.mxu0 0
    %499 = vmatpush1.bf16.xpose.msra.mxu0 0
    %500 = vmatprep.subr.bf16.mxu0 0
    %501 = vmatpush1.bf16.xpose.msra.mxu0 0
    %502 = vmatprep.subr.bf16.mxu0 0
    %503 = vmatpush1.bf16.xpose.msra.mxu0 0
    %504 = vmatprep.subr.bf16.mxu0 0
    %505 = vmatpush1.bf16.xpose.msra.mxu0 0
    %506 = vmatprep.subr.bf16.mxu0 0
    %507 = vmatpush1.bf16.xpose.msra.mxu0 0
    %508 = vmatprep.subr.bf16.mxu0 0
    %509 = vmatpush1.bf16.xpose.msra.mxu0 0
    %510 = vmatprep.subr.bf16.mxu0 0
    %511 = vmatpush1.bf16.xpose.msra.mxu0 0
    %512 = vmatprep.subr.bf16.mxu0 0
    %513 = vmatpush1.bf16.xpose.msra.mxu0 0
    %514 = vmatprep.subr.bf16.mxu0 0
    %515 = vmatpush1.bf16.xpose.msra.mxu0 0
    %516 = vmatprep.subr.bf16.mxu0 0
    %517 = vmatpush1.bf16.xpose.msra.mxu0 0
    %518 = vmatprep.subr.bf16.mxu0 0
    %519 = vmatpush1.bf16.xpose.msra.mxu0 0
    %520 = vmatprep.subr.bf16.mxu0 0
    %521 = vmatpush1.bf16.xpose.msra.mxu0 0
    %522 = vmatprep.subr.bf16.mxu0 0
    %523 = vmatpush1.bf16.xpose.msra.mxu0 0
    %524 = vmatprep.subr.bf16.mxu0 0
    %525 = vmatpush1.bf16.xpose.msra.mxu0 0
    %526 = vmatprep.mubr.bf16.mxu0 0
    %527 = vmatmul.mubr.bf16.gmra.mrb[0].mxu0 %v489
    %v528 = vpop.f32.mrb[0].mxu0
    %v529 = vadd.f32 0.0, %v528
    %v530 = vpop.f32.mrb[0].mxu0
    %v531 = vpop.f32.mrb[0].mxu0
    %v532 = vpop.f32.mrb[0].mxu0
    %533 = vdwg.mxu0
    %v535 = vsel %vm395, %v342, 0
    %v538 = vsel %vm395, %v390, 0
    %540 = vmatprep.subr.bf16.mxu0 0
    %541 = vmatpush1.bf16.xpose.msra.mxu0 %v538
    %542 = vmatprep.subr.bf16.mxu0 0
    %543 = vmatpush1.bf16.xpose.msra.mxu0 0
    %544 = vmatprep.subr.bf16.mxu0 0
    %545 = vmatpush1.bf16.xpose.msra.mxu0 0
    %546 = vmatprep.subr.bf16.mxu0 0
    %547 = vmatpush1.bf16.xpose.msra.mxu0 0
    %548 = vmatprep.subr.bf16.mxu0 0
    %549 = vmatpush1.bf16.xpose.msra.mxu0 0
    %550 = vmatprep.subr.bf16.mxu0 0
    %551 = vmatpush1.bf16.xpose.msra.mxu0 0
    %552 = vmatprep.subr.bf16.mxu0 0
    %553 = vmatpush1.bf16.xpose.msra.mxu0 0
    %554 = vmatprep.subr.bf16.mxu0 0
    %555 = vmatpush1.bf16.xpose.msra.mxu0 0
    %556 = vmatprep.subr.bf16.mxu0 0
    %557 = vmatpush1.bf16.xpose.msra.mxu0 0
    %558 = vmatprep.subr.bf16.mxu0 0
    %559 = vmatpush1.bf16.xpose.msra.mxu0 0
    %560 = vmatprep.subr.bf16.mxu0 0
    %561 = vmatpush1.bf16.xpose.msra.mxu0 0
    %562 = vmatprep.subr.bf16.mxu0 0
    %563 = vmatpush1.bf16.xpose.msra.mxu0 0
    %564 = vmatprep.subr.bf16.mxu0 0
    %565 = vmatpush1.bf16.xpose.msra.mxu0 0
    %566 = vmatprep.subr.bf16.mxu0 0
    %567 = vmatpush1.bf16.xpose.msra.mxu0 0
    %568 = vmatprep.subr.bf16.mxu0 0
    %569 = vmatpush1.bf16.xpose.msra.mxu0 0
    %570 = vmatprep.subr.bf16.mxu0 0
    %571 = vmatpush1.bf16.xpose.msra.mxu0 0
    %572 = vmatprep.mubr.bf16.mxu0 0
    %573 = vmatmul.mubr.bf16.gmra.mrb[0].mxu0 %v535
    %v574 = vpop.f32.mrb[0].mxu0
    %v575 = vadd.f32 0.0, %v574
    %v576 = vpop.f32.mrb[0].mxu0
    %v577 = vpop.f32.mrb[0].mxu0
    %v578 = vpop.f32.mrb[0].mxu0
    %579 = vdwg.mxu0
    %v581 = vsel %vm395, %v343, 0
    %v584 = vsel %vm395, %v391, 0
    %586 = vmatprep.subr.bf16.mxu0 0
    %587 = vmatpush1.bf16.xpose.msra.mxu0 %v584
    %588 = vmatprep.subr.bf16.mxu0 0
    %589 = vmatpush1.bf16.xpose.msra.mxu0 0
    %590 = vmatprep.subr.bf16.mxu0 0
    %591 = vmatpush1.bf16.xpose.msra.mxu0 0
    %592 = vmatprep.subr.bf16.mxu0 0
    %593 = vmatpush1.bf16.xpose.msra.mxu0 0
    %594 = vmatprep.subr.bf16.mxu0 0
    %595 = vmatpush1.bf16.xpose.msra.mxu0 0
    %596 = vmatprep.subr.bf16.mxu0 0
    %597 = vmatpush1.bf16.xpose.msra.mxu0 0
    %598 = vmatprep.subr.bf16.mxu0 0
    %599 = vmatpush1.bf16.xpose.msra.mxu0 0
    %600 = vmatprep.subr.bf16.mxu0 0
    %601 = vmatpush1.bf16.xpose.msra.mxu0 0
    %602 = vmatprep.subr.bf16.mxu0 0
    %603 = vmatpush1.bf16.xpose.msra.mxu0 0
    %604 = vmatprep.subr.bf16.mxu0 0
    %605 = vmatpush1.bf16.xpose.msra.mxu0 0
    %606 = vmatprep.subr.bf16.mxu0 0
    %607 = vmatpush1.bf16.xpose.msra.mxu0 0
    %608 = vmatprep.subr.bf16.mxu0 0
    %609 = vmatpush1.bf16.xpose.msra.mxu0 0
    %610 = vmatprep.subr.bf16.mxu0 0
    %611 = vmatpush1.bf16.xpose.msra.mxu0 0
    %612 = vmatprep.subr.bf16.mxu0 0
    %613 = vmatpush1.bf16.xpose.msra.mxu0 0
    %614 = vmatprep.subr.bf16.mxu0 0
    %615 = vmatpush1.bf16.xpose.msra.mxu0 0
    %616 = vmatprep.subr.bf16.mxu0 0
    %617 = vmatpush1.bf16.xpose.msra.mxu0 0
    %618 = vmatprep.mubr.bf16.mxu0 0
    %619 = vmatmul.mubr.bf16.gmra.mrb[0].mxu0 %v581
    %v620 = vpop.f32.mrb[0].mxu0
    %v621 = vadd.f32 0.0, %v620
    %v622 = vpop.f32.mrb[0].mxu0
    %v623 = vpop.f32.mrb[0].mxu0
    %v624 = vpop.f32.mrb[0].mxu0
    %625 = vdwg.mxu0
    %v627 = vsel %vm395, %v344, 0
    %v630 = vsel %vm395, %v392, 0
    %632 = vmatprep.subr.bf16.mxu0 0
    %633 = vmatpush1.bf16.xpose.msra.mxu0 %v630
    %634 = vmatprep.subr.bf16.mxu0 0
    %635 = vmatpush1.bf16.xpose.msra.mxu0 0
    %636 = vmatprep.subr.bf16.mxu0 0
    %637 = vmatpush1.bf16.xpose.msra.mxu0 0
    %638 = vmatprep.subr.bf16.mxu0 0
    %639 = vmatpush1.bf16.xpose.msra.mxu0 0
    %640 = vmatprep.subr.bf16.mxu0 0
    %641 = vmatpush1.bf16.xpose.msra.mxu0 0
    %642 = vmatprep.subr.bf16.mxu0 0
    %643 = vmatpush1.bf16.xpose.msra.mxu0 0
    %644 = vmatprep.subr.bf16.mxu0 0
    %645 = vmatpush1.bf16.xpose.msra.mxu0 0
    %646 = vmatprep.subr.bf16.mxu0 0
    %647 = vmatpush1.bf16.xpose.msra.mxu0 0
    %648 = vmatprep.subr.bf16.mxu0 0
    %649 = vmatpush1.bf16.xpose.msra.mxu0 0
    %650 = vmatprep.subr.bf16.mxu0 0
    %651 = vmatpush1.bf16.xpose.msra.mxu0 0
    %652 = vmatprep.subr.bf16.mxu0 0
    %653 = vmatpush1.bf16.xpose.msra.mxu0 0
    %654 = vmatprep.subr.bf16.mxu0 0
    %655 = vmatpush1.bf16.xpose.msra.mxu0 0
    %656 = vmatprep.subr.bf16.mxu0 0
    %657 = vmatpush1.bf16.xpose.msra.mxu0 0
    %658 = vmatprep.subr.bf16.mxu0 0
    %659 = vmatpush1.bf16.xpose.msra.mxu0 0
    %660 = vmatprep.subr.bf16.mxu0 0
    %661 = vmatpush1.bf16.xpose.msra.mxu0 0
    %662 = vmatprep.subr.bf16.mxu0 0
    %663 = vmatpush1.bf16.xpose.msra.mxu0 0
    %664 = vmatprep.mubr.bf16.mxu0 0
    %665 = vmatmul.mubr.bf16.gmra.mrb[0].mxu0 %v627
    %v666 = vpop.f32.mrb[0].mxu0
    %v667 = vadd.f32 0.0, %v666
    %v668 = vpop.f32.mrb[0].mxu0
    %v669 = vpop.f32.mrb[0].mxu0
    %v670 = vpop.f32.mrb[0].mxu0
    %671 = vdwg.mxu0
    %v673 = vsel %vm395, %v345, 0
    %v676 = vsel %vm395, %v393, 0
    %678 = vmatprep.subr.bf16.mxu0 0
    %679 = vmatpush1.bf16.xpose.msra.mxu0 %v676
    %680 = vmatprep.subr.bf16.mxu0 0
    %681 = vmatpush1.bf16.xpose.msra.mxu0 0
    %682 = vmatprep.subr.bf16.mxu0 0
    %683 = vmatpush1.bf16.xpose.msra.mxu0 0
    %684 = vmatprep.subr.bf16.mxu0 0
    %685 = vmatpush1.bf16.xpose.msra.mxu0 0
    %686 = vmatprep.subr.bf16.mxu0 0
    %687 = vmatpush1.bf16.xpose.msra.mxu0 0
    %688 = vmatprep.subr.bf16.mxu0 0
    %689 = vmatpush1.bf16.xpose.msra.mxu0 0
    %690 = vmatprep.subr.bf16.mxu0 0
    %691 = vmatpush1.bf16.xpose.msra.mxu0 0
    %692 = vmatprep.subr.bf16.mxu0 0
    %693 = vmatpush1.bf16.xpose.msra.mxu0 0
    %694 = vmatprep.subr.bf16.mxu0 0
    %695 = vmatpush1.bf16.xpose.msra.mxu0 0
    %696 = vmatprep.subr.bf16.mxu0 0
    %697 = vmatpush1.bf16.xpose.msra.mxu0 0
    %698 = vmatprep.subr.bf16.mxu0 0
    %699 = vmatpush1.bf16.xpose.msra.mxu0 0
    %700 = vmatprep.subr.bf16.mxu0 0
    %701 = vmatpush1.bf16.xpose.msra.mxu0 0
    %702 = vmatprep.subr.bf16.mxu0 0
    %703 = vmatpush1.bf16.xpose.msra.mxu0 0
    %704 = vmatprep.subr.bf16.mxu0 0
    %705 = vmatpush1.bf16.xpose.msra.mxu0 0
    %706 = vmatprep.subr.bf16.mxu0 0
    %707 = vmatpush1.bf16.xpose.msra.mxu0 0
    %708 = vmatprep.subr.bf16.mxu0 0
    %709 = vmatpush1.bf16.xpose.msra.mxu0 0
    %710 = vmatprep.mubr.bf16.mxu0 0
    %711 = vmatmul.mubr.bf16.gmra.mrb[0].mxu0 %v673
    %v712 = vpop.f32.mrb[0].mxu0
    %v713 = vadd.f32 0.0, %v712
    %v714 = vpop.f32.mrb[0].mxu0
    %v715 = vpop.f32.mrb[0].mxu0
    %v716 = vpop.f32.mrb[0].mxu0
    %717 = vdwg.mxu0
    %v719 = vsel %vm395, %v346, 0
    %v722 = vsel %vm395, %v394, 0
    %724 = vmatprep.subr.bf16.mxu0 0
    %725 = vmatpush1.bf16.xpose.msra.mxu0 %v722
    %726 = vmatprep.subr.bf16.mxu0 0
    %727 = vmatpush1.bf16.xpose.msra.mxu0 0
    %728 = vmatprep.subr.bf16.mxu0 0
    %729 = vmatpush1.bf16.xpose.msra.mxu0 0
    %730 = vmatprep.subr.bf16.mxu0 0
    %731 = vmatpush1.bf16.xpose.msra.mxu0 0
    %732 = vmatprep.subr.bf16.mxu0 0
    %733 = vmatpush1.bf16.xpose.msra.mxu0 0
    %734 = vmatprep.subr.bf16.mxu0 0
    %735 = vmatpush1.bf16.xpose.msra.mxu0 0
    %736 = vmatprep.subr.bf16.mxu0 0
    %737 = vmatpush1.bf16.xpose.msra.mxu0 0
    %738 = vmatprep.subr.bf16.mxu0 0
    %739 = vmatpush1.bf16.xpose.msra.mxu0 0
    %740 = vmatprep.subr.bf16.mxu0 0
    %741 = vmatpush1.bf16.xpose.msra.mxu0 0
    %742 = vmatprep.subr.bf16.mxu0 0
    %743 = vmatpush1.bf16.xpose.msra.mxu0 0
    %744 = vmatprep.subr.bf16.mxu0 0
    %745 = vmatpush1.bf16.xpose.msra.mxu0 0
    %746 = vmatprep.subr.bf16.mxu0 0
    %747 = vmatpush1.bf16.xpose.msra.mxu0 0
    %748 = vmatprep.subr.bf16.mxu0 0
    %749 = vmatpush1.bf16.xpose.msra.mxu0 0
    %750 = vmatprep.subr.bf16.mxu0 0
    %751 = vmatpush1.bf16.xpose.msra.mxu0 0
    %752 = vmatprep.subr.bf16.mxu0 0
    %753 = vmatpush1.bf16.xpose.msra.mxu0 0
    %754 = vmatprep.subr.bf16.mxu0 0
    %755 = vmatpush1.bf16.xpose.msra.mxu0 0
    %756 = vmatprep.mubr.bf16.mxu0 0
    %757 = vmatmul.mubr.bf16.gmra.mrb[0].mxu0 %v719
    %v758 = vpop.f32.mrb[0].mxu0
    %v759 = vadd.f32 0.0, %v758
    %v760 = vpop.f32.mrb[0].mxu0
    %v761 = vpop.f32.mrb[0].mxu0
    %v762 = vpop.f32.mrb[0].mxu0
    %763 = vdwg.mxu0
    %v764 = vsel %vm395, %v437, -inf
    %765 = vmax.xlane.f32.xlu0 %v764
    %v766 = vpop.xlane.xlu0 %765
    %v767 = vsel %vm395, %v483, -inf
    %768 = vmax.xlane.f32.xlu0 %v767
    %v769 = vpop.xlane.xlu0 %768
    %v770 = vsel %vm395, %v529, -inf
    %771 = vmax.xlane.f32.xlu0 %v770
    %v772 = vpop.xlane.xlu0 %771
    %v773 = vsel %vm395, %v575, -inf
    %774 = vmax.xlane.f32.xlu0 %v773
    %v775 = vpop.xlane.xlu0 %774
    %v776 = vsel %vm395, %v621, -inf
    %777 = vmax.xlane.f32.xlu0 %v776
    %v778 = vpop.xlane.xlu0 %777
    %v779 = vsel %vm395, %v667, -inf
    %780 = vmax.xlane.f32.xlu0 %v779
    %v781 = vpop.xlane.xlu0 %780
    %v782 = vsel %vm395, %v713, -inf
    %783 = vmax.xlane.f32.xlu0 %v782
    %v784 = vpop.xlane.xlu0 %783
    %v785 = vsel %vm395, %v759, -inf
    %786 = vmax.xlane.f32.xlu0 %v785
    %v787 = vpop.xlane.xlu0 %786
    %v788 = vsub.f32 %v437, %v766
    %v789 = vsub.f32 %v483, %v769
    %v790 = vsub.f32 %v529, %v772
    %v791 = vsub.f32 %v575, %v775
    %v792 = vsub.f32 %v621, %v778
    %v793 = vsub.f32 %v667, %v781
    %v794 = vsub.f32 %v713, %v784
    %v795 = vsub.f32 %v759, %v787
    %v796 = vmul.f32 %v788, 1.442695
    %v797 = vpow.pop %v796
    %v798 = vmul.f32 %v789, 1.442695
    %v799 = vpow.pop %v798
    %v800 = vmul.f32 %v790, 1.442695
    %v801 = vpow.pop %v800
    %v802 = vmul.f32 %v791, 1.442695
    %v803 = vpow.pop %v802
    %v804 = vmul.f32 %v792, 1.442695
    %v805 = vpow.pop %v804
    %v806 = vmul.f32 %v793, 1.442695
    %v807 = vpow.pop %v806
    %v808 = vmul.f32 %v794, 1.442695
    %v809 = vpow.pop %v808
    %v810 = vmul.f32 %v795, 1.442695
    %v811 = vpow.pop %v810
    %v812 = vsel %vm395, %v797, 0.0
    %813 = vadd.xlane.f32.xlu0 %v812
    %v814 = vpop.xlane.xlu0 %813
    %v815 = vsel %vm395, %v799, 0.0
    %816 = vadd.xlane.f32.xlu0 %v815
    %v817 = vpop.xlane.xlu0 %816
    %v818 = vsel %vm395, %v801, 0.0
    %819 = vadd.xlane.f32.xlu0 %v818
    %v820 = vpop.xlane.xlu0 %819
    %v821 = vsel %vm395, %v803, 0.0
    %822 = vadd.xlane.f32.xlu0 %v821
    %v823 = vpop.xlane.xlu0 %822
    %v824 = vsel %vm395, %v805, 0.0
    %825 = vadd.xlane.f32.xlu0 %v824
    %v826 = vpop.xlane.xlu0 %825
    %v827 = vsel %vm395, %v807, 0.0
    %828 = vadd.xlane.f32.xlu0 %v827
    %v829 = vpop.xlane.xlu0 %828
    %v830 = vsel %vm395, %v809, 0.0
    %831 = vadd.xlane.f32.xlu0 %v830
    %v832 = vpop.xlane.xlu0 %831
    %v833 = vsel %vm395, %v811, 0.0
    %834 = vadd.xlane.f32.xlu0 %v833
    %v835 = vpop.xlane.xlu0 %834
    %v836 = vrcp.pop %v814
    %v837 = vrcp.pop %v817
    %v838 = vrcp.pop %v820
    %v839 = vrcp.pop %v823
    %v840 = vrcp.pop %v826
    %v841 = vrcp.pop %v829
    %v842 = vrcp.pop %v832
    %v843 = vrcp.pop %v835
    %v844 = vmul.f32 %v797, %v836
    %v845 = vmul.f32 %v799, %v837
    %v846 = vmul.f32 %v801, %v838
    %v847 = vmul.f32 %v803, %v839
    %v848 = vmul.f32 %v805, %v840
    %v849 = vmul.f32 %v807, %v841
    %v850 = vmul.f32 %v809, %v842
    %v851 = vmul.f32 %v811, %v843
    %vm852 = vcmask 130112
    %v853 = vsel %vm852, %v437, -inf
    %854 = vmax.xlane.f32.xlu0 %v853
    %v855 = vpop.xlane.xlu0 %854
    %v856 = vsel %vm852, %v483, -inf
    %857 = vmax.xlane.f32.xlu0 %v856
    %v858 = vpop.xlane.xlu0 %857
    %v859 = vsel %vm852, %v529, -inf
    %860 = vmax.xlane.f32.xlu0 %v859
    %v861 = vpop.xlane.xlu0 %860
    %v862 = vsel %vm852, %v575, -inf
    %863 = vmax.xlane.f32.xlu0 %v862
    %v864 = vpop.xlane.xlu0 %863
    %v865 = vsel %vm852, %v621, -inf
    %866 = vmax.xlane.f32.xlu0 %v865
    %v867 = vpop.xlane.xlu0 %866
    %v868 = vsel %vm852, %v667, -inf
    %869 = vmax.xlane.f32.xlu0 %v868
    %v870 = vpop.xlane.xlu0 %869
    %v871 = vsel %vm852, %v713, -inf
    %872 = vmax.xlane.f32.xlu0 %v871
    %v873 = vpop.xlane.xlu0 %872
    %v874 = vsel %vm852, %v759, -inf
    %875 = vmax.xlane.f32.xlu0 %v874
    %v876 = vpop.xlane.xlu0 %875
    %v877 = vsub.f32 %v437, %v855
    %v878 = vsub.f32 %v483, %v858
    %v879 = vsub.f32 %v529, %v861
    %v880 = vsub.f32 %v575, %v864
    %v881 = vsub.f32 %v621, %v867
    %v882 = vsub.f32 %v667, %v870
    %v883 = vsub.f32 %v713, %v873
    %v884 = vsub.f32 %v759, %v876
    %v885 = vmul.f32 %v877, 1.442695
    %v886 = vpow.pop %v885
    %v887 = vmul.f32 %v878, 1.442695
    %v888 = vpow.pop %v887
    %v889 = vmul.f32 %v879, 1.442695
    %v890 = vpow.pop %v889
    %v891 = vmul.f32 %v880, 1.442695
    %v892 = vpow.pop %v891
    %v893 = vmul.f32 %v881, 1.442695
    %v894 = vpow.pop %v893
    %v895 = vmul.f32 %v882, 1.442695
    %v896 = vpow.pop %v895
    %v897 = vmul.f32 %v883, 1.442695
    %v898 = vpow.pop %v897
    %v899 = vmul.f32 %v884, 1.442695
    %v900 = vpow.pop %v899
    %909 = vrot.lane.b32.xlu0 %v886, 120
    %v910 = vpop.permute.xlu0 %909
    %911 = vrot.lane.b32.xlu0 %v888, 120
    %v912 = vpop.permute.xlu0 %911
    %913 = vrot.lane.b32.xlu0 %v890, 120
    %v914 = vpop.permute.xlu0 %913
    %915 = vrot.lane.b32.xlu0 %v892, 120
    %v916 = vpop.permute.xlu0 %915
    %917 = vrot.lane.b32.xlu0 %v894, 120
    %v918 = vpop.permute.xlu0 %917
    %919 = vrot.lane.b32.xlu0 %v896, 120
    %v920 = vpop.permute.xlu0 %919
    %921 = vrot.lane.b32.xlu0 %v898, 120
    %v922 = vpop.permute.xlu0 %921
    %923 = vrot.lane.b32.xlu0 %v900, 120
    %v924 = vpop.permute.xlu0 %923
    %v933 = vsel %vm395, %v910, 0.0
    %934 = vadd.xlane.f32.xlu0 %v933
    %v935 = vpop.xlane.xlu0 %934
    %v936 = vsel %vm395, %v912, 0.0
    %937 = vadd.xlane.f32.xlu0 %v936
    %v938 = vpop.xlane.xlu0 %937
    %v939 = vsel %vm395, %v914, 0.0
    %940 = vadd.xlane.f32.xlu0 %v939
    %v941 = vpop.xlane.xlu0 %940
    %v942 = vsel %vm395, %v916, 0.0
    %943 = vadd.xlane.f32.xlu0 %v942
    %v944 = vpop.xlane.xlu0 %943
    %v945 = vsel %vm395, %v918, 0.0
    %946 = vadd.xlane.f32.xlu0 %v945
    %v947 = vpop.xlane.xlu0 %946
    %v948 = vsel %vm395, %v920, 0.0
    %949 = vadd.xlane.f32.xlu0 %v948
    %v950 = vpop.xlane.xlu0 %949
    %v951 = vsel %vm395, %v922, 0.0
    %952 = vadd.xlane.f32.xlu0 %v951
    %v953 = vpop.xlane.xlu0 %952
    %v954 = vsel %vm395, %v924, 0.0
    %955 = vadd.xlane.f32.xlu0 %v954
    %v956 = vpop.xlane.xlu0 %955
    %v957 = vrcp.pop %v935
    %v958 = vrcp.pop %v938
    %v959 = vrcp.pop %v941
    %v960 = vrcp.pop %v944
    %v961 = vrcp.pop %v947
    %v962 = vrcp.pop %v950
    %v963 = vrcp.pop %v953
    %v964 = vrcp.pop %v956
    %v965 = vmul.f32 %v886, %v957
    %v966 = vmul.f32 %v888, %v958
    %v967 = vmul.f32 %v890, %v959
    %v968 = vmul.f32 %v892, %v960
    %v969 = vmul.f32 %v894, %v961
    %v970 = vmul.f32 %v896, %v962
    %v971 = vmul.f32 %v898, %v963
    %v972 = vmul.f32 %v900, %v964
    %v973 = vsel %vm395, %v844, %v965
    %v974 = vsel %vm395, %v845, %v966
    %v975 = vsel %vm395, %v846, %v967
    %v976 = vsel %vm395, %v847, %v968
    %v977 = vsel %vm395, %v848, %v969
    %v978 = vsel %vm395, %v849, %v970
    %v979 = vsel %vm395, %v850, %v971
    %v980 = vsel %vm395, %v851, %v972
    %v981 = vpack.c.bf16 %v973, %v973
    %v982 = vpack.c.bf16 %v974, %v974
    %v983 = vpack.c.bf16 %v975, %v975
    %v984 = vpack.c.bf16 %v976, %v976
    %v985 = vpack.c.bf16 %v977, %v977
    %v986 = vpack.c.bf16 %v978, %v978
    %v987 = vpack.c.bf16 %v979, %v979
    %v988 = vpack.c.bf16 %v980, %v980
    %990 = vrot.lane.b32.xlu0 %v387, 96
    %v991 = vpop.permute.xlu0 %990
    %vm993 = vcmask 130048
    %v995 = vsel %vm993, %v981, 0
    %997 = vmatprep.subr.bf16.mxu0 0
    %998 = vmatpush1.bf16.msra.mxu0 %v991
    %999 = vmatprep.subr.bf16.mxu0 0
    %1000 = vmatpush1.bf16.msra.mxu0 0
    %1001 = vmatprep.subr.bf16.mxu0 0
    %1002 = vmatpush1.bf16.msra.mxu0 0
    %1003 = vmatprep.subr.bf16.mxu0 0
    %1004 = vmatpush1.bf16.msra.mxu0 0
    %1005 = vmatprep.subr.bf16.mxu0 0
    %1006 = vmatpush1.bf16.msra.mxu0 0
    %1007 = vmatprep.subr.bf16.mxu0 0
    %1008 = vmatpush1.bf16.msra.mxu0 0
    %1009 = vmatprep.subr.bf16.mxu0 0
    %1010 = vmatpush1.bf16.msra.mxu0 0
    %1011 = vmatprep.subr.bf16.mxu0 0
    %1012 = vmatpush1.bf16.msra.mxu0 0
    %1013 = vmatprep.subr.bf16.mxu0 0
    %1014 = vmatpush1.bf16.msra.mxu0 0
    %1015 = vmatprep.subr.bf16.mxu0 0
    %1016 = vmatpush1.bf16.msra.mxu0 0
    %1017 = vmatprep.subr.bf16.mxu0 0
    %1018 = vmatpush1.bf16.msra.mxu0 0
    %1019 = vmatprep.subr.bf16.mxu0 0
    %1020 = vmatpush1.bf16.msra.mxu0 0
    %1021 = vmatprep.subr.bf16.mxu0 0
    %1022 = vmatpush1.bf16.msra.mxu0 0
    %1023 = vmatprep.subr.bf16.mxu0 0
    %1024 = vmatpush1.bf16.msra.mxu0 0
    %1025 = vmatprep.subr.bf16.mxu0 0
    %1026 = vmatpush1.bf16.msra.mxu0 0
    %1027 = vmatprep.subr.bf16.mxu0 0
    %1028 = vmatpush1.bf16.msra.mxu0 0
    %1029 = vmatprep.mubr.bf16.mxu0 0
    %1030 = vmatmul.mubr.bf16.gmra.mrb[0].mxu0 %v995
    %v1031 = vpop.f32.mrb[0].mxu0
    %v1032 = vadd.f32 0.0, %v1031
    %v1033 = vpop.f32.mrb[0].mxu0
    %v1034 = vpop.f32.mrb[0].mxu0
    %v1035 = vpop.f32.mrb[0].mxu0
    %1036 = vdwg.mxu0
    %1038 = vrot.lane.b32.xlu0 %v388, 96
    %v1039 = vpop.permute.xlu0 %1038
    %v1042 = vsel %vm993, %v982, 0
    %1044 = vmatprep.subr.bf16.mxu0 0
    %1045 = vmatpush1.bf16.msra.mxu0 %v1039
    %1046 = vmatprep.subr.bf16.mxu0 0
    %1047 = vmatpush1.bf16.msra.mxu0 0
    %1048 = vmatprep.subr.bf16.mxu0 0
    %1049 = vmatpush1.bf16.msra.mxu0 0
    %1050 = vmatprep.subr.bf16.mxu0 0
    %1051 = vmatpush1.bf16.msra.mxu0 0
    %1052 = vmatprep.subr.bf16.mxu0 0
    %1053 = vmatpush1.bf16.msra.mxu0 0
    %1054 = vmatprep.subr.bf16.mxu0 0
    %1055 = vmatpush1.bf16.msra.mxu0 0
    %1056 = vmatprep.subr.bf16.mxu0 0
    %1057 = vmatpush1.bf16.msra.mxu0 0
    %1058 = vmatprep.subr.bf16.mxu0 0
    %1059 = vmatpush1.bf16.msra.mxu0 0
    %1060 = vmatprep.subr.bf16.mxu0 0
    %1061 = vmatpush1.bf16.msra.mxu0 0
    %1062 = vmatprep.subr.bf16.mxu0 0
    %1063 = vmatpush1.bf16.msra.mxu0 0
    %1064 = vmatprep.subr.bf16.mxu0 0
    %1065 = vmatpush1.bf16.msra.mxu0 0
    %1066 = vmatprep.subr.bf16.mxu0 0
    %1067 = vmatpush1.bf16.msra.mxu0 0
    %1068 = vmatprep.subr.bf16.mxu0 0
    %1069 = vmatpush1.bf16.msra.mxu0 0
    %1070 = vmatprep.subr.bf16.mxu0 0
    %1071 = vmatpush1.bf16.msra.mxu0 0
    %1072 = vmatprep.subr.bf16.mxu0 0
    %1073 = vmatpush1.bf16.msra.mxu0 0
    %1074 = vmatprep.subr.bf16.mxu0 0
    %1075 = vmatpush1.bf16.msra.mxu0 0
    %1076 = vmatprep.mubr.bf16.mxu0 0
    %1077 = vmatmul.mubr.bf16.gmra.mrb[0].mxu0 %v1042
    %v1078 = vpop.f32.mrb[0].mxu0
    %v1079 = vadd.f32 0.0, %v1078
    %v1080 = vpop.f32.mrb[0].mxu0
    %v1081 = vpop.f32.mrb[0].mxu0
    %v1082 = vpop.f32.mrb[0].mxu0
    %1083 = vdwg.mxu0
    %1085 = vrot.lane.b32.xlu0 %v389, 96
    %v1086 = vpop.permute.xlu0 %1085
    %v1089 = vsel %vm993, %v983, 0
    %1091 = vmatprep.subr.bf16.mxu0 0
    %1092 = vmatpush1.bf16.msra.mxu0 %v1086
    %1093 = vmatprep.subr.bf16.mxu0 0
    %1094 = vmatpush1.bf16.msra.mxu0 0
    %1095 = vmatprep.subr.bf16.mxu0 0
    %1096 = vmatpush1.bf16.msra.mxu0 0
    %1097 = vmatprep.subr.bf16.mxu0 0
    %1098 = vmatpush1.bf16.msra.mxu0 0
    %1099 = vmatprep.subr.bf16.mxu0 0
    %1100 = vmatpush1.bf16.msra.mxu0 0
    %1101 = vmatprep.subr.bf16.mxu0 0
    %1102 = vmatpush1.bf16.msra.mxu0 0
    %1103 = vmatprep.subr.bf16.mxu0 0
    %1104 = vmatpush1.bf16.msra.mxu0 0
    %1105 = vmatprep.subr.bf16.mxu0 0
    %1106 = vmatpush1.bf16.msra.mxu0 0
    %1107 = vmatprep.subr.bf16.mxu0 0
    %1108 = vmatpush1.bf16.msra.mxu0 0
    %1109 = vmatprep.subr.bf16.mxu0 0
    %1110 = vmatpush1.bf16.msra.mxu0 0
    %1111 = vmatprep.subr.bf16.mxu0 0
    %1112 = vmatpush1.bf16.msra.mxu0 0
    %1113 = vmatprep.subr.bf16.mxu0 0
    %1114 = vmatpush1.bf16.msra.mxu0 0
    %1115 = vmatprep.subr.bf16.mxu0 0
    %1116 = vmatpush1.bf16.msra.mxu0 0
    %1117 = vmatprep.subr.bf16.mxu0 0
    %1118 = vmatpush1.bf16.msra.mxu0 0
    %1119 = vmatprep.subr.bf16.mxu0 0
    %1120 = vmatpush1.bf16.msra.mxu0 0
    %1121 = vmatprep.subr.bf16.mxu0 0
    %1122 = vmatpush1.bf16.msra.mxu0 0
    %1123 = vmatprep.mubr.bf16.mxu0 0
    %1124 = vmatmul.mubr.bf16.gmra.mrb[0].mxu0 %v1089
    %v1125 = vpop.f32.mrb[0].mxu0
    %v1126 = vadd.f32 0.0, %v1125
    %v1127 = vpop.f32.mrb[0].mxu0
    %v1128 = vpop.f32.mrb[0].mxu0
    %v1129 = vpop.f32.mrb[0].mxu0
    %1130 = vdwg.mxu0
    %1132 = vrot.lane.b32.xlu0 %v390, 96
    %v1133 = vpop.permute.xlu0 %1132
    %v1136 = vsel %vm993, %v984, 0
    %1138 = vmatprep.subr.bf16.mxu0 0
    %1139 = vmatpush1.bf16.msra.mxu0 %v1133
    %1140 = vmatprep.subr.bf16.mxu0 0
    %1141 = vmatpush1.bf16.msra.mxu0 0
    %1142 = vmatprep.subr.bf16.mxu0 0
    %1143 = vmatpush1.bf16.msra.mxu0 0
    %1144 = vmatprep.subr.bf16.mxu0 0
    %1145 = vmatpush1.bf16.msra.mxu0 0
    %1146 = vmatprep.subr.bf16.mxu0 0
    %1147 = vmatpush1.bf16.msra.mxu0 0
    %1148 = vmatprep.subr.bf16.mxu0 0
    %1149 = vmatpush1.bf16.msra.mxu0 0
    %1150 = vmatprep.subr.bf16.mxu0 0
    %1151 = vmatpush1.bf16.msra.mxu0 0
    %1152 = vmatprep.subr.bf16.mxu0 0
    %1153 = vmatpush1.bf16.msra.mxu0 0
    %1154 = vmatprep.subr.bf16.mxu0 0
    %1155 = vmatpush1.bf16.msra.mxu0 0
    %1156 = vmatprep.subr.bf16.mxu0 0
    %1157 = vmatpush1.bf16.msra.mxu0 0
    %1158 = vmatprep.subr.bf16.mxu0 0
    %1159 = vmatpush1.bf16.msra.mxu0 0
    %1160 = vmatprep.subr.bf16.mxu0 0
    %1161 = vmatpush1.bf16.msra.mxu0 0
    %1162 = vmatprep.subr.bf16.mxu0 0
    %1163 = vmatpush1.bf16.msra.mxu0 0
    %1164 = vmatprep.subr.bf16.mxu0 0
    %1165 = vmatpush1.bf16.msra.mxu0 0
    %1166 = vmatprep.subr.bf16.mxu0 0
    %1167 = vmatpush1.bf16.msra.mxu0 0
    %1168 = vmatprep.subr.bf16.mxu0 0
    %1169 = vmatpush1.bf16.msra.mxu0 0
    %1170 = vmatprep.mubr.bf16.mxu0 0
    %1171 = vmatmul.mubr.bf16.gmra.mrb[0].mxu0 %v1136
    %v1172 = vpop.f32.mrb[0].mxu0
    %v1173 = vadd.f32 0.0, %v1172
    %v1174 = vpop.f32.mrb[0].mxu0
    %v1175 = vpop.f32.mrb[0].mxu0
    %v1176 = vpop.f32.mrb[0].mxu0
    %1177 = vdwg.mxu0
    %1179 = vrot.lane.b32.xlu0 %v391, 96
    %v1180 = vpop.permute.xlu0 %1179
    %v1183 = vsel %vm993, %v985, 0
    %1185 = vmatprep.subr.bf16.mxu0 0
    %1186 = vmatpush1.bf16.msra.mxu0 %v1180
    %1187 = vmatprep.subr.bf16.mxu0 0
    %1188 = vmatpush1.bf16.msra.mxu0 0
    %1189 = vmatprep.subr.bf16.mxu0 0
    %1190 = vmatpush1.bf16.msra.mxu0 0
    %1191 = vmatprep.subr.bf16.mxu0 0
    %1192 = vmatpush1.bf16.msra.mxu0 0
    %1193 = vmatprep.subr.bf16.mxu0 0
    %1194 = vmatpush1.bf16.msra.mxu0 0
    %1195 = vmatprep.subr.bf16.mxu0 0
    %1196 = vmatpush1.bf16.msra.mxu0 0
    %1197 = vmatprep.subr.bf16.mxu0 0
    %1198 = vmatpush1.bf16.msra.mxu0 0
    %1199 = vmatprep.subr.bf16.mxu0 0
    %1200 = vmatpush1.bf16.msra.mxu0 0
    %1201 = vmatprep.subr.bf16.mxu0 0
    %1202 = vmatpush1.bf16.msra.mxu0 0
    %1203 = vmatprep.subr.bf16.mxu0 0
    %1204 = vmatpush1.bf16.msra.mxu0 0
    %1205 = vmatprep.subr.bf16.mxu0 0
    %1206 = vmatpush1.bf16.msra.mxu0 0
    %1207 = vmatprep.subr.bf16.mxu0 0
    %1208 = vmatpush1.bf16.msra.mxu0 0
    %1209 = vmatprep.subr.bf16.mxu0 0
    %1210 = vmatpush1.bf16.msra.mxu0 0
    %1211 = vmatprep.subr.bf16.mxu0 0
    %1212 = vmatpush1.bf16.msra.mxu0 0
    %1213 = vmatprep.subr.bf16.mxu0 0
    %1214 = vmatpush1.bf16.msra.mxu0 0
    %1215 = vmatprep.subr.bf16.mxu0 0
    %1216 = vmatpush1.bf16.msra.mxu0 0
    %1217 = vmatprep.mubr.bf16.mxu0 0
    %1218 = vmatmul.mubr.bf16.gmra.mrb[0].mxu0 %v1183
    %v1219 = vpop.f32.mrb[0].mxu0
    %v1220 = vadd.f32 0.0, %v1219
    %v1221 = vpop.f32.mrb[0].mxu0
    %v1222 = vpop.f32.mrb[0].mxu0
    %v1223 = vpop.f32.mrb[0].mxu0
    %1224 = vdwg.mxu0
    %1226 = vrot.lane.b32.xlu0 %v392, 96
    %v1227 = vpop.permute.xlu0 %1226
    %v1230 = vsel %vm993, %v986, 0
    %1232 = vmatprep.subr.bf16.mxu0 0
    %1233 = vmatpush1.bf16.msra.mxu0 %v1227
    %1234 = vmatprep.subr.bf16.mxu0 0
    %1235 = vmatpush1.bf16.msra.mxu0 0
    %1236 = vmatprep.subr.bf16.mxu0 0
    %1237 = vmatpush1.bf16.msra.mxu0 0
    %1238 = vmatprep.subr.bf16.mxu0 0
    %1239 = vmatpush1.bf16.msra.mxu0 0
    %1240 = vmatprep.subr.bf16.mxu0 0
    %1241 = vmatpush1.bf16.msra.mxu0 0
    %1242 = vmatprep.subr.bf16.mxu0 0
    %1243 = vmatpush1.bf16.msra.mxu0 0
    %1244 = vmatprep.subr.bf16.mxu0 0
    %1245 = vmatpush1.bf16.msra.mxu0 0
    %1246 = vmatprep.subr.bf16.mxu0 0
    %1247 = vmatpush1.bf16.msra.mxu0 0
    %1248 = vmatprep.subr.bf16.mxu0 0
    %1249 = vmatpush1.bf16.msra.mxu0 0
    %1250 = vmatprep.subr.bf16.mxu0 0
    %1251 = vmatpush1.bf16.msra.mxu0 0
    %1252 = vmatprep.subr.bf16.mxu0 0
    %1253 = vmatpush1.bf16.msra.mxu0 0
    %1254 = vmatprep.subr.bf16.mxu0 0
    %1255 = vmatpush1.bf16.msra.mxu0 0
    %1256 = vmatprep.subr.bf16.mxu0 0
    %1257 = vmatpush1.bf16.msra.mxu0 0
    %1258 = vmatprep.subr.bf16.mxu0 0
    %1259 = vmatpush1.bf16.msra.mxu0 0
    %1260 = vmatprep.subr.bf16.mxu0 0
    %1261 = vmatpush1.bf16.msra.mxu0 0
    %1262 = vmatprep.subr.bf16.mxu0 0
    %1263 = vmatpush1.bf16.msra.mxu0 0
    %1264 = vmatprep.mubr.bf16.mxu0 0
    %1265 = vmatmul.mubr.bf16.gmra.mrb[0].mxu0 %v1230
    %v1266 = vpop.f32.mrb[0].mxu0
    %v1267 = vadd.f32 0.0, %v1266
    %v1268 = vpop.f32.mrb[0].mxu0
    %v1269 = vpop.f32.mrb[0].mxu0
    %v1270 = vpop.f32.mrb[0].mxu0
    %1271 = vdwg.mxu0
    %1273 = vrot.lane.b32.xlu0 %v393, 96
    %v1274 = vpop.permute.xlu0 %1273
    %v1277 = vsel %vm993, %v987, 0
    %1279 = vmatprep.subr.bf16.mxu0 0
    %1280 = vmatpush1.bf16.msra.mxu0 %v1274
    %1281 = vmatprep.subr.bf16.mxu0 0
    %1282 = vmatpush1.bf16.msra.mxu0 0
    %1283 = vmatprep.subr.bf16.mxu0 0
    %1284 = vmatpush1.bf16.msra.mxu0 0
    %1285 = vmatprep.subr.bf16.mxu0 0
    %1286 = vmatpush1.bf16.msra.mxu0 0
    %1287 = vmatprep.subr.bf16.mxu0 0
    %1288 = vmatpush1.bf16.msra.mxu0 0
    %1289 = vmatprep.subr.bf16.mxu0 0
    %1290 = vmatpush1.bf16.msra.mxu0 0
    %1291 = vmatprep.subr.bf16.mxu0 0
    %1292 = vmatpush1.bf16.msra.mxu0 0
    %1293 = vmatprep.subr.bf16.mxu0 0
    %1294 = vmatpush1.bf16.msra.mxu0 0
    %1295 = vmatprep.subr.bf16.mxu0 0
    %1296 = vmatpush1.bf16.msra.mxu0 0
    %1297 = vmatprep.subr.bf16.mxu0 0
    %1298 = vmatpush1.bf16.msra.mxu0 0
    %1299 = vmatprep.subr.bf16.mxu0 0
    %1300 = vmatpush1.bf16.msra.mxu0 0
    %1301 = vmatprep.subr.bf16.mxu0 0
    %1302 = vmatpush1.bf16.msra.mxu0 0
    %1303 = vmatprep.subr.bf16.mxu0 0
    %1304 = vmatpush1.bf16.msra.mxu0 0
    %1305 = vmatprep.subr.bf16.mxu0 0
    %1306 = vmatpush1.bf16.msra.mxu0 0
    %1307 = vmatprep.subr.bf16.mxu0 0
    %1308 = vmatpush1.bf16.msra.mxu0 0
    %1309 = vmatprep.subr.bf16.mxu0 0
    %1310 = vmatpush1.bf16.msra.mxu0 0
    %1311 = vmatprep.mubr.bf16.mxu0 0
    %1312 = vmatmul.mubr.bf16.gmra.mrb[0].mxu0 %v1277
    %v1313 = vpop.f32.mrb[0].mxu0
    %v1314 = vadd.f32 0.0, %v1313
    %v1315 = vpop.f32.mrb[0].mxu0
    %v1316 = vpop.f32.mrb[0].mxu0
    %v1317 = vpop.f32.mrb[0].mxu0
    %1318 = vdwg.mxu0
    %1320 = vrot.lane.b32.xlu0 %v394, 96
    %v1321 = vpop.permute.xlu0 %1320
    %v1324 = vsel %vm993, %v988, 0
    %1326 = vmatprep.subr.bf16.mxu0 0
    %1327 = vmatpush1.bf16.msra.mxu0 %v1321
    %1328 = vmatprep.subr.bf16.mxu0 0
    %1329 = vmatpush1.bf16.msra.mxu0 0
    %1330 = vmatprep.subr.bf16.mxu0 0
    %1331 = vmatpush1.bf16.msra.mxu0 0
    %1332 = vmatprep.subr.bf16.mxu0 0
    %1333 = vmatpush1.bf16.msra.mxu0 0
    %1334 = vmatprep.subr.bf16.mxu0 0
    %1335 = vmatpush1.bf16.msra.mxu0 0
    %1336 = vmatprep.subr.bf16.mxu0 0
    %1337 = vmatpush1.bf16.msra.mxu0 0
    %1338 = vmatprep.subr.bf16.mxu0 0
    %1339 = vmatpush1.bf16.msra.mxu0 0
    %1340 = vmatprep.subr.bf16.mxu0 0
    %1341 = vmatpush1.bf16.msra.mxu0 0
    %1342 = vmatprep.subr.bf16.mxu0 0
    %1343 = vmatpush1.bf16.msra.mxu0 0
    %1344 = vmatprep.subr.bf16.mxu0 0
    %1345 = vmatpush1.bf16.msra.mxu0 0
    %1346 = vmatprep.subr.bf16.mxu0 0
    %1347 = vmatpush1.bf16.msra.mxu0 0
    %1348 = vmatprep.subr.bf16.mxu0 0
    %1349 = vmatpush1.bf16.msra.mxu0 0
    %1350 = vmatprep.subr.bf16.mxu0 0
    %1351 = vmatpush1.bf16.msra.mxu0 0
    %1352 = vmatprep.subr.bf16.mxu0 0
    %1353 = vmatpush1.bf16.msra.mxu0 0
    %1354 = vmatprep.subr.bf16.mxu0 0
    %1355 = vmatpush1.bf16.msra.mxu0 0
    %1356 = vmatprep.subr.bf16.mxu0 0
    %1357 = vmatpush1.bf16.msra.mxu0 0
    %1358 = vmatprep.mubr.bf16.mxu0 0
    %1359 = vmatmul.mubr.bf16.gmra.mrb[0].mxu0 %v1324
    %v1360 = vpop.f32.mrb[0].mxu0
    %v1361 = vadd.f32 0.0, %v1360
    %v1362 = vpop.f32.mrb[0].mxu0
    %v1363 = vpop.f32.mrb[0].mxu0
    %v1364 = vpop.f32.mrb[0].mxu0
    %1365 = vdwg.mxu0
    %1368 = vrot.lane.b32.xlu0 %v1126, 8
    %v1369 = vpop.permute.xlu0 %1368
    %1370 = vrot.lane.b32.xlu0 %v1173, 8
    %v1371 = vpop.permute.xlu0 %1370
    %1376 = vrot.lane.b32.xlu0 %v1220, 16
    %v1377 = vpop.permute.xlu0 %1376
    %1378 = vrot.lane.b32.xlu0 %v1267, 16
    %v1379 = vpop.permute.xlu0 %1378
    %1384 = vrot.lane.b32.xlu0 %v1314, 24
    %v1385 = vpop.permute.xlu0 %1384
    %1386 = vrot.lane.b32.xlu0 %v1361, 24
    %v1387 = vpop.permute.xlu0 %1386
    %v1390 = vsel %vm395, %v1032, %v1369
    %v1391 = vsel %vm395, %v1079, %v1371
    %v1392 = vsel %vm993, %v1390, %v1377
    %v1393 = vsel %vm993, %v1391, %v1379
    %vm1394 = vcmask 195584
    %v1395 = vsel %vm1394, %v1392, %v1385
    %v1396 = vsel %vm1394, %v1393, %v1387
    %v1397 = vpack.c.bf16 %v1396, %v1395
    %v1398 = vld [vmem:[#allocation13] sm:$0xf]
    %v1399 = vld [vmem:[#allocation13 + $0x4] sm:$0xf]
    %v1400 = vld [vmem:[#allocation13 + $0x8] sm:$0xf]
    %v1401 = vld [vmem:[#allocation13 + $0xc] sm:$0xf]
    %v1402 = vld [vmem:[%s8] sm:$0x1]
    %v1404 = vlaneseq
    %v1405 = vshrl.u32 %v1404, 7
    %v1406 = vsub.s32 0, %v1405
    %v1407 = vrot.slane %v1402, %v1406
    %v1413 = vunpack.c.l.b16 %v1398
    %v1414 = vunpack.c.l.b16 %v1399
    %v1415 = vunpack.c.l.b16 %v1400
    %v1416 = vunpack.c.l.b16 %v1401
    %v1417 = vpack.c.b16 %v1414, %v1413
    %v1418 = vpack.c.b16 %v1416, %v1415
    %v1422 = vsel %vm154, %v1397, 0
    %1424 = vmatprep.subr.bf16.mxu0 0
    %1425 = vmatpush1.bf16.msra.mxu0 %v1417
    %1426 = vmatprep.subr.bf16.mxu0 0
    %1427 = vmatpush1.bf16.msra.mxu0 %v1418
    %1428 = vmatprep.subr.bf16.mxu0 0
    %1429 = vmatpush1.bf16.msra.mxu0 0
    %1430 = vmatprep.subr.bf16.mxu0 0
    %1431 = vmatpush1.bf16.msra.mxu0 0
    %1432 = vmatprep.subr.bf16.mxu0 0
    %1433 = vmatpush1.bf16.msra.mxu0 0
    %1434 = vmatprep.subr.bf16.mxu0 0
    %1435 = vmatpush1.bf16.msra.mxu0 0
    %1436 = vmatprep.subr.bf16.mxu0 0
    %1437 = vmatpush1.bf16.msra.mxu0 0
    %1438 = vmatprep.subr.bf16.mxu0 0
    %1439 = vmatpush1.bf16.msra.mxu0 0
    %1440 = vmatprep.subr.bf16.mxu0 0
    %1441 = vmatpush1.bf16.msra.mxu0 0
    %1442 = vmatprep.subr.bf16.mxu0 0
    %1443 = vmatpush1.bf16.msra.mxu0 0
    %1444 = vmatprep.subr.bf16.mxu0 0
    %1445 = vmatpush1.bf16.msra.mxu0 0
    %1446 = vmatprep.subr.bf16.mxu0 0
    %1447 = vmatpush1.bf16.msra.mxu0 0
    %1448 = vmatprep.subr.bf16.mxu0 0
    %1449 = vmatpush1.bf16.msra.mxu0 0
    %1450 = vmatprep.subr.bf16.mxu0 0
    %1451 = vmatpush1.bf16.msra.mxu0 0
    %1452 = vmatprep.subr.bf16.mxu0 0
    %1453 = vmatpush1.bf16.msra.mxu0 0
    %1454 = vmatprep.subr.bf16.mxu0 0
    %1455 = vmatpush1.bf16.msra.mxu0 0
    %1456 = vmatprep.mubr.bf16.mxu0 0
    %1457 = vmatmul.mubr.bf16.gmra.mrb[0].mxu0 %v1422
    %v1458 = vpop.f32.mrb[0].mxu0
    %v1459 = vadd.f32 %v1407, %v1458
    %v1460 = vpop.f32.mrb[0].mxu0
    %v1461 = vpop.f32.mrb[0].mxu0
    %v1462 = vadd.f32 %v1407, %v1461
    %v1463 = vpop.f32.mrb[0].mxu0
    %1464 = vdwg.mxu0
    %v1465 = vld [vmem:[#allocation8] sm:$0xff]
    %v1466 = vld [vmem:[#allocation8 + $0x8] sm:$0xff]
    %v1467 = vadd.f32 %v1465, %v1459
    %v1468 = vadd.f32 %v1466, %v1462
    %1469 = vst.msk [vmem:[#allocation14] sm:$0xff] %vm154, %v1467
    %1470 = vst.msk [vmem:[#allocation14 + $0x8] sm:$0xff] %vm154, %v1468
    // Predicated region
    $region66: #{tpu_custom_call.1} parent=1 // pred_check
      _
    $region67: #{tpu_custom_call.1} parent=1 // pred_check_branch
      %1472 = sbr.rel (0) target = $region69
    $region68: #{tpu_custom_call.1} parent=1 // pred_region
      %s1474 = ssub.s32 256, 256
      %1475 = vsyncadd [#allocation4], %s1474
      %s1476 = sshll.u32 [#allocation14], 4
      %s1477 = int_to_ptr.vmem [resolvable:$true] %s1476
      %1482 = dma.vmem_to_hbm [thread:$0]  %s1477, 256, %s9, [#allocation4], 128, 128, 8
    $region69: #{tpu_custom_call.1} parent=1 // pred_fallthru
      _
    // Predicated region
    $region70: #{tpu_custom_call.1} parent=1 // pred_check
      _
    $region71: #{tpu_custom_call.1} parent=1 // pred_check_branch
      %1484 = sbr.rel (0) target = $region73
    $region72: #{tpu_custom_call.1} parent=1 // pred_region
      %1485 = dma.done [#allocation4], 256
    $region73: #{tpu_custom_call.1} parent=1 // pred_fallthru
      _
    %1486 = vsyncpa [#allocation3], 1
    %1487 = vsyncpa [#allocation6], 1
    %1488 = vsyncpa [#allocation9], 1
    %1489 = vsyncpa [#allocation12], 1
    %1490 = vsyncpa [#allocation4], 1

</llo_original>
